<compile_context>
chip_gen: v6e
topology: v6e:2x2x1
jax: 0.10.0
libtpu: 0.0.40
codegen_flags: <defaults>
</compile_context>

<pallas_src>
import numpy as np
import jax
import jax.numpy as jnp
from jax import lax
from jax.experimental import pallas as pl
from jax.experimental.pallas import tpu as pltpu


# ------------------------------ helpers ------------------------------------- #

_SUBLANE = 8  # f32 sublane multiple


def _round_up(x, m):
    return ((x + m - 1) // m) * m


def _pick_chunk(T, max_chunk, Bp, D, G, budget_bytes=8 << 20):
    """Timesteps per grid step.  No divisibility requirement (the ragged last chunk
    is masked in-kernel); shrink against a VMEM budget for the double-buffered x
    chunk + in-kernel projection scratch (matters on v7x's 64 MiB VMEM)."""
    Tc = max(1, min(T, max_chunk))
    per_step = Bp * (2 * D + G) * 4          # f32 bytes per timestep of chunk state
    while Tc > 1 and Tc * per_step > budget_bytes:
        Tc -= 1
    return Tc


def _reorder_gates(w, H, axis=0):
    """PyTorch LSTM gate order [i, f, g, o] -> [i, f, o, g] so the kernel can run a
    single sigmoid over the first 3H lanes and a single tanh over the last H lanes."""
    i_f = lax.slice_in_dim(w, 0, 2 * H, axis=axis)
    g = lax.slice_in_dim(w, 2 * H, 3 * H, axis=axis)
    o = lax.slice_in_dim(w, 3 * H, 4 * H, axis=axis)
    return jnp.concatenate([i_f, o, g], axis=axis)


# ----------------------------- Pallas kernel --------------------------------- #

def _build_kernel(L, H, O, T, Tc, Bp, compute_dtype):
    """L, H, O, T, Tc, Bp are static Python ints."""
    G = 4 * H
    multi = L > 1
    cdt = compute_dtype
    inv_T = 1.0 / T

    def kernel(*refs):
        it = iter(refs)
        x_ref = next(it)                         # (Tc*Bp, D) f32  streamed x chunk
        wih0_hbm = next(it)                      # (D, G)  ANY (HBM)
        whh0_hbm = next(it)                      # (H, G)  ANY (HBM)
        b0_ref = next(it)                        # (1, G)  f32
        wihr_hbm = next(it) if multi else None   # (L-1, H, G) ANY
        whhr_hbm = next(it) if multi else None   # (L-1, H, G) ANY
        br_ref = next(it) if multi else None     # (L-1, 1, G) f32
        wfc_hbm = next(it)                       # (H, O)  ANY
        bfc_ref = next(it)                       # (1, O)  f32
        out_ref = next(it)                       # (Bp, O) f32
        wih0_v = next(it)                        # VMEM (D, G)       resident weight
        whh0_v = next(it)                        # VMEM (H, G)       resident weight
        wihr_v = next(it) if multi else None     # VMEM (L-1, H, G)  resident weight
        whhr_v = next(it) if multi else None     # VMEM (L-1, H, G)  resident weight
        wfc_v = next(it)                         # VMEM (H, O)       resident weight
        h_sc = next(it)                          # VMEM (L, Bp, H) f32
        c_sc = next(it)                          # VMEM (L, Bp, H) f32
        hsum_sc = next(it)                       # VMEM (Bp, H)    f32
        xg_sc = next(it)                         # VMEM (Tc*Bp, G) f32
        dma_sem = next(it)                       # DMA semaphores (5,)

        i = pl.program_id(0)
        last = pl.num_programs(0) - 1

        def wcopy(slot, src, dst):
            return pltpu.make_async_copy(src, dst, dma_sem.at[slot])

        @pl.when(i == 0)
        def _init():
            # One-shot async weight loads; they stay resident for the whole grid
            # (single-buffered -> half the VMEM of pipelined constant-index BlockSpecs).
            wcopy(0, wih0_hbm, wih0_v).start()
            wcopy(1, whh0_hbm, whh0_v).start()
            if multi:
                wcopy(2, wihr_hbm, wihr_v).start()
                wcopy(3, whhr_hbm, whhr_v).start()
            wcopy(4, wfc_hbm, wfc_v).start()
            h_sc[...] = jnp.zeros_like(h_sc)
            c_sc[...] = jnp.zeros_like(c_sc)
            hsum_sc[...] = jnp.zeros_like(hsum_sc)
            wcopy(0, wih0_hbm, wih0_v).wait()     # needed by the projection just below

        # Per-chunk layer-0 input projection: one (Tc*Bp, D) @ (D, 4H) MXU push per grid
        # step, off the recurrent dependence chain (raw x streamed, no 4H/D HBM blowup).
        xg_sc[...] = (jnp.dot(x_ref[...].astype(cdt), wih0_v[...],
                              preferred_element_type=jnp.float32)
                      + b0_ref[...])

        @pl.when(i == 0)
        def _wait_recurrent_weights():
            wcopy(1, whh0_hbm, whh0_v).wait()
            if multi:
                wcopy(2, wihr_hbm, wihr_v).wait()
                wcopy(3, whhr_hbm, whhr_v).wait()

        # Hoist resident weights / biases once per grid step (not per timestep).
        whh0 = whh0_v[...]
        wih_l = [wihr_v[l] for l in range(L - 1)] if multi else []
        whh_l = [whhr_v[l] for l in range(L - 1)] if multi else []
        br_l = ([jnp.broadcast_to(br_ref[l], (Bp, G)) for l in range(L - 1)]
                if multi else [])

        def gates(g, c_prev):
            # Gate layout [i | f | o | g]: one sigmoid over 3H lanes + one tanh over H.
            # (All gate element-wise math stays f32: v5e has no bf16 VPU/EUP.)
            sig = jax.nn.sigmoid(g[:, :3 * H])
            g_g = jnp.tanh(g[:, 3 * H:])
            i_g = sig[:, 0 * H:1 * H]
            f_g = sig[:, 1 * H:2 * H]
            o_g = sig[:, 2 * H:3 * H]
            c_new = f_g * c_prev + i_g * g_g
            h_new = o_g * jnp.tanh(c_new)
            return h_new, c_new

        # Load recurrent state from scratch once per chunk; carry it as loop values.
        h0 = tuple(h_sc[l] for l in range(L))
        c0 = tuple(c_sc[l] for l in range(L))
        hsum0 = hsum_sc[...]

        def step(s, carry):
            h, c, hsum = carry
            row = pl.multiple_of(s * Bp, Bp)
            xg = xg_sc[pl.ds(row, Bp), :]
            # Layer 0: input part was projected above; only the h @ W_hh^T dot remains
            # on the recurrent critical path.
            g0 = xg + jnp.dot(h[0].astype(cdt), whh0,
                              preferred_element_type=jnp.float32)
            hn0, cn0 = gates(g0, c[0])
            hs, cs = [hn0], [cn0]
            xin = hn0
            # Layers 1..L-1: two accumulating dots into one f32 gate block (no lane concat).
            for l in range(1, L):
                g = (jnp.dot(xin.astype(cdt), wih_l[l - 1],
                             preferred_element_type=jnp.float32)
                     + jnp.dot(h[l].astype(cdt), whh_l[l - 1],
                               preferred_element_type=jnp.float32)
                     + br_l[l - 1])
                hn, cn = gates(g, c[l])
                hs.append(hn)
                cs.append(cn)
                xin = hn
            # Linearized FC head: accumulate top-layer h only; mask padded tail steps.
            valid = ((i * Tc + s) < T).astype(xin.dtype)
            hsum = hsum + xin * valid
            return tuple(hs), tuple(cs), hsum

        h_f, c_f, hsum_f = lax.fori_loop(0, Tc, step, (h0, c0, hsum0), unroll=True)

        # Write state back once per chunk.
        for l in range(L):
            h_sc[l] = h_f[l]
            c_sc[l] = c_f[l]
        hsum_sc[...] = hsum_f

        @pl.when(i == last)
        def _finalize():
            wcopy(4, wfc_hbm, wfc_v).wait()       # fc-weight DMA hidden behind the grid
            # pred / T == (sum_t h_t) @ Wfc^T / T + b_fc   (single matmul + single store)
            pred = jnp.dot(hsum_f.astype(cdt), wfc_v[...],
                           preferred_element_type=jnp.float32)
            out_ref[...] = pred * inv_T + bfc_ref[...]

    return kernel


# -------------------------------- Wrapper ------------------------------------ #

def rnn_model_forward(x_btd, params, *, weight_dtype=jnp.float32, max_chunk=16):
    """Forward pass of RNNModel.  x_btd: (B, T, D) float32, batch_first.

    weight_dtype=jnp.bfloat16 halves the resident-weight VMEM footprint (recommended
    for large H on v7x's 64 MiB VMEM; requires a real TPU — the CPU/interpret backend
    cannot execute bf16 x bf16 -> f32 dots).  Gate element-wise math and all
    accumulators stay f32 regardless.
    """
    B, T, D = x_btd.shape
    L = len(params["w_ih"])
    H = params["w_hh"][0].shape[1]
    O = params["w_fc"].shape[0]
    G = 4 * H
    wdt = weight_dtype
    multi = L > 1

    Bp = _round_up(max(B, 1), _SUBLANE)
    Tc = _pick_chunk(T, max_chunk, Bp, D, G)
    n_chunks = (T + Tc - 1) // Tc
    Tpad = n_chunks * Tc

    # x laid out as (Tpad*Bp, D): time-major rows, batch padded to the sublane multiple,
    # sequence padded to a whole number of chunks (padded steps are masked in-kernel).
    x_tbd = jnp.transpose(x_btd.astype(jnp.float32), (1, 0, 2))
    x_tbd = jnp.pad(x_tbd, ((0, Tpad - T), (0, Bp - B), (0, 0)))
    x2d = x_tbd.reshape(Tpad * Bp, D)

    # Weights transposed for x @ W, gate columns reordered to [i, f, o, g].
    wih0_t = _reorder_gates(params["w_ih"][0], H).T.astype(wdt)             # (D, G)
    whh0_t = _reorder_gates(params["w_hh"][0], H).T.astype(wdt)             # (H, G)
    b0 = _reorder_gates(params["b_ih"][0] + params["b_hh"][0], H
                        ).reshape(1, G).astype(jnp.float32)                  # (1, G)
    wfc_t = params["w_fc"].T.astype(wdt)                                     # (H, O)
    bfc = params["b_fc"].reshape(1, O).astype(jnp.float32)                   # (1, O)
    if multi:
        wih_r = jnp.stack([_reorder_gates(params["w_ih"][l], H).T
                           for l in range(1, L)]).astype(wdt)                # (L-1, H, G)
        whh_r = jnp.stack([_reorder_gates(params["w_hh"][l], H).T
                           for l in range(1, L)]).astype(wdt)                # (L-1, H, G)
        br = jnp.stack([_reorder_gates(params["b_ih"][l] + params["b_hh"][l], H
                                       ).reshape(1, G)
                        for l in range(1, L)]).astype(jnp.float32)           # (L-1, 1, G)

    inputs = [x2d, wih0_t, whh0_t, b0]
    in_specs = [
        pl.BlockSpec((Tc * Bp, D), lambda i: (i, 0)),   # streamed, double-buffered x chunk
        pl.BlockSpec(memory_space=pl.ANY),              # layer-0 input weight  (one-shot DMA)
        pl.BlockSpec(memory_space=pl.ANY),              # layer-0 recurrent weight
        pl.BlockSpec((1, G), lambda i: (0, 0)),
    ]
    if multi:
        inputs += [wih_r, whh_r, br]
        in_specs += [pl.BlockSpec(memory_space=pl.ANY),
                     pl.BlockSpec(memory_space=pl.ANY),
                     pl.BlockSpec((L - 1, 1, G), lambda i: (0, 0, 0))]
    inputs += [wfc_t, bfc]
    in_specs += [pl.BlockSpec(memory_space=pl.ANY),
                 pl.BlockSpec((1, O), lambda i: (0, 0))]

    scratch = [pltpu.VMEM((D, G), wdt),                 # resident wih0
               pltpu.VMEM((H, G), wdt)]                 # resident whh0
    if multi:
        scratch += [pltpu.VMEM((L - 1, H, G), wdt),     # resident layer 1..L-1 input weights
                    pltpu.VMEM((L - 1, H, G), wdt)]     # resident layer 1..L-1 recurrent weights
    scratch += [
        pltpu.VMEM((H, O), wdt),                        # resident fc weight
        pltpu.VMEM((L, Bp, H), jnp.float32),            # h state (touched at chunk boundaries)
        pltpu.VMEM((L, Bp, H), jnp.float32),            # c state
        pltpu.VMEM((Bp, H), jnp.float32),               # sum_t h_top (linearized FC head)
        pltpu.VMEM((Tc * Bp, G), jnp.float32),          # per-chunk projected layer-0 input
        pltpu.SemaphoreType.DMA((5,)),                  # weight-load semaphores
    ]

    # VMEM budget: resident weights + state + x double buffer + projection scratch.
    ws = np.dtype(wdt).itemsize
    wbytes = (D * G + H * G + H * O) * ws + (0 if L == 1 else (L - 1) * 2 * H * G * ws)
    est = (wbytes
           + (2 * L * Bp * H + Bp * H + Bp * O) * 4
           + Tc * Bp * G * 4
           + 2 * Tc * Bp * D * 4)
    # v5e's default scoped-VMEM limit is 16 MiB (v6e/v7x: 32 MiB); raise it whenever the
    # estimate gets close, and cap safely below v7x's 64 MiB physical VMEM.
    vmem_limit = None if est <= (12 << 20) else min(int(est * 1.5) + (4 << 20), 100 << 20)

    kernel = _build_kernel(L, H, O, T, Tc, Bp, wdt)

    out = pl.pallas_call(
        kernel,
        out_shape=jax.ShapeDtypeStruct((Bp, O), jnp.float32),
        grid_spec=pltpu.PrefetchScalarGridSpec(
            num_scalar_prefetch=0,
            grid=(n_chunks,),
            in_specs=in_specs,
            out_specs=pl.BlockSpec((Bp, O), lambda i: (0, 0)),
            scratch_shapes=scratch,
        ),
        compiler_params=pltpu.CompilerParams(
            dimension_semantics=("arbitrary",),          # recurrence carried across grid steps
            vmem_limit_bytes=vmem_limit),
    )(*inputs)
    return out[:B]


# -------------------------- Parameter construction --------------------------- #

def init_params(key, input_dim, hidden_dim, layer_dim, output_dim):
    """Deterministic synthetic parameters, PyTorch-style U(-1/sqrt(H), 1/sqrt(H))."""
    H = hidden_dim
    k = 1.0 / np.sqrt(H)
    keys = jax.random.split(key, 4 * layer_dim + 2)
    w_ih, w_hh, b_ih, b_hh = [], [], [], []
    idx = 0
    for l in range(layer_dim):
        in_dim = input_dim if l == 0 else H
        w_ih.append(jax.random.uniform(keys[idx], (4 * H, in_dim), jnp.float32, -k, k)); idx += 1
        w_hh.append(jax.random.uniform(keys[idx], (4 * H, H), jnp.float32, -k, k)); idx += 1
        b_ih.append(jax.random.uniform(keys[idx], (4 * H,), jnp.float32, -k, k)); idx += 1
        b_hh.append(jax.random.uniform(keys[idx], (4 * H,), jnp.float32, -k, k)); idx += 1
    w_fc = jax.random.uniform(keys[idx], (output_dim, H), jnp.float32, -k, k); idx += 1
    b_fc = jax.random.uniform(keys[idx], (output_dim,), jnp.float32, -k, k)
    return dict(w_ih=w_ih, w_hh=w_hh, b_ih=b_ih, b_hh=b_hh, w_fc=w_fc, b_fc=b_fc)


# ------------------------------ Pure-JAX reference ---------------------------- #

def reference_forward(x, params):
    B, T, D = x.shape
    L = len(params["w_ih"])
    H = params["w_hh"][0].shape[1]
    O = params["w_fc"].shape[0]
    h = [jnp.zeros((B, H), jnp.float32) for _ in range(L)]
    c = [jnp.zeros((B, H), jnp.float32) for _ in range(L)]
    pred = jnp.zeros((B, O), jnp.float32)
    for t in range(T):
        xin = x[:, t, :]
        for l in range(L):
            g = (xin @ params["w_ih"][l].T + params["b_ih"][l]
                 + h[l] @ params["w_hh"][l].T + params["b_hh"][l])
            i = jax.nn.sigmoid(g[:, :H])
            f = jax.nn.sigmoid(g[:, H:2 * H])
            gg = jnp.tanh(g[:, 2 * H:3 * H])
            o = jax.nn.sigmoid(g[:, 3 * H:])
            c[l] = f * c[l] + i * gg
            h[l] = o * jnp.tanh(c[l])
            xin = h[l]
        pred = pred + xin @ params["w_fc"].T + params["b_fc"]
    return pred / T


# ----------------------------------- Main ------------------------------------ #

if __name__ == "__main__":
    B, T = 2, 8            # batch, sequence length
    input_dim = 8
    hidden_dim = 32
    layer_dim = 2
    output_dim = 4

    root = jax.random.PRNGKey(0)
    kx, kp = jax.random.split(root)
    x = jax.random.normal(kx, (B, T, input_dim), jnp.float32)
    params = init_params(kp, input_dim, hidden_dim, layer_dim, output_dim)
    ref = reference_forward(x, params)

    # f32 weights: tight check against the pure-JAX reference.
    out = jax.block_until_ready(rnn_model_forward(x, params))
    assert out.shape == (B, output_dim)
    assert np.allclose(np.asarray(out), np.asarray(ref), atol=1e-5, rtol=1e-5), (
        f"f32 mismatch:\n{out}\nvs\n{ref}")

    # Ragged sequence length (T not a multiple of the chunk) + multi-chunk grid:
    # exercises the masked tail and carried state across grid steps.
    T2 = 11
    x2 = jax.random.normal(jax.random.PRNGKey(1), (B, T2, input_dim), jnp.float32)
    ref2 = reference_forward(x2, params)
    out2 = jax.block_until_ready(rnn_model_forward(x2, params, max_chunk=4))
    assert np.allclose(np.asarray(out2), np.asarray(ref2), atol=1e-5, rtol=1e-5), (
        f"ragged-T mismatch:\n{out2}\nvs\n{ref2}")

    # Single-layer variant (exercises the L == 1 path with no recurrent-stack weights).
    params1 = init_params(kp, input_dim, hidden_dim, 1, output_dim)
    ref1 = reference_forward(x, params1)
    out1 = jax.block_until_ready(rnn_model_forward(x, params1))
    assert np.allclose(np.asarray(out1), np.asarray(ref1), atol=1e-5, rtol=1e-5), (
        f"L=1 mismatch:\n{out1}\nvs\n{ref1}")

    # NOTE: weight_dtype=jnp.bfloat16 is supported for real-TPU large-H runs (halves the
    # resident-weight VMEM for v7x's 64 MiB budget) but is intentionally not exercised
    # here: the CPU/interpret dot executor cannot run bf16 x bf16 -> f32.

    print("KERNEL_OK")
</pallas_src>

<mosaic_0001>
module attributes {stable_mosaic.version = 11 : i64} {
  func.func @kernel(%arg0: i32, %arg1: memref<64x8xf32, #tpu.memory_space<vmem>>, %arg2: memref<8x128xf32, #tpu.memory_space<any>>, %arg3: memref<32x128xf32, #tpu.memory_space<any>>, %arg4: memref<1x128xf32, #tpu.memory_space<vmem>>, %arg5: memref<1x32x128xf32, #tpu.memory_space<any>>, %arg6: memref<1x32x128xf32, #tpu.memory_space<any>>, %arg7: memref<1x1x128xf32, #tpu.memory_space<vmem>>, %arg8: memref<32x4xf32, #tpu.memory_space<any>>, %arg9: memref<1x4xf32, #tpu.memory_space<vmem>>, %arg10: memref<8x4xf32, #tpu.memory_space<vmem>>, %arg11: memref<8x128xf32, #tpu.memory_space<vmem>>, %arg12: memref<32x128xf32, #tpu.memory_space<vmem>>, %arg13: memref<1x32x128xf32, #tpu.memory_space<vmem>>, %arg14: memref<1x32x128xf32, #tpu.memory_space<vmem>>, %arg15: memref<32x4xf32, #tpu.memory_space<vmem>>, %arg16: memref<2x8x32xf32, #tpu.memory_space<vmem>>, %arg17: memref<2x8x32xf32, #tpu.memory_space<vmem>>, %arg18: memref<8x32xf32, #tpu.memory_space<vmem>>, %arg19: memref<64x128xf32, #tpu.memory_space<vmem>>, %arg20: memref<5x!tpu.dma_semaphore, #tpu.memory_space<semaphore_mem>>) attributes {dimension_semantics = [#tpu.dimension_semantics<arbitrary>], iteration_bounds = array<i64: 1>, scalar_prefetch = 0 : i64, scratch_operands = 10 : i64, tpu.core_type = #tpu.core_type<tc>, window_params = [{transform_indices = @transform_0, window_bounds = array<i64: 64, 8>}, {}, {}, {pipeline_mode = #tpu.pipeline_mode<synchronous>, transform_indices = @transform_3, window_bounds = array<i64: 1, 128>}, {}, {}, {pipeline_mode = #tpu.pipeline_mode<synchronous>, transform_indices = @transform_6, window_bounds = array<i64: 1, 1, 128>}, {}, {pipeline_mode = #tpu.pipeline_mode<synchronous>, transform_indices = @transform_8, window_bounds = array<i64: 1, 4>}, {pipeline_mode = #tpu.pipeline_mode<synchronous>, transform_indices = @transform_9, window_bounds = array<i64: 8, 4>}]} {
    %c0_i32 = arith.constant 0 : i32
    %0 = arith.cmpi eq, %arg0, %c0_i32 : i32
    %1 = arith.extui %0 : i1 to i32
    %c0_i32_0 = arith.constant 0 : i32
    %2 = arith.cmpi ne, %1, %c0_i32_0 : i32
    scf.if %2 {
      %c0_i32_123 = arith.constant 0 : i32
      %447 = tpu.memref_slice %arg20[%c0_i32_123] : memref<5x!tpu.dma_semaphore, #tpu.memory_space<semaphore_mem>> -> memref<1x!tpu.dma_semaphore, #tpu.memory_space<semaphore_mem>>
      %448 = tpu.memref_squeeze %447 : memref<1x!tpu.dma_semaphore, #tpu.memory_space<semaphore_mem>> -> memref<!tpu.dma_semaphore, #tpu.memory_space<semaphore_mem>>
      tpu.enqueue_dma source(%arg2 : memref<8x128xf32, #tpu.memory_space<any>>) target(%arg11 : memref<8x128xf32, #tpu.memory_space<vmem>>) target_semaphore(%448 : memref<!tpu.dma_semaphore, #tpu.memory_space<semaphore_mem>>)
      %c1_i32_124 = arith.constant 1 : i32
      %449 = tpu.memref_slice %arg20[%c1_i32_124] : memref<5x!tpu.dma_semaphore, #tpu.memory_space<semaphore_mem>> -> memref<1x!tpu.dma_semaphore, #tpu.memory_space<semaphore_mem>>
      %450 = tpu.memref_squeeze %449 : memref<1x!tpu.dma_semaphore, #tpu.memory_space<semaphore_mem>> -> memref<!tpu.dma_semaphore, #tpu.memory_space<semaphore_mem>>
      tpu.enqueue_dma source(%arg3 : memref<32x128xf32, #tpu.memory_space<any>>) target(%arg12 : memref<32x128xf32, #tpu.memory_space<vmem>>) target_semaphore(%450 : memref<!tpu.dma_semaphore, #tpu.memory_space<semaphore_mem>>)
      %c2_i32_125 = arith.constant 2 : i32
      %451 = tpu.memref_slice %arg20[%c2_i32_125] : memref<5x!tpu.dma_semaphore, #tpu.memory_space<semaphore_mem>> -> memref<1x!tpu.dma_semaphore, #tpu.memory_space<semaphore_mem>>
      %452 = tpu.memref_squeeze %451 : memref<1x!tpu.dma_semaphore, #tpu.memory_space<semaphore_mem>> -> memref<!tpu.dma_semaphore, #tpu.memory_space<semaphore_mem>>
      tpu.enqueue_dma source(%arg5 : memref<1x32x128xf32, #tpu.memory_space<any>>) target(%arg13 : memref<1x32x128xf32, #tpu.memory_space<vmem>>) target_semaphore(%452 : memref<!tpu.dma_semaphore, #tpu.memory_space<semaphore_mem>>)
      %c3_i32_126 = arith.constant 3 : i32
      %453 = tpu.memref_slice %arg20[%c3_i32_126] : memref<5x!tpu.dma_semaphore, #tpu.memory_space<semaphore_mem>> -> memref<1x!tpu.dma_semaphore, #tpu.memory_space<semaphore_mem>>
      %454 = tpu.memref_squeeze %453 : memref<1x!tpu.dma_semaphore, #tpu.memory_space<semaphore_mem>> -> memref<!tpu.dma_semaphore, #tpu.memory_space<semaphore_mem>>
      tpu.enqueue_dma source(%arg6 : memref<1x32x128xf32, #tpu.memory_space<any>>) target(%arg14 : memref<1x32x128xf32, #tpu.memory_space<vmem>>) target_semaphore(%454 : memref<!tpu.dma_semaphore, #tpu.memory_space<semaphore_mem>>)
      %c4_i32_127 = arith.constant 4 : i32
      %455 = tpu.memref_slice %arg20[%c4_i32_127] : memref<5x!tpu.dma_semaphore, #tpu.memory_space<semaphore_mem>> -> memref<1x!tpu.dma_semaphore, #tpu.memory_space<semaphore_mem>>
      %456 = tpu.memref_squeeze %455 : memref<1x!tpu.dma_semaphore, #tpu.memory_space<semaphore_mem>> -> memref<!tpu.dma_semaphore, #tpu.memory_space<semaphore_mem>>
      tpu.enqueue_dma source(%arg8 : memref<32x4xf32, #tpu.memory_space<any>>) target(%arg15 : memref<32x4xf32, #tpu.memory_space<vmem>>) target_semaphore(%456 : memref<!tpu.dma_semaphore, #tpu.memory_space<semaphore_mem>>)
      %cst_128 = arith.constant 0.000000e+00 : f32
      %457 = vector.broadcast %cst_128 : f32 to vector<2x8x32xf32>
      %c0_129 = arith.constant 0 : index
      %c0_130 = arith.constant 0 : index
      %c0_131 = arith.constant 0 : index
      %458 = vector.load %arg16[%c0_129, %c0_130, %c0_131] : memref<2x8x32xf32, #tpu.memory_space<vmem>>, vector<2x8x32xf32>
      tpu.vector_store %arg16[%c0_129, %c0_130, %c0_131], %457 {strides = array<i32>} : memref<2x8x32xf32, #tpu.memory_space<vmem>>, vector<2x8x32xf32>,
      %cst_132 = arith.constant 0.000000e+00 : f32
      %459 = vector.broadcast %cst_132 : f32 to vector<2x8x32xf32>
      %c0_133 = arith.constant 0 : index
      %c0_134 = arith.constant 0 : index
      %c0_135 = arith.constant 0 : index
      %460 = vector.load %arg17[%c0_133, %c0_134, %c0_135] : memref<2x8x32xf32, #tpu.memory_space<vmem>>, vector<2x8x32xf32>
      tpu.vector_store %arg17[%c0_133, %c0_134, %c0_135], %459 {strides = array<i32>} : memref<2x8x32xf32, #tpu.memory_space<vmem>>, vector<2x8x32xf32>,
      %cst_136 = arith.constant 0.000000e+00 : f32
      %461 = vector.broadcast %cst_136 : f32 to vector<8x32xf32>
      %c0_137 = arith.constant 0 : index
      %c0_138 = arith.constant 0 : index
      %462 = vector.load %arg18[%c0_137, %c0_138] : memref<8x32xf32, #tpu.memory_space<vmem>>, vector<8x32xf32>
      tpu.vector_store %arg18[%c0_137, %c0_138], %461 {strides = array<i32>} : memref<8x32xf32, #tpu.memory_space<vmem>>, vector<8x32xf32>,
      %c0_i32_139 = arith.constant 0 : i32
      %463 = tpu.memref_slice %arg20[%c0_i32_139] : memref<5x!tpu.dma_semaphore, #tpu.memory_space<semaphore_mem>> -> memref<1x!tpu.dma_semaphore, #tpu.memory_space<semaphore_mem>>
      %464 = tpu.memref_squeeze %463 : memref<1x!tpu.dma_semaphore, #tpu.memory_space<semaphore_mem>> -> memref<!tpu.dma_semaphore, #tpu.memory_space<semaphore_mem>>
      tpu.wait_dma2 semaphore(%464 : memref<!tpu.dma_semaphore, #tpu.memory_space<semaphore_mem>>) src(%arg2 : memref<8x128xf32, #tpu.memory_space<any>>) dst(%arg11 : memref<8x128xf32, #tpu.memory_space<vmem>>)
    } else {
    }
    %c0 = arith.constant 0 : index
    %c0_1 = arith.constant 0 : index
    %3 = vector.load %arg1[%c0, %c0_1] : memref<64x8xf32, #tpu.memory_space<vmem>>, vector<64x8xf32>
    %c0_2 = arith.constant 0 : index
    %c0_3 = arith.constant 0 : index
    %4 = vector.load %arg11[%c0_2, %c0_3] : memref<8x128xf32, #tpu.memory_space<vmem>>, vector<8x128xf32>
    %cst = arith.constant dense<0.000000e+00> : vector<64x128xf32>
    %5 = tpu.matmul %3, %4, %cst {dimension_numbers = #tpu.dot_dimension_numbers<[1], [0], [0], [1], [0, 0, 1, 1], [], []>} : vector<64x8xf32>, vector<8x128xf32>, vector<64x128xf32> -> vector<64x128xf32>
    %c0_4 = arith.constant 0 : index
    %c0_5 = arith.constant 0 : index
    %6 = vector.load %arg4[%c0_4, %c0_5] : memref<1x128xf32, #tpu.memory_space<vmem>>, vector<1x128xf32>
    %7 = vector.broadcast %6 : vector<1x128xf32> to vector<64x128xf32>
    %8 = arith.addf %5, %7 : vector<64x128xf32>
    %c0_6 = arith.constant 0 : index
    %c0_7 = arith.constant 0 : index
    %9 = vector.load %arg19[%c0_6, %c0_7] : memref<64x128xf32, #tpu.memory_space<vmem>>, vector<64x128xf32>
    tpu.vector_store %arg19[%c0_6, %c0_7], %8 {strides = array<i32>} : memref<64x128xf32, #tpu.memory_space<vmem>>, vector<64x128xf32>,
    %c0_i32_8 = arith.constant 0 : i32
    %10 = arith.cmpi eq, %arg0, %c0_i32_8 : i32
    %11 = arith.extui %10 : i1 to i32
    %c0_i32_9 = arith.constant 0 : i32
    %12 = arith.cmpi ne, %11, %c0_i32_9 : i32
    scf.if %12 {
      %c1_i32_123 = arith.constant 1 : i32
      %447 = tpu.memref_slice %arg20[%c1_i32_123] : memref<5x!tpu.dma_semaphore, #tpu.memory_space<semaphore_mem>> -> memref<1x!tpu.dma_semaphore, #tpu.memory_space<semaphore_mem>>
      %448 = tpu.memref_squeeze %447 : memref<1x!tpu.dma_semaphore, #tpu.memory_space<semaphore_mem>> -> memref<!tpu.dma_semaphore, #tpu.memory_space<semaphore_mem>>
      tpu.wait_dma2 semaphore(%448 : memref<!tpu.dma_semaphore, #tpu.memory_space<semaphore_mem>>) src(%arg3 : memref<32x128xf32, #tpu.memory_space<any>>) dst(%arg12 : memref<32x128xf32, #tpu.memory_space<vmem>>)
      %c2_i32_124 = arith.constant 2 : i32
      %449 = tpu.memref_slice %arg20[%c2_i32_124] : memref<5x!tpu.dma_semaphore, #tpu.memory_space<semaphore_mem>> -> memref<1x!tpu.dma_semaphore, #tpu.memory_space<semaphore_mem>>
      %450 = tpu.memref_squeeze %449 : memref<1x!tpu.dma_semaphore, #tpu.memory_space<semaphore_mem>> -> memref<!tpu.dma_semaphore, #tpu.memory_space<semaphore_mem>>
      tpu.wait_dma2 semaphore(%450 : memref<!tpu.dma_semaphore, #tpu.memory_space<semaphore_mem>>) src(%arg5 : memref<1x32x128xf32, #tpu.memory_space<any>>) dst(%arg13 : memref<1x32x128xf32, #tpu.memory_space<vmem>>)
      %c3_i32_125 = arith.constant 3 : i32
      %451 = tpu.memref_slice %arg20[%c3_i32_125] : memref<5x!tpu.dma_semaphore, #tpu.memory_space<semaphore_mem>> -> memref<1x!tpu.dma_semaphore, #tpu.memory_space<semaphore_mem>>
      %452 = tpu.memref_squeeze %451 : memref<1x!tpu.dma_semaphore, #tpu.memory_space<semaphore_mem>> -> memref<!tpu.dma_semaphore, #tpu.memory_space<semaphore_mem>>
      tpu.wait_dma2 semaphore(%452 : memref<!tpu.dma_semaphore, #tpu.memory_space<semaphore_mem>>) src(%arg6 : memref<1x32x128xf32, #tpu.memory_space<any>>) dst(%arg14 : memref<1x32x128xf32, #tpu.memory_space<vmem>>)
    } else {
    }
    %c0_10 = arith.constant 0 : index
    %c0_11 = arith.constant 0 : index
    %13 = vector.load %arg12[%c0_10, %c0_11] : memref<32x128xf32, #tpu.memory_space<vmem>>, vector<32x128xf32>
    %c0_12 = arith.constant 0 : index
    %c0_13 = arith.constant 0 : index
    %c0_14 = arith.constant 0 : index
    %14 = vector.load %arg13[%c0_12, %c0_13, %c0_14] : memref<1x32x128xf32, #tpu.memory_space<vmem>>, vector<1x32x128xf32>
    %15 = vector.shape_cast %14 : vector<1x32x128xf32> to vector<32x128xf32>
    %c0_15 = arith.constant 0 : index
    %c0_16 = arith.constant 0 : index
    %c0_17 = arith.constant 0 : index
    %16 = vector.load %arg14[%c0_15, %c0_16, %c0_17] : memref<1x32x128xf32, #tpu.memory_space<vmem>>, vector<1x32x128xf32>
    %17 = vector.shape_cast %16 : vector<1x32x128xf32> to vector<32x128xf32>
    %c0_18 = arith.constant 0 : index
    %c0_19 = arith.constant 0 : index
    %c0_20 = arith.constant 0 : index
    %18 = vector.load %arg7[%c0_18, %c0_19, %c0_20] : memref<1x1x128xf32, #tpu.memory_space<vmem>>, vector<1x1x128xf32>
    %19 = vector.shape_cast %18 : vector<1x1x128xf32> to vector<1x128xf32>
    %20 = vector.shape_cast %19 : vector<1x128xf32> to vector<1x128xf32>
    %21 = vector.broadcast %20 : vector<1x128xf32> to vector<8x128xf32>
    %c0_21 = arith.constant 0 : index
    %c0_22 = arith.constant 0 : index
    %c0_23 = arith.constant 0 : index
    %22 = vector.load %arg16[%c0_21, %c0_22, %c0_23] : memref<2x8x32xf32, #tpu.memory_space<vmem>>, vector<1x8x32xf32>
    %23 = vector.shape_cast %22 : vector<1x8x32xf32> to vector<8x32xf32>
    %c1 = arith.constant 1 : index
    %c0_24 = arith.constant 0 : index
    %c0_25 = arith.constant 0 : index
    %24 = vector.load %arg16[%c1, %c0_24, %c0_25] : memref<2x8x32xf32, #tpu.memory_space<vmem>>, vector<1x8x32xf32>
    %25 = vector.shape_cast %24 : vector<1x8x32xf32> to vector<8x32xf32>
    %c0_26 = arith.constant 0 : index
    %c0_27 = arith.constant 0 : index
    %c0_28 = arith.constant 0 : index
    %26 = vector.load %arg17[%c0_26, %c0_27, %c0_28] : memref<2x8x32xf32, #tpu.memory_space<vmem>>, vector<1x8x32xf32>
    %27 = vector.shape_cast %26 : vector<1x8x32xf32> to vector<8x32xf32>
    %c1_29 = arith.constant 1 : index
    %c0_30 = arith.constant 0 : index
    %c0_31 = arith.constant 0 : index
    %28 = vector.load %arg17[%c1_29, %c0_30, %c0_31] : memref<2x8x32xf32, #tpu.memory_space<vmem>>, vector<1x8x32xf32>
    %29 = vector.shape_cast %28 : vector<1x8x32xf32> to vector<8x32xf32>
    %c0_32 = arith.constant 0 : index
    %c0_33 = arith.constant 0 : index
    %30 = vector.load %arg18[%c0_32, %c0_33] : memref<8x32xf32, #tpu.memory_space<vmem>>, vector<8x32xf32>
    %c0_i32_34 = arith.constant 0 : i32
    %c8_i32 = arith.constant 8 : i32
    %31 = arith.muli %c0_i32_34, %c8_i32 : i32
    %32 = tpu.assume_multiple %31, 8 : i32
    %33 = arith.index_cast %32 : i32 to index
    %c0_35 = arith.constant 0 : index
    %34 = vector.load %arg19[%33, %c0_35] : memref<64x128xf32, #tpu.memory_space<vmem>>, vector<8x128xf32>
    %cst_36 = arith.constant dense<0.000000e+00> : vector<8x128xf32>
    %35 = tpu.matmul %23, %13, %cst_36 {dimension_numbers = #tpu.dot_dimension_numbers<[1], [0], [0], [1], [0, 0, 1, 1], [], []>} : vector<8x32xf32>, vector<32x128xf32>, vector<8x128xf32> -> vector<8x128xf32>
    %36 = arith.addf %34, %35 : vector<8x128xf32>
    %37 = vector.extract_strided_slice %36 {offsets = [0, 0], sizes = [8, 96], strides = [1, 1]} : vector<8x128xf32> to vector<8x96xf32>
    %38 = arith.negf %37 : vector<8x96xf32>
    %39 = math.exp %38 : vector<8x96xf32>
    %cst_37 = arith.constant 1.000000e+00 : f32
    %40 = vector.broadcast %cst_37 : f32 to vector<8x96xf32>
    %41 = arith.addf %40, %39 : vector<8x96xf32>
    %42 = arith.divf %40, %41 : vector<8x96xf32>
    %43 = vector.extract_strided_slice %36 {offsets = [0, 96], sizes = [8, 32], strides = [1, 1]} : vector<8x128xf32> to vector<8x32xf32>
    %44 = math.tanh %43 : vector<8x32xf32>
    %45 = vector.extract_strided_slice %42 {offsets = [0, 0], sizes = [8, 32], strides = [1, 1]} : vector<8x96xf32> to vector<8x32xf32>
    %46 = vector.extract_strided_slice %42 {offsets = [0, 32], sizes = [8, 32], strides = [1, 1]} : vector<8x96xf32> to vector<8x32xf32>
    %47 = vector.extract_strided_slice %42 {offsets = [0, 64], sizes = [8, 32], strides = [1, 1]} : vector<8x96xf32> to vector<8x32xf32>
    %48 = arith.mulf %46, %27 : vector<8x32xf32>
    %49 = arith.mulf %45, %44 : vector<8x32xf32>
    %50 = arith.addf %48, %49 : vector<8x32xf32>
    %51 = math.tanh %50 : vector<8x32xf32>
    %52 = arith.mulf %47, %51 : vector<8x32xf32>
    %cst_38 = arith.constant dense<0.000000e+00> : vector<8x128xf32>
    %53 = tpu.matmul %52, %15, %cst_38 {dimension_numbers = #tpu.dot_dimension_numbers<[1], [0], [0], [1], [0, 0, 1, 1], [], []>} : vector<8x32xf32>, vector<32x128xf32>, vector<8x128xf32> -> vector<8x128xf32>
    %cst_39 = arith.constant dense<0.000000e+00> : vector<8x128xf32>
    %54 = tpu.matmul %25, %17, %cst_39 {dimension_numbers = #tpu.dot_dimension_numbers<[1], [0], [0], [1], [0, 0, 1, 1], [], []>} : vector<8x32xf32>, vector<32x128xf32>, vector<8x128xf32> -> vector<8x128xf32>
    %55 = arith.addf %53, %54 : vector<8x128xf32>
    %56 = arith.addf %55, %21 : vector<8x128xf32>
    %57 = vector.extract_strided_slice %56 {offsets = [0, 0], sizes = [8, 96], strides = [1, 1]} : vector<8x128xf32> to vector<8x96xf32>
    %58 = arith.negf %57 : vector<8x96xf32>
    %59 = math.exp %58 : vector<8x96xf32>
    %cst_40 = arith.constant 1.000000e+00 : f32
    %60 = vector.broadcast %cst_40 : f32 to vector<8x96xf32>
    %61 = arith.addf %60, %59 : vector<8x96xf32>
    %62 = arith.divf %60, %61 : vector<8x96xf32>
    %63 = vector.extract_strided_slice %56 {offsets = [0, 96], sizes = [8, 32], strides = [1, 1]} : vector<8x128xf32> to vector<8x32xf32>
    %64 = math.tanh %63 : vector<8x32xf32>
    %65 = vector.extract_strided_slice %62 {offsets = [0, 0], sizes = [8, 32], strides = [1, 1]} : vector<8x96xf32> to vector<8x32xf32>
    %66 = vector.extract_strided_slice %62 {offsets = [0, 32], sizes = [8, 32], strides = [1, 1]} : vector<8x96xf32> to vector<8x32xf32>
    %67 = vector.extract_strided_slice %62 {offsets = [0, 64], sizes = [8, 32], strides = [1, 1]} : vector<8x96xf32> to vector<8x32xf32>
    %68 = arith.mulf %66, %29 : vector<8x32xf32>
    %69 = arith.mulf %65, %64 : vector<8x32xf32>
    %70 = arith.addf %68, %69 : vector<8x32xf32>
    %71 = math.tanh %70 : vector<8x32xf32>
    %72 = arith.mulf %67, %71 : vector<8x32xf32>
    %c8_i32_41 = arith.constant 8 : i32
    %73 = arith.muli %arg0, %c8_i32_41 : i32
    %74 = arith.addi %73, %c0_i32_34 : i32
    %c8_i32_42 = arith.constant 8 : i32
    %75 = arith.cmpi slt, %74, %c8_i32_42 : i32
    %76 = arith.extui %75 : i1 to i32
    %77 = arith.sitofp %76 : i32 to f32
    %78 = vector.broadcast %77 : f32 to vector<8x32xf32>
    %79 = arith.mulf %72, %78 : vector<8x32xf32>
    %80 = arith.addf %30, %79 : vector<8x32xf32>
    %c1_i32 = arith.constant 1 : i32
    %c8_i32_43 = arith.constant 8 : i32
    %81 = arith.muli %c1_i32, %c8_i32_43 : i32
    %82 = tpu.assume_multiple %81, 8 : i32
    %83 = arith.index_cast %82 : i32 to index
    %c0_44 = arith.constant 0 : index
    %84 = vector.load %arg19[%83, %c0_44] : memref<64x128xf32, #tpu.memory_space<vmem>>, vector<8x128xf32>
    %cst_45 = arith.constant dense<0.000000e+00> : vector<8x128xf32>
    %85 = tpu.matmul %52, %13, %cst_45 {dimension_numbers = #tpu.dot_dimension_numbers<[1], [0], [0], [1], [0, 0, 1, 1], [], []>} : vector<8x32xf32>, vector<32x128xf32>, vector<8x128xf32> -> vector<8x128xf32>
    %86 = arith.addf %84, %85 : vector<8x128xf32>
    %87 = vector.extract_strided_slice %86 {offsets = [0, 0], sizes = [8, 96], strides = [1, 1]} : vector<8x128xf32> to vector<8x96xf32>
    %88 = arith.negf %87 : vector<8x96xf32>
    %89 = math.exp %88 : vector<8x96xf32>
    %cst_46 = arith.constant 1.000000e+00 : f32
    %90 = vector.broadcast %cst_46 : f32 to vector<8x96xf32>
    %91 = arith.addf %90, %89 : vector<8x96xf32>
    %92 = arith.divf %90, %91 : vector<8x96xf32>
    %93 = vector.extract_strided_slice %86 {offsets = [0, 96], sizes = [8, 32], strides = [1, 1]} : vector<8x128xf32> to vector<8x32xf32>
    %94 = math.tanh %93 : vector<8x32xf32>
    %95 = vector.extract_strided_slice %92 {offsets = [0, 0], sizes = [8, 32], strides = [1, 1]} : vector<8x96xf32> to vector<8x32xf32>
    %96 = vector.extract_strided_slice %92 {offsets = [0, 32], sizes = [8, 32], strides = [1, 1]} : vector<8x96xf32> to vector<8x32xf32>
    %97 = vector.extract_strided_slice %92 {offsets = [0, 64], sizes = [8, 32], strides = [1, 1]} : vector<8x96xf32> to vector<8x32xf32>
    %98 = arith.mulf %96, %50 : vector<8x32xf32>
    %99 = arith.mulf %95, %94 : vector<8x32xf32>
    %100 = arith.addf %98, %99 : vector<8x32xf32>
    %101 = math.tanh %100 : vector<8x32xf32>
    %102 = arith.mulf %97, %101 : vector<8x32xf32>
    %cst_47 = arith.constant dense<0.000000e+00> : vector<8x128xf32>
    %103 = tpu.matmul %102, %15, %cst_47 {dimension_numbers = #tpu.dot_dimension_numbers<[1], [0], [0], [1], [0, 0, 1, 1], [], []>} : vector<8x32xf32>, vector<32x128xf32>, vector<8x128xf32> -> vector<8x128xf32>
    %cst_48 = arith.constant dense<0.000000e+00> : vector<8x128xf32>
    %104 = tpu.matmul %72, %17, %cst_48 {dimension_numbers = #tpu.dot_dimension_numbers<[1], [0], [0], [1], [0, 0, 1, 1], [], []>} : vector<8x32xf32>, vector<32x128xf32>, vector<8x128xf32> -> vector<8x128xf32>
    %105 = arith.addf %103, %104 : vector<8x128xf32>
    %106 = arith.addf %105, %21 : vector<8x128xf32>
    %107 = vector.extract_strided_slice %106 {offsets = [0, 0], sizes = [8, 96], strides = [1, 1]} : vector<8x128xf32> to vector<8x96xf32>
    %108 = arith.negf %107 : vector<8x96xf32>
    %109 = math.exp %108 : vector<8x96xf32>
    %cst_49 = arith.constant 1.000000e+00 : f32
    %110 = vector.broadcast %cst_49 : f32 to vector<8x96xf32>
    %111 = arith.addf %110, %109 : vector<8x96xf32>
    %112 = arith.divf %110, %111 : vector<8x96xf32>
    %113 = vector.extract_strided_slice %106 {offsets = [0, 96], sizes = [8, 32], strides = [1, 1]} : vector<8x128xf32> to vector<8x32xf32>
    %114 = math.tanh %113 : vector<8x32xf32>
    %115 = vector.extract_strided_slice %112 {offsets = [0, 0], sizes = [8, 32], strides = [1, 1]} : vector<8x96xf32> to vector<8x32xf32>
    %116 = vector.extract_strided_slice %112 {offsets = [0, 32], sizes = [8, 32], strides = [1, 1]} : vector<8x96xf32> to vector<8x32xf32>
    %117 = vector.extract_strided_slice %112 {offsets = [0, 64], sizes = [8, 32], strides = [1, 1]} : vector<8x96xf32> to vector<8x32xf32>
    %118 = arith.mulf %116, %70 : vector<8x32xf32>
    %119 = arith.mulf %115, %114 : vector<8x32xf32>
    %120 = arith.addf %118, %119 : vector<8x32xf32>
    %121 = math.tanh %120 : vector<8x32xf32>
    %122 = arith.mulf %117, %121 : vector<8x32xf32>
    %c8_i32_50 = arith.constant 8 : i32
    %123 = arith.muli %arg0, %c8_i32_50 : i32
    %124 = arith.addi %123, %c1_i32 : i32
    %c8_i32_51 = arith.constant 8 : i32
    %125 = arith.cmpi slt, %124, %c8_i32_51 : i32
    %126 = arith.extui %125 : i1 to i32
    %127 = arith.sitofp %126 : i32 to f32
    %128 = vector.broadcast %127 : f32 to vector<8x32xf32>
    %129 = arith.mulf %122, %128 : vector<8x32xf32>
    %130 = arith.addf %80, %129 : vector<8x32xf32>
    %c2_i32 = arith.constant 2 : i32
    %c8_i32_52 = arith.constant 8 : i32
    %131 = arith.muli %c2_i32, %c8_i32_52 : i32
    %132 = tpu.assume_multiple %131, 8 : i32
    %133 = arith.index_cast %132 : i32 to index
    %c0_53 = arith.constant 0 : index
    %134 = vector.load %arg19[%133, %c0_53] : memref<64x128xf32, #tpu.memory_space<vmem>>, vector<8x128xf32>
    %cst_54 = arith.constant dense<0.000000e+00> : vector<8x128xf32>
    %135 = tpu.matmul %102, %13, %cst_54 {dimension_numbers = #tpu.dot_dimension_numbers<[1], [0], [0], [1], [0, 0, 1, 1], [], []>} : vector<8x32xf32>, vector<32x128xf32>, vector<8x128xf32> -> vector<8x128xf32>
    %136 = arith.addf %134, %135 : vector<8x128xf32>
    %137 = vector.extract_strided_slice %136 {offsets = [0, 0], sizes = [8, 96], strides = [1, 1]} : vector<8x128xf32> to vector<8x96xf32>
    %138 = arith.negf %137 : vector<8x96xf32>
    %139 = math.exp %138 : vector<8x96xf32>
    %cst_55 = arith.constant 1.000000e+00 : f32
    %140 = vector.broadcast %cst_55 : f32 to vector<8x96xf32>
    %141 = arith.addf %140, %139 : vector<8x96xf32>
    %142 = arith.divf %140, %141 : vector<8x96xf32>
    %143 = vector.extract_strided_slice %136 {offsets = [0, 96], sizes = [8, 32], strides = [1, 1]} : vector<8x128xf32> to vector<8x32xf32>
    %144 = math.tanh %143 : vector<8x32xf32>
    %145 = vector.extract_strided_slice %142 {offsets = [0, 0], sizes = [8, 32], strides = [1, 1]} : vector<8x96xf32> to vector<8x32xf32>
    %146 = vector.extract_strided_slice %142 {offsets = [0, 32], sizes = [8, 32], strides = [1, 1]} : vector<8x96xf32> to vector<8x32xf32>
    %147 = vector.extract_strided_slice %142 {offsets = [0, 64], sizes = [8, 32], strides = [1, 1]} : vector<8x96xf32> to vector<8x32xf32>
    %148 = arith.mulf %146, %100 : vector<8x32xf32>
    %149 = arith.mulf %145, %144 : vector<8x32xf32>
    %150 = arith.addf %148, %149 : vector<8x32xf32>
    %151 = math.tanh %150 : vector<8x32xf32>
    %152 = arith.mulf %147, %151 : vector<8x32xf32>
    %cst_56 = arith.constant dense<0.000000e+00> : vector<8x128xf32>
    %153 = tpu.matmul %152, %15, %cst_56 {dimension_numbers = #tpu.dot_dimension_numbers<[1], [0], [0], [1], [0, 0, 1, 1], [], []>} : vector<8x32xf32>, vector<32x128xf32>, vector<8x128xf32> -> vector<8x128xf32>
    %cst_57 = arith.constant dense<0.000000e+00> : vector<8x128xf32>
    %154 = tpu.matmul %122, %17, %cst_57 {dimension_numbers = #tpu.dot_dimension_numbers<[1], [0], [0], [1], [0, 0, 1, 1], [], []>} : vector<8x32xf32>, vector<32x128xf32>, vector<8x128xf32> -> vector<8x128xf32>
    %155 = arith.addf %153, %154 : vector<8x128xf32>
    %156 = arith.addf %155, %21 : vector<8x128xf32>
    %157 = vector.extract_strided_slice %156 {offsets = [0, 0], sizes = [8, 96], strides = [1, 1]} : vector<8x128xf32> to vector<8x96xf32>
    %158 = arith.negf %157 : vector<8x96xf32>
    %159 = math.exp %158 : vector<8x96xf32>
    %cst_58 = arith.constant 1.000000e+00 : f32
    %160 = vector.broadcast %cst_58 : f32 to vector<8x96xf32>
    %161 = arith.addf %160, %159 : vector<8x96xf32>
    %162 = arith.divf %160, %161 : vector<8x96xf32>
    %163 = vector.extract_strided_slice %156 {offsets = [0, 96], sizes = [8, 32], strides = [1, 1]} : vector<8x128xf32> to vector<8x32xf32>
    %164 = math.tanh %163 : vector<8x32xf32>
    %165 = vector.extract_strided_slice %162 {offsets = [0, 0], sizes = [8, 32], strides = [1, 1]} : vector<8x96xf32> to vector<8x32xf32>
    %166 = vector.extract_strided_slice %162 {offsets = [0, 32], sizes = [8, 32], strides = [1, 1]} : vector<8x96xf32> to vector<8x32xf32>
    %167 = vector.extract_strided_slice %162 {offsets = [0, 64], sizes = [8, 32], strides = [1, 1]} : vector<8x96xf32> to vector<8x32xf32>
    %168 = arith.mulf %166, %120 : vector<8x32xf32>
    %169 = arith.mulf %165, %164 : vector<8x32xf32>
    %170 = arith.addf %168, %169 : vector<8x32xf32>
    %171 = math.tanh %170 : vector<8x32xf32>
    %172 = arith.mulf %167, %171 : vector<8x32xf32>
    %c8_i32_59 = arith.constant 8 : i32
    %173 = arith.muli %arg0, %c8_i32_59 : i32
    %174 = arith.addi %173, %c2_i32 : i32
    %c8_i32_60 = arith.constant 8 : i32
    %175 = arith.cmpi slt, %174, %c8_i32_60 : i32
    %176 = arith.extui %175 : i1 to i32
    %177 = arith.sitofp %176 : i32 to f32
    %178 = vector.broadcast %177 : f32 to vector<8x32xf32>
    %179 = arith.mulf %172, %178 : vector<8x32xf32>
    %180 = arith.addf %130, %179 : vector<8x32xf32>
    %c3_i32 = arith.constant 3 : i32
    %c8_i32_61 = arith.constant 8 : i32
    %181 = arith.muli %c3_i32, %c8_i32_61 : i32
    %182 = tpu.assume_multiple %181, 8 : i32
    %183 = arith.index_cast %182 : i32 to index
    %c0_62 = arith.constant 0 : index
    %184 = vector.load %arg19[%183, %c0_62] : memref<64x128xf32, #tpu.memory_space<vmem>>, vector<8x128xf32>
    %cst_63 = arith.constant dense<0.000000e+00> : vector<8x128xf32>
    %185 = tpu.matmul %152, %13, %cst_63 {dimension_numbers = #tpu.dot_dimension_numbers<[1], [0], [0], [1], [0, 0, 1, 1], [], []>} : vector<8x32xf32>, vector<32x128xf32>, vector<8x128xf32> -> vector<8x128xf32>
    %186 = arith.addf %184, %185 : vector<8x128xf32>
    %187 = vector.extract_strided_slice %186 {offsets = [0, 0], sizes = [8, 96], strides = [1, 1]} : vector<8x128xf32> to vector<8x96xf32>
    %188 = arith.negf %187 : vector<8x96xf32>
    %189 = math.exp %188 : vector<8x96xf32>
    %cst_64 = arith.constant 1.000000e+00 : f32
    %190 = vector.broadcast %cst_64 : f32 to vector<8x96xf32>
    %191 = arith.addf %190, %189 : vector<8x96xf32>
    %192 = arith.divf %190, %191 : vector<8x96xf32>
    %193 = vector.extract_strided_slice %186 {offsets = [0, 96], sizes = [8, 32], strides = [1, 1]} : vector<8x128xf32> to vector<8x32xf32>
    %194 = math.tanh %193 : vector<8x32xf32>
    %195 = vector.extract_strided_slice %192 {offsets = [0, 0], sizes = [8, 32], strides = [1, 1]} : vector<8x96xf32> to vector<8x32xf32>
    %196 = vector.extract_strided_slice %192 {offsets = [0, 32], sizes = [8, 32], strides = [1, 1]} : vector<8x96xf32> to vector<8x32xf32>
    %197 = vector.extract_strided_slice %192 {offsets = [0, 64], sizes = [8, 32], strides = [1, 1]} : vector<8x96xf32> to vector<8x32xf32>
    %198 = arith.mulf %196, %150 : vector<8x32xf32>
    %199 = arith.mulf %195, %194 : vector<8x32xf32>
    %200 = arith.addf %198, %199 : vector<8x32xf32>
    %201 = math.tanh %200 : vector<8x32xf32>
    %202 = arith.mulf %197, %201 : vector<8x32xf32>
    %cst_65 = arith.constant dense<0.000000e+00> : vector<8x128xf32>
    %203 = tpu.matmul %202, %15, %cst_65 {dimension_numbers = #tpu.dot_dimension_numbers<[1], [0], [0], [1], [0, 0, 1, 1], [], []>} : vector<8x32xf32>, vector<32x128xf32>, vector<8x128xf32> -> vector<8x128xf32>
    %cst_66 = arith.constant dense<0.000000e+00> : vector<8x128xf32>
    %204 = tpu.matmul %172, %17, %cst_66 {dimension_numbers = #tpu.dot_dimension_numbers<[1], [0], [0], [1], [0, 0, 1, 1], [], []>} : vector<8x32xf32>, vector<32x128xf32>, vector<8x128xf32> -> vector<8x128xf32>
    %205 = arith.addf %203, %204 : vector<8x128xf32>
    %206 = arith.addf %205, %21 : vector<8x128xf32>
    %207 = vector.extract_strided_slice %206 {offsets = [0, 0], sizes = [8, 96], strides = [1, 1]} : vector<8x128xf32> to vector<8x96xf32>
    %208 = arith.negf %207 : vector<8x96xf32>
    %209 = math.exp %208 : vector<8x96xf32>
    %cst_67 = arith.constant 1.000000e+00 : f32
    %210 = vector.broadcast %cst_67 : f32 to vector<8x96xf32>
    %211 = arith.addf %210, %209 : vector<8x96xf32>
    %212 = arith.divf %210, %211 : vector<8x96xf32>
    %213 = vector.extract_strided_slice %206 {offsets = [0, 96], sizes = [8, 32], strides = [1, 1]} : vector<8x128xf32> to vector<8x32xf32>
    %214 = math.tanh %213 : vector<8x32xf32>
    %215 = vector.extract_strided_slice %212 {offsets = [0, 0], sizes = [8, 32], strides = [1, 1]} : vector<8x96xf32> to vector<8x32xf32>
    %216 = vector.extract_strided_slice %212 {offsets = [0, 32], sizes = [8, 32], strides = [1, 1]} : vector<8x96xf32> to vector<8x32xf32>
    %217 = vector.extract_strided_slice %212 {offsets = [0, 64], sizes = [8, 32], strides = [1, 1]} : vector<8x96xf32> to vector<8x32xf32>
    %218 = arith.mulf %216, %170 : vector<8x32xf32>
    %219 = arith.mulf %215, %214 : vector<8x32xf32>
    %220 = arith.addf %218, %219 : vector<8x32xf32>
    %221 = math.tanh %220 : vector<8x32xf32>
    %222 = arith.mulf %217, %221 : vector<8x32xf32>
    %c8_i32_68 = arith.constant 8 : i32
    %223 = arith.muli %arg0, %c8_i32_68 : i32
    %224 = arith.addi %223, %c3_i32 : i32
    %c8_i32_69 = arith.constant 8 : i32
    %225 = arith.cmpi slt, %224, %c8_i32_69 : i32
    %226 = arith.extui %225 : i1 to i32
    %227 = arith.sitofp %226 : i32 to f32
    %228 = vector.broadcast %227 : f32 to vector<8x32xf32>
    %229 = arith.mulf %222, %228 : vector<8x32xf32>
    %230 = arith.addf %180, %229 : vector<8x32xf32>
    %c4_i32 = arith.constant 4 : i32
    %c8_i32_70 = arith.constant 8 : i32
    %231 = arith.muli %c4_i32, %c8_i32_70 : i32
    %232 = tpu.assume_multiple %231, 8 : i32
    %233 = arith.index_cast %232 : i32 to index
    %c0_71 = arith.constant 0 : index
    %234 = vector.load %arg19[%233, %c0_71] : memref<64x128xf32, #tpu.memory_space<vmem>>, vector<8x128xf32>
    %cst_72 = arith.constant dense<0.000000e+00> : vector<8x128xf32>
    %235 = tpu.matmul %202, %13, %cst_72 {dimension_numbers = #tpu.dot_dimension_numbers<[1], [0], [0], [1], [0, 0, 1, 1], [], []>} : vector<8x32xf32>, vector<32x128xf32>, vector<8x128xf32> -> vector<8x128xf32>
    %236 = arith.addf %234, %235 : vector<8x128xf32>
    %237 = vector.extract_strided_slice %236 {offsets = [0, 0], sizes = [8, 96], strides = [1, 1]} : vector<8x128xf32> to vector<8x96xf32>
    %238 = arith.negf %237 : vector<8x96xf32>
    %239 = math.exp %238 : vector<8x96xf32>
    %cst_73 = arith.constant 1.000000e+00 : f32
    %240 = vector.broadcast %cst_73 : f32 to vector<8x96xf32>
    %241 = arith.addf %240, %239 : vector<8x96xf32>
    %242 = arith.divf %240, %241 : vector<8x96xf32>
    %243 = vector.extract_strided_slice %236 {offsets = [0, 96], sizes = [8, 32], strides = [1, 1]} : vector<8x128xf32> to vector<8x32xf32>
    %244 = math.tanh %243 : vector<8x32xf32>
    %245 = vector.extract_strided_slice %242 {offsets = [0, 0], sizes = [8, 32], strides = [1, 1]} : vector<8x96xf32> to vector<8x32xf32>
    %246 = vector.extract_strided_slice %242 {offsets = [0, 32], sizes = [8, 32], strides = [1, 1]} : vector<8x96xf32> to vector<8x32xf32>
    %247 = vector.extract_strided_slice %242 {offsets = [0, 64], sizes = [8, 32], strides = [1, 1]} : vector<8x96xf32> to vector<8x32xf32>
    %248 = arith.mulf %246, %200 : vector<8x32xf32>
    %249 = arith.mulf %245, %244 : vector<8x32xf32>
    %250 = arith.addf %248, %249 : vector<8x32xf32>
    %251 = math.tanh %250 : vector<8x32xf32>
    %252 = arith.mulf %247, %251 : vector<8x32xf32>
    %cst_74 = arith.constant dense<0.000000e+00> : vector<8x128xf32>
    %253 = tpu.matmul %252, %15, %cst_74 {dimension_numbers = #tpu.dot_dimension_numbers<[1], [0], [0], [1], [0, 0, 1, 1], [], []>} : vector<8x32xf32>, vector<32x128xf32>, vector<8x128xf32> -> vector<8x128xf32>
    %cst_75 = arith.constant dense<0.000000e+00> : vector<8x128xf32>
    %254 = tpu.matmul %222, %17, %cst_75 {dimension_numbers = #tpu.dot_dimension_numbers<[1], [0], [0], [1], [0, 0, 1, 1], [], []>} : vector<8x32xf32>, vector<32x128xf32>, vector<8x128xf32> -> vector<8x128xf32>
    %255 = arith.addf %253, %254 : vector<8x128xf32>
    %256 = arith.addf %255, %21 : vector<8x128xf32>
    %257 = vector.extract_strided_slice %256 {offsets = [0, 0], sizes = [8, 96], strides = [1, 1]} : vector<8x128xf32> to vector<8x96xf32>
    %258 = arith.negf %257 : vector<8x96xf32>
    %259 = math.exp %258 : vector<8x96xf32>
    %cst_76 = arith.constant 1.000000e+00 : f32
    %260 = vector.broadcast %cst_76 : f32 to vector<8x96xf32>
    %261 = arith.addf %260, %259 : vector<8x96xf32>
    %262 = arith.divf %260, %261 : vector<8x96xf32>
    %263 = vector.extract_strided_slice %256 {offsets = [0, 96], sizes = [8, 32], strides = [1, 1]} : vector<8x128xf32> to vector<8x32xf32>
    %264 = math.tanh %263 : vector<8x32xf32>
    %265 = vector.extract_strided_slice %262 {offsets = [0, 0], sizes = [8, 32], strides = [1, 1]} : vector<8x96xf32> to vector<8x32xf32>
    %266 = vector.extract_strided_slice %262 {offsets = [0, 32], sizes = [8, 32], strides = [1, 1]} : vector<8x96xf32> to vector<8x32xf32>
    %267 = vector.extract_strided_slice %262 {offsets = [0, 64], sizes = [8, 32], strides = [1, 1]} : vector<8x96xf32> to vector<8x32xf32>
    %268 = arith.mulf %266, %220 : vector<8x32xf32>
    %269 = arith.mulf %265, %264 : vector<8x32xf32>
    %270 = arith.addf %268, %269 : vector<8x32xf32>
    %271 = math.tanh %270 : vector<8x32xf32>
    %272 = arith.mulf %267, %271 : vector<8x32xf32>
    %c8_i32_77 = arith.constant 8 : i32
    %273 = arith.muli %arg0, %c8_i32_77 : i32
    %274 = arith.addi %273, %c4_i32 : i32
    %c8_i32_78 = arith.constant 8 : i32
    %275 = arith.cmpi slt, %274, %c8_i32_78 : i32
    %276 = arith.extui %275 : i1 to i32
    %277 = arith.sitofp %276 : i32 to f32
    %278 = vector.broadcast %277 : f32 to vector<8x32xf32>
    %279 = arith.mulf %272, %278 : vector<8x32xf32>
    %280 = arith.addf %230, %279 : vector<8x32xf32>
    %c5_i32 = arith.constant 5 : i32
    %c8_i32_79 = arith.constant 8 : i32
    %281 = arith.muli %c5_i32, %c8_i32_79 : i32
    %282 = tpu.assume_multiple %281, 8 : i32
    %283 = arith.index_cast %282 : i32 to index
    %c0_80 = arith.constant 0 : index
    %284 = vector.load %arg19[%283, %c0_80] : memref<64x128xf32, #tpu.memory_space<vmem>>, vector<8x128xf32>
    %cst_81 = arith.constant dense<0.000000e+00> : vector<8x128xf32>
    %285 = tpu.matmul %252, %13, %cst_81 {dimension_numbers = #tpu.dot_dimension_numbers<[1], [0], [0], [1], [0, 0, 1, 1], [], []>} : vector<8x32xf32>, vector<32x128xf32>, vector<8x128xf32> -> vector<8x128xf32>
    %286 = arith.addf %284, %285 : vector<8x128xf32>
    %287 = vector.extract_strided_slice %286 {offsets = [0, 0], sizes = [8, 96], strides = [1, 1]} : vector<8x128xf32> to vector<8x96xf32>
    %288 = arith.negf %287 : vector<8x96xf32>
    %289 = math.exp %288 : vector<8x96xf32>
    %cst_82 = arith.constant 1.000000e+00 : f32
    %290 = vector.broadcast %cst_82 : f32 to vector<8x96xf32>
    %291 = arith.addf %290, %289 : vector<8x96xf32>
    %292 = arith.divf %290, %291 : vector<8x96xf32>
    %293 = vector.extract_strided_slice %286 {offsets = [0, 96], sizes = [8, 32], strides = [1, 1]} : vector<8x128xf32> to vector<8x32xf32>
    %294 = math.tanh %293 : vector<8x32xf32>
    %295 = vector.extract_strided_slice %292 {offsets = [0, 0], sizes = [8, 32], strides = [1, 1]} : vector<8x96xf32> to vector<8x32xf32>
    %296 = vector.extract_strided_slice %292 {offsets = [0, 32], sizes = [8, 32], strides = [1, 1]} : vector<8x96xf32> to vector<8x32xf32>
    %297 = vector.extract_strided_slice %292 {offsets = [0, 64], sizes = [8, 32], strides = [1, 1]} : vector<8x96xf32> to vector<8x32xf32>
    %298 = arith.mulf %296, %250 : vector<8x32xf32>
    %299 = arith.mulf %295, %294 : vector<8x32xf32>
    %300 = arith.addf %298, %299 : vector<8x32xf32>
    %301 = math.tanh %300 : vector<8x32xf32>
    %302 = arith.mulf %297, %301 : vector<8x32xf32>
    %cst_83 = arith.constant dense<0.000000e+00> : vector<8x128xf32>
    %303 = tpu.matmul %302, %15, %cst_83 {dimension_numbers = #tpu.dot_dimension_numbers<[1], [0], [0], [1], [0, 0, 1, 1], [], []>} : vector<8x32xf32>, vector<32x128xf32>, vector<8x128xf32> -> vector<8x128xf32>
    %cst_84 = arith.constant dense<0.000000e+00> : vector<8x128xf32>
    %304 = tpu.matmul %272, %17, %cst_84 {dimension_numbers = #tpu.dot_dimension_numbers<[1], [0], [0], [1], [0, 0, 1, 1], [], []>} : vector<8x32xf32>, vector<32x128xf32>, vector<8x128xf32> -> vector<8x128xf32>
    %305 = arith.addf %303, %304 : vector<8x128xf32>
    %306 = arith.addf %305, %21 : vector<8x128xf32>
    %307 = vector.extract_strided_slice %306 {offsets = [0, 0], sizes = [8, 96], strides = [1, 1]} : vector<8x128xf32> to vector<8x96xf32>
    %308 = arith.negf %307 : vector<8x96xf32>
    %309 = math.exp %308 : vector<8x96xf32>
    %cst_85 = arith.constant 1.000000e+00 : f32
    %310 = vector.broadcast %cst_85 : f32 to vector<8x96xf32>
    %311 = arith.addf %310, %309 : vector<8x96xf32>
    %312 = arith.divf %310, %311 : vector<8x96xf32>
    %313 = vector.extract_strided_slice %306 {offsets = [0, 96], sizes = [8, 32], strides = [1, 1]} : vector<8x128xf32> to vector<8x32xf32>
    %314 = math.tanh %313 : vector<8x32xf32>
    %315 = vector.extract_strided_slice %312 {offsets = [0, 0], sizes = [8, 32], strides = [1, 1]} : vector<8x96xf32> to vector<8x32xf32>
    %316 = vector.extract_strided_slice %312 {offsets = [0, 32], sizes = [8, 32], strides = [1, 1]} : vector<8x96xf32> to vector<8x32xf32>
    %317 = vector.extract_strided_slice %312 {offsets = [0, 64], sizes = [8, 32], strides = [1, 1]} : vector<8x96xf32> to vector<8x32xf32>
    %318 = arith.mulf %316, %270 : vector<8x32xf32>
    %319 = arith.mulf %315, %314 : vector<8x32xf32>
    %320 = arith.addf %318, %319 : vector<8x32xf32>
    %321 = math.tanh %320 : vector<8x32xf32>
    %322 = arith.mulf %317, %321 : vector<8x32xf32>
    %c8_i32_86 = arith.constant 8 : i32
    %323 = arith.muli %arg0, %c8_i32_86 : i32
    %324 = arith.addi %323, %c5_i32 : i32
    %c8_i32_87 = arith.constant 8 : i32
    %325 = arith.cmpi slt, %324, %c8_i32_87 : i32
    %326 = arith.extui %325 : i1 to i32
    %327 = arith.sitofp %326 : i32 to f32
    %328 = vector.broadcast %327 : f32 to vector<8x32xf32>
    %329 = arith.mulf %322, %328 : vector<8x32xf32>
    %330 = arith.addf %280, %329 : vector<8x32xf32>
    %c6_i32 = arith.constant 6 : i32
    %c8_i32_88 = arith.constant 8 : i32
    %331 = arith.muli %c6_i32, %c8_i32_88 : i32
    %332 = tpu.assume_multiple %331, 8 : i32
    %333 = arith.index_cast %332 : i32 to index
    %c0_89 = arith.constant 0 : index
    %334 = vector.load %arg19[%333, %c0_89] : memref<64x128xf32, #tpu.memory_space<vmem>>, vector<8x128xf32>
    %cst_90 = arith.constant dense<0.000000e+00> : vector<8x128xf32>
    %335 = tpu.matmul %302, %13, %cst_90 {dimension_numbers = #tpu.dot_dimension_numbers<[1], [0], [0], [1], [0, 0, 1, 1], [], []>} : vector<8x32xf32>, vector<32x128xf32>, vector<8x128xf32> -> vector<8x128xf32>
    %336 = arith.addf %334, %335 : vector<8x128xf32>
    %337 = vector.extract_strided_slice %336 {offsets = [0, 0], sizes = [8, 96], strides = [1, 1]} : vector<8x128xf32> to vector<8x96xf32>
    %338 = arith.negf %337 : vector<8x96xf32>
    %339 = math.exp %338 : vector<8x96xf32>
    %cst_91 = arith.constant 1.000000e+00 : f32
    %340 = vector.broadcast %cst_91 : f32 to vector<8x96xf32>
    %341 = arith.addf %340, %339 : vector<8x96xf32>
    %342 = arith.divf %340, %341 : vector<8x96xf32>
    %343 = vector.extract_strided_slice %336 {offsets = [0, 96], sizes = [8, 32], strides = [1, 1]} : vector<8x128xf32> to vector<8x32xf32>
    %344 = math.tanh %343 : vector<8x32xf32>
    %345 = vector.extract_strided_slice %342 {offsets = [0, 0], sizes = [8, 32], strides = [1, 1]} : vector<8x96xf32> to vector<8x32xf32>
    %346 = vector.extract_strided_slice %342 {offsets = [0, 32], sizes = [8, 32], strides = [1, 1]} : vector<8x96xf32> to vector<8x32xf32>
    %347 = vector.extract_strided_slice %342 {offsets = [0, 64], sizes = [8, 32], strides = [1, 1]} : vector<8x96xf32> to vector<8x32xf32>
    %348 = arith.mulf %346, %300 : vector<8x32xf32>
    %349 = arith.mulf %345, %344 : vector<8x32xf32>
    %350 = arith.addf %348, %349 : vector<8x32xf32>
    %351 = math.tanh %350 : vector<8x32xf32>
    %352 = arith.mulf %347, %351 : vector<8x32xf32>
    %cst_92 = arith.constant dense<0.000000e+00> : vector<8x128xf32>
    %353 = tpu.matmul %352, %15, %cst_92 {dimension_numbers = #tpu.dot_dimension_numbers<[1], [0], [0], [1], [0, 0, 1, 1], [], []>} : vector<8x32xf32>, vector<32x128xf32>, vector<8x128xf32> -> vector<8x128xf32>
    %cst_93 = arith.constant dense<0.000000e+00> : vector<8x128xf32>
    %354 = tpu.matmul %322, %17, %cst_93 {dimension_numbers = #tpu.dot_dimension_numbers<[1], [0], [0], [1], [0, 0, 1, 1], [], []>} : vector<8x32xf32>, vector<32x128xf32>, vector<8x128xf32> -> vector<8x128xf32>
    %355 = arith.addf %353, %354 : vector<8x128xf32>
    %356 = arith.addf %355, %21 : vector<8x128xf32>
    %357 = vector.extract_strided_slice %356 {offsets = [0, 0], sizes = [8, 96], strides = [1, 1]} : vector<8x128xf32> to vector<8x96xf32>
    %358 = arith.negf %357 : vector<8x96xf32>
    %359 = math.exp %358 : vector<8x96xf32>
    %cst_94 = arith.constant 1.000000e+00 : f32
    %360 = vector.broadcast %cst_94 : f32 to vector<8x96xf32>
    %361 = arith.addf %360, %359 : vector<8x96xf32>
    %362 = arith.divf %360, %361 : vector<8x96xf32>
    %363 = vector.extract_strided_slice %356 {offsets = [0, 96], sizes = [8, 32], strides = [1, 1]} : vector<8x128xf32> to vector<8x32xf32>
    %364 = math.tanh %363 : vector<8x32xf32>
    %365 = vector.extract_strided_slice %362 {offsets = [0, 0], sizes = [8, 32], strides = [1, 1]} : vector<8x96xf32> to vector<8x32xf32>
    %366 = vector.extract_strided_slice %362 {offsets = [0, 32], sizes = [8, 32], strides = [1, 1]} : vector<8x96xf32> to vector<8x32xf32>
    %367 = vector.extract_strided_slice %362 {offsets = [0, 64], sizes = [8, 32], strides = [1, 1]} : vector<8x96xf32> to vector<8x32xf32>
    %368 = arith.mulf %366, %320 : vector<8x32xf32>
    %369 = arith.mulf %365, %364 : vector<8x32xf32>
    %370 = arith.addf %368, %369 : vector<8x32xf32>
    %371 = math.tanh %370 : vector<8x32xf32>
    %372 = arith.mulf %367, %371 : vector<8x32xf32>
    %c8_i32_95 = arith.constant 8 : i32
    %373 = arith.muli %arg0, %c8_i32_95 : i32
    %374 = arith.addi %373, %c6_i32 : i32
    %c8_i32_96 = arith.constant 8 : i32
    %375 = arith.cmpi slt, %374, %c8_i32_96 : i32
    %376 = arith.extui %375 : i1 to i32
    %377 = arith.sitofp %376 : i32 to f32
    %378 = vector.broadcast %377 : f32 to vector<8x32xf32>
    %379 = arith.mulf %372, %378 : vector<8x32xf32>
    %380 = arith.addf %330, %379 : vector<8x32xf32>
    %c7_i32 = arith.constant 7 : i32
    %c8_i32_97 = arith.constant 8 : i32
    %381 = arith.muli %c7_i32, %c8_i32_97 : i32
    %382 = tpu.assume_multiple %381, 8 : i32
    %383 = arith.index_cast %382 : i32 to index
    %c0_98 = arith.constant 0 : index
    %384 = vector.load %arg19[%383, %c0_98] : memref<64x128xf32, #tpu.memory_space<vmem>>, vector<8x128xf32>
    %cst_99 = arith.constant dense<0.000000e+00> : vector<8x128xf32>
    %385 = tpu.matmul %352, %13, %cst_99 {dimension_numbers = #tpu.dot_dimension_numbers<[1], [0], [0], [1], [0, 0, 1, 1], [], []>} : vector<8x32xf32>, vector<32x128xf32>, vector<8x128xf32> -> vector<8x128xf32>
    %386 = arith.addf %384, %385 : vector<8x128xf32>
    %387 = vector.extract_strided_slice %386 {offsets = [0, 0], sizes = [8, 96], strides = [1, 1]} : vector<8x128xf32> to vector<8x96xf32>
    %388 = arith.negf %387 : vector<8x96xf32>
    %389 = math.exp %388 : vector<8x96xf32>
    %cst_100 = arith.constant 1.000000e+00 : f32
    %390 = vector.broadcast %cst_100 : f32 to vector<8x96xf32>
    %391 = arith.addf %390, %389 : vector<8x96xf32>
    %392 = arith.divf %390, %391 : vector<8x96xf32>
    %393 = vector.extract_strided_slice %386 {offsets = [0, 96], sizes = [8, 32], strides = [1, 1]} : vector<8x128xf32> to vector<8x32xf32>
    %394 = math.tanh %393 : vector<8x32xf32>
    %395 = vector.extract_strided_slice %392 {offsets = [0, 0], sizes = [8, 32], strides = [1, 1]} : vector<8x96xf32> to vector<8x32xf32>
    %396 = vector.extract_strided_slice %392 {offsets = [0, 32], sizes = [8, 32], strides = [1, 1]} : vector<8x96xf32> to vector<8x32xf32>
    %397 = vector.extract_strided_slice %392 {offsets = [0, 64], sizes = [8, 32], strides = [1, 1]} : vector<8x96xf32> to vector<8x32xf32>
    %398 = arith.mulf %396, %350 : vector<8x32xf32>
    %399 = arith.mulf %395, %394 : vector<8x32xf32>
    %400 = arith.addf %398, %399 : vector<8x32xf32>
    %401 = math.tanh %400 : vector<8x32xf32>
    %402 = arith.mulf %397, %401 : vector<8x32xf32>
    %cst_101 = arith.constant dense<0.000000e+00> : vector<8x128xf32>
    %403 = tpu.matmul %402, %15, %cst_101 {dimension_numbers = #tpu.dot_dimension_numbers<[1], [0], [0], [1], [0, 0, 1, 1], [], []>} : vector<8x32xf32>, vector<32x128xf32>, vector<8x128xf32> -> vector<8x128xf32>
    %cst_102 = arith.constant dense<0.000000e+00> : vector<8x128xf32>
    %404 = tpu.matmul %372, %17, %cst_102 {dimension_numbers = #tpu.dot_dimension_numbers<[1], [0], [0], [1], [0, 0, 1, 1], [], []>} : vector<8x32xf32>, vector<32x128xf32>, vector<8x128xf32> -> vector<8x128xf32>
    %405 = arith.addf %403, %404 : vector<8x128xf32>
    %406 = arith.addf %405, %21 : vector<8x128xf32>
    %407 = vector.extract_strided_slice %406 {offsets = [0, 0], sizes = [8, 96], strides = [1, 1]} : vector<8x128xf32> to vector<8x96xf32>
    %408 = arith.negf %407 : vector<8x96xf32>
    %409 = math.exp %408 : vector<8x96xf32>
    %cst_103 = arith.constant 1.000000e+00 : f32
    %410 = vector.broadcast %cst_103 : f32 to vector<8x96xf32>
    %411 = arith.addf %410, %409 : vector<8x96xf32>
    %412 = arith.divf %410, %411 : vector<8x96xf32>
    %413 = vector.extract_strided_slice %406 {offsets = [0, 96], sizes = [8, 32], strides = [1, 1]} : vector<8x128xf32> to vector<8x32xf32>
    %414 = math.tanh %413 : vector<8x32xf32>
    %415 = vector.extract_strided_slice %412 {offsets = [0, 0], sizes = [8, 32], strides = [1, 1]} : vector<8x96xf32> to vector<8x32xf32>
    %416 = vector.extract_strided_slice %412 {offsets = [0, 32], sizes = [8, 32], strides = [1, 1]} : vector<8x96xf32> to vector<8x32xf32>
    %417 = vector.extract_strided_slice %412 {offsets = [0, 64], sizes = [8, 32], strides = [1, 1]} : vector<8x96xf32> to vector<8x32xf32>
    %418 = arith.mulf %416, %370 : vector<8x32xf32>
    %419 = arith.mulf %415, %414 : vector<8x32xf32>
    %420 = arith.addf %418, %419 : vector<8x32xf32>
    %421 = math.tanh %420 : vector<8x32xf32>
    %422 = arith.mulf %417, %421 : vector<8x32xf32>
    %c8_i32_104 = arith.constant 8 : i32
    %423 = arith.muli %arg0, %c8_i32_104 : i32
    %424 = arith.addi %423, %c7_i32 : i32
    %c8_i32_105 = arith.constant 8 : i32
    %425 = arith.cmpi slt, %424, %c8_i32_105 : i32
    %426 = arith.extui %425 : i1 to i32
    %427 = arith.sitofp %426 : i32 to f32
    %428 = vector.broadcast %427 : f32 to vector<8x32xf32>
    %429 = arith.mulf %422, %428 : vector<8x32xf32>
    %430 = arith.addf %380, %429 : vector<8x32xf32>
    %c8_i32_106 = arith.constant 8 : i32
    %c0_107 = arith.constant 0 : index
    %c0_108 = arith.constant 0 : index
    %c0_109 = arith.constant 0 : index
    %431 = vector.load %arg16[%c0_107, %c0_108, %c0_109] : memref<2x8x32xf32, #tpu.memory_space<vmem>>, vector<1x8x32xf32>
    %432 = vector.shape_cast %431 : vector<1x8x32xf32> to vector<8x32xf32>
    %433 = vector.shape_cast %402 : vector<8x32xf32> to vector<1x8x32xf32>
    tpu.vector_store %arg16[%c0_107, %c0_108, %c0_109], %433 {strides = array<i32>} : memref<2x8x32xf32, #tpu.memory_space<vmem>>, vector<1x8x32xf32>,
    %c0_110 = arith.constant 0 : index
    %c0_111 = arith.constant 0 : index
    %c0_112 = arith.constant 0 : index
    %434 = vector.load %arg17[%c0_110, %c0_111, %c0_112] : memref<2x8x32xf32, #tpu.memory_space<vmem>>, vector<1x8x32xf32>
    %435 = vector.shape_cast %434 : vector<1x8x32xf32> to vector<8x32xf32>
    %436 = vector.shape_cast %400 : vector<8x32xf32> to vector<1x8x32xf32>
    tpu.vector_store %arg17[%c0_110, %c0_111, %c0_112], %436 {strides = array<i32>} : memref<2x8x32xf32, #tpu.memory_space<vmem>>, vector<1x8x32xf32>,
    %c1_113 = arith.constant 1 : index
    %c0_114 = arith.constant 0 : index
    %c0_115 = arith.constant 0 : index
    %437 = vector.load %arg16[%c1_113, %c0_114, %c0_115] : memref<2x8x32xf32, #tpu.memory_space<vmem>>, vector<1x8x32xf32>
    %438 = vector.shape_cast %437 : vector<1x8x32xf32> to vector<8x32xf32>
    %439 = vector.shape_cast %422 : vector<8x32xf32> to vector<1x8x32xf32>
    tpu.vector_store %arg16[%c1_113, %c0_114, %c0_115], %439 {strides = array<i32>} : memref<2x8x32xf32, #tpu.memory_space<vmem>>, vector<1x8x32xf32>,
    %c1_116 = arith.constant 1 : index
    %c0_117 = arith.constant 0 : index
    %c0_118 = arith.constant 0 : index
    %440 = vector.load %arg17[%c1_116, %c0_117, %c0_118] : memref<2x8x32xf32, #tpu.memory_space<vmem>>, vector<1x8x32xf32>
    %441 = vector.shape_cast %440 : vector<1x8x32xf32> to vector<8x32xf32>
    %442 = vector.shape_cast %420 : vector<8x32xf32> to vector<1x8x32xf32>
    tpu.vector_store %arg17[%c1_116, %c0_117, %c0_118], %442 {strides = array<i32>} : memref<2x8x32xf32, #tpu.memory_space<vmem>>, vector<1x8x32xf32>,
    %c0_119 = arith.constant 0 : index
    %c0_120 = arith.constant 0 : index
    %443 = vector.load %arg18[%c0_119, %c0_120] : memref<8x32xf32, #tpu.memory_space<vmem>>, vector<8x32xf32>
    tpu.vector_store %arg18[%c0_119, %c0_120], %430 {strides = array<i32>} : memref<8x32xf32, #tpu.memory_space<vmem>>, vector<8x32xf32>,
    %c0_i32_121 = arith.constant 0 : i32
    %444 = arith.cmpi eq, %arg0, %c0_i32_121 : i32
    %445 = arith.extui %444 : i1 to i32
    %c0_i32_122 = arith.constant 0 : i32
    %446 = arith.cmpi ne, %445, %c0_i32_122 : i32
    scf.if %446 {
      %c4_i32_123 = arith.constant 4 : i32
      %447 = tpu.memref_slice %arg20[%c4_i32_123] : memref<5x!tpu.dma_semaphore, #tpu.memory_space<semaphore_mem>> -> memref<1x!tpu.dma_semaphore, #tpu.memory_space<semaphore_mem>>
      %448 = tpu.memref_squeeze %447 : memref<1x!tpu.dma_semaphore, #tpu.memory_space<semaphore_mem>> -> memref<!tpu.dma_semaphore, #tpu.memory_space<semaphore_mem>>
      tpu.wait_dma2 semaphore(%448 : memref<!tpu.dma_semaphore, #tpu.memory_space<semaphore_mem>>) src(%arg8 : memref<32x4xf32, #tpu.memory_space<any>>) dst(%arg15 : memref<32x4xf32, #tpu.memory_space<vmem>>)
      %c0_124 = arith.constant 0 : index
      %c0_125 = arith.constant 0 : index
      %449 = vector.load %arg15[%c0_124, %c0_125] : memref<32x4xf32, #tpu.memory_space<vmem>>, vector<32x4xf32>
      %cst_126 = arith.constant dense<0.000000e+00> : vector<8x4xf32>
      %450 = tpu.matmul %430, %449, %cst_126 {dimension_numbers = #tpu.dot_dimension_numbers<[1], [0], [0], [1], [0, 0, 1, 1], [], []>} : vector<8x32xf32>, vector<32x4xf32>, vector<8x4xf32> -> vector<8x4xf32>
      %cst_127 = arith.constant 1.250000e-01 : f32
      %451 = vector.broadcast %cst_127 : f32 to vector<8x4xf32>
      %452 = arith.mulf %450, %451 : vector<8x4xf32>
      %c0_128 = arith.constant 0 : index
      %c0_129 = arith.constant 0 : index
      %453 = vector.load %arg9[%c0_128, %c0_129] : memref<1x4xf32, #tpu.memory_space<vmem>>, vector<1x4xf32>
      %454 = vector.broadcast %453 : vector<1x4xf32> to vector<8x4xf32>
      %455 = arith.addf %452, %454 : vector<8x4xf32>
      %c0_130 = arith.constant 0 : index
      %c0_131 = arith.constant 0 : index
      %456 = vector.load %arg10[%c0_130, %c0_131] : memref<8x4xf32, #tpu.memory_space<vmem>>, vector<8x4xf32>
      tpu.vector_store %arg10[%c0_130, %c0_131], %455 {strides = array<i32>} : memref<8x4xf32, #tpu.memory_space<vmem>>, vector<8x4xf32>,
    } else {
    }
    return
  }
  func.func @transform_0(%arg0: i32) -> (i32, i32) {
    %c0_i32 = arith.constant 0 : i32
    %c0_i32_0 = arith.constant 0 : i32
    return %arg0, %c0_i32 : i32, i32
  }
  func.func @transform_3(%arg0: i32) -> (i32, i32) {
    %c0_i32 = arith.constant 0 : i32
    %c0_i32_0 = arith.constant 0 : i32
    %c0_i32_1 = arith.constant 0 : i32
    return %c0_i32, %c0_i32_0 : i32, i32
  }
  func.func @transform_6(%arg0: i32) -> (i32, i32, i32) {
    %c0_i32 = arith.constant 0 : i32
    %c0_i32_0 = arith.constant 0 : i32
    %c0_i32_1 = arith.constant 0 : i32
    %c0_i32_2 = arith.constant 0 : i32
    return %c0_i32, %c0_i32_0, %c0_i32_1 : i32, i32, i32
  }
  func.func @transform_8(%arg0: i32) -> (i32, i32) {
    %c0_i32 = arith.constant 0 : i32
    %c0_i32_0 = arith.constant 0 : i32
    %c0_i32_1 = arith.constant 0 : i32
    return %c0_i32, %c0_i32_0 : i32, i32
  }
  func.func @transform_9(%arg0: i32) -> (i32, i32) {
    %c0_i32 = arith.constant 0 : i32
    %c0_i32_0 = arith.constant 0 : i32
    %c0_i32_1 = arith.constant 0 : i32
    return %c0_i32, %c0_i32_0 : i32, i32
  }
}

</mosaic_0001>

<llo_original>
// kernel: tpu_custom_call.1
$region0: #{tpu_custom_call.1}
  #allocation0 [shape = 'u32[]', space=smem, size = 0x4, offset = 0x4, fixed_abs, tag = 'smem constant byte address 0x4 - core index']
  #allocation1 [shape = 'u32[144,128]{1,0:T(1,128)}', space=vmem, size = 0x12000, scoped, tag = 'internal scratch']
  #allocation2 [shape = 'f32[8,128]{1,0:T(8,128)}', space=vmem, size = 0x1000, scoped, tag = 'scratch operand']
  #allocation3 [shape = 'f32[32,128]{1,0:T(8,128)}', space=vmem, size = 0x4000, scoped, tag = 'scratch operand']
  #allocation4 [shape = 'f32[1,32,128]{2,1,0:T(8,128)}', space=vmem, size = 0x4000, scoped, tag = 'scratch operand']
  #allocation5 [shape = 'f32[1,32,128]{2,1,0:T(8,128)}', space=vmem, size = 0x4000, scoped, tag = 'scratch operand']
  #allocation6 [shape = 'f32[32,4]{1,0:T(8,128)}', space=vmem, size = 0x4000, scoped, tag = 'scratch operand']
  #allocation7 [shape = 'f32[2,8,32]{2,1,0:T(8,128)}', space=vmem, size = 0x2000, scoped, tag = 'scratch operand']
  #allocation8 [shape = 'f32[2,8,32]{2,1,0:T(8,128)}', space=vmem, size = 0x2000, scoped, tag = 'scratch operand']
  #allocation9 [shape = 'f32[8,32]{1,0:T(8,128)}', space=vmem, size = 0x1000, scoped, tag = 'scratch operand']
  #allocation10 [shape = 'f32[64,128]{1,0:T(8,128)}', space=vmem, size = 0x8000, scoped, tag = 'scratch operand']
  #allocation11 [shape = 's32[5]{0}', space=sflag, size = 0x14, scoped, tag = 'scratch operand']
  #allocation12 [shape = 's32[]', space=sflag, size = 0x4, offset = 0, fixed_abs, tag = 'sflag constant byte address 0x0 - dummy sync flag']
  #allocation13 [shape = 's32[]', space=sflag, size = 0x4, offset = 0, fixed_abs, tag = 'sflag constant byte address 0x0 - dummy sync flag']
  #allocation14 [shape = 's32[]', space=sflag, size = 0x4, offset = 0, fixed_abs, tag = 'sflag constant byte address 0x0 - dummy sync flag']
  #allocation15 [shape = 's32[]', space=sflag, size = 0x4, offset = 0, fixed_abs, tag = 'sflag constant byte address 0x0 - dummy sync flag']
  #allocation16 [shape = 's32[]', space=sflag, size = 0x4, offset = 0, fixed_abs, tag = 'sflag constant byte address 0x0 - dummy sync flag']
  %s0 = inlined_call_operand.vmem [shape: f32[64,8], index: 0, kind: input, shape index: {}]
  %s1 = inlined_call_operand.vmem [shape: f32[8,128], index: 1, kind: input, shape index: {}]
  %s2 = inlined_call_operand.vmem [shape: f32[32,128], index: 2, kind: input, shape index: {}]
  %s3 = inlined_call_operand.vmem [shape: f32[1,128], index: 3, kind: input, shape index: {}]
  %s4 = inlined_call_operand.vmem [shape: f32[1,32,128], index: 4, kind: input, shape index: {}]
  %s5 = inlined_call_operand.vmem [shape: f32[1,32,128], index: 5, kind: input, shape index: {}]
  %s6 = inlined_call_operand.vmem [shape: f32[1,1,128], index: 6, kind: input, shape index: {}]
  %s7 = inlined_call_operand.vmem [shape: f32[32,4], index: 7, kind: input, shape index: {}]
  %s8 = inlined_call_operand.vmem [shape: f32[1,4], index: 8, kind: input, shape index: {}]
  %s9 = inlined_call_operand.vmem [shape: f32[8,4], index: 9, kind: output, shape index: {}]
  %s10 = sld [smem:[#allocation0]]
  $region208: #{tpu_custom_call.1} parent=0
    _
  %s12 = ssub.s32 1, %s10
  %s13 = scalar_select 0, %s12, %s10
  // Predicated region
  $region2: #{tpu_custom_call.1} parent=0 // pred_check
    _
  $region3: #{tpu_custom_call.1} parent=0 // pred_check_branch
    %15 = sbr.rel (0) target = $region5
  $region4: #{tpu_custom_call.1} parent=0 // pred_region
    _
  $region5: #{tpu_custom_call.1} parent=0 // pred_fallthru
    _
  // Predicated region
  $region6: #{tpu_custom_call.1} parent=0 // pred_check
    _
  $region7: #{tpu_custom_call.1} parent=0 // pred_check_branch
    %17 = sbr.rel (0) target = $region9
  $region8: #{tpu_custom_call.1} parent=0 // pred_region
    _
  $region9: #{tpu_custom_call.1} parent=0 // pred_fallthru
    _
  // Predicated region
  $region10: #{tpu_custom_call.1} parent=0 // pred_check
    _
  $region11: #{tpu_custom_call.1} parent=0 // pred_check_branch
    %19 = sbr.rel (0) target = $region13
  $region12: #{tpu_custom_call.1} parent=0 // pred_region
    _
  $region13: #{tpu_custom_call.1} parent=0 // pred_fallthru
    _
  // Predicated region
  $region14: #{tpu_custom_call.1} parent=0 // pred_check
    _
  $region15: #{tpu_custom_call.1} parent=0 // pred_check_branch
    %21 = sbr.rel (0) target = $region17
  $region16: #{tpu_custom_call.1} parent=0 // pred_region
    _
  $region17: #{tpu_custom_call.1} parent=0 // pred_fallthru
    _
  %p22 = scmp.eq.s32.totalorder 0, 0
  // Predicated region
  $region18: #{tpu_custom_call.1} parent=0 // pred_check
    %p23 = pneg %p22
  $region19: #{tpu_custom_call.1} parent=0 // pred_check_branch
    %25 = sbr.rel (%p23) target = $region21
  $region20: #{tpu_custom_call.1} parent=0 // pred_region
    %p27 = scmp.lt.u32.totalorder 8, 8
    %p28 = pneg %p27
    // Predicated region
    $region22: #{tpu_custom_call.1} parent=20 // pred_check
      _
    $region23: #{tpu_custom_call.1} parent=20 // pred_check_branch
      %30 = sbr.rel (%p27) target = $region25
    $region24: #{tpu_custom_call.1} parent=20 // pred_region
      %s46 = sand.u32 8, 7
      %p47 = scmp.eq.s32.totalorder %s46, 0
      // Predicated region
      $region37: #{tpu_custom_call.1} parent=24 // pred_check
        %p48 = pneg %p47
      $region38: #{tpu_custom_call.1} parent=24 // pred_check_branch
        %50 = sbr.rel (%p48) target = $region40
      $region39: #{tpu_custom_call.1} parent=24 // pred_region
        loop: start=0, step=1, limit=1
        $region41: #{tpu_custom_call.1} parent=39 // loop_pre_header
          _
        $region42: #{tpu_custom_call.1} parent=39 // loop_header
          %s52 = sphi 0, %s56
          %p53 = scmp.ge.s32.totalorder %s52, 1
          %s57 = sphi %s1, %s1
          %s58 = sphi [#allocation2], [#allocation2]
        $region43: #{tpu_custom_call.1} parent=39 // loop_header_branch
          %55 = sbr.rel (%p53) target = $region47
        $region44: #{tpu_custom_call.1} parent=39 // loop_body
          %v59 = vld [vmem:[%s57] sm:$0xff]
          %60 = vst [vmem:[%s58] sm:$0xff] %v59
        $region45: #{tpu_custom_call.1} parent=39 // loop_footer
          %s56 = sadd.s32 1, %s52
        $region46: #{tpu_custom_call.1} parent=39 // loop_footer_branch
          %51 = sbr.rel target = $region42
        $region47: #{tpu_custom_call.1} parent=39 // loop_exit
          _
      $region40: #{tpu_custom_call.1} parent=24 // pred_fallthru
        _
      %p61 = pneg %p47
      // Predicated region
      $region48: #{tpu_custom_call.1} parent=24 // pred_check
        _
      $region49: #{tpu_custom_call.1} parent=24 // pred_check_branch
        %63 = sbr.rel (%p47) target = $region51
      $region50: #{tpu_custom_call.1} parent=24 // pred_region
        %s64 = sand.u32 8, 7
      $region51: #{tpu_custom_call.1} parent=24 // pred_fallthru
        _
    $region25: #{tpu_custom_call.1} parent=20 // pred_fallthru
      _
    // Predicated region
    $region26: #{tpu_custom_call.1} parent=20 // pred_check
      %p31 = pneg %p27
    $region27: #{tpu_custom_call.1} parent=20 // pred_check_branch
      %33 = sbr.rel (%p31) target = $region29
    $region28: #{tpu_custom_call.1} parent=20 // pred_region
      %s34 = sshll.u32 1, 8
      %s35 = ssub.s32 %s34, 1
      loop: start=0, step=1, limit=1
      $region30: #{tpu_custom_call.1} parent=28 // loop_pre_header
        _
      $region31: #{tpu_custom_call.1} parent=28 // loop_header
        %s37 = sphi 0, %s41
        %p38 = scmp.ge.s32.totalorder %s37, 1
        %s42 = sphi %s1, %s1
        %s43 = sphi [#allocation2], [#allocation2]
      $region32: #{tpu_custom_call.1} parent=28 // loop_header_branch
        %40 = sbr.rel (%p38) target = $region36
      $region33: #{tpu_custom_call.1} parent=28 // loop_body
        %v44 = vld [vmem:[%s42] sm:%s35]
        %45 = vst [vmem:[%s43] sm:%s35] %v44
      $region34: #{tpu_custom_call.1} parent=28 // loop_footer
        %s41 = sadd.s32 1, %s37
      $region35: #{tpu_custom_call.1} parent=28 // loop_footer_branch
        %36 = sbr.rel target = $region31
      $region36: #{tpu_custom_call.1} parent=28 // loop_exit
        _
    $region29: #{tpu_custom_call.1} parent=20 // pred_fallthru
      _
    // Predicated region
    $region52: #{tpu_custom_call.1} parent=20 // pred_check
      _
    $region53: #{tpu_custom_call.1} parent=20 // pred_check_branch
      %67 = sbr.rel (0) target = $region55
    $region54: #{tpu_custom_call.1} parent=20 // pred_region
      %68 = vsyncadd [#allocation11], 128
    $region55: #{tpu_custom_call.1} parent=20 // pred_fallthru
      _
    %s69 = scalar_lea.sflag [#allocation11], 1
    %p71 = scmp.lt.u32.totalorder 32, 8
    %p72 = pneg %p71
    // Predicated region
    $region56: #{tpu_custom_call.1} parent=20 // pred_check
      _
    $region57: #{tpu_custom_call.1} parent=20 // pred_check_branch
      %74 = sbr.rel (%p71) target = $region59
    $region58: #{tpu_custom_call.1} parent=20 // pred_region
      %s90 = sand.u32 32, 7
      %p91 = scmp.eq.s32.totalorder %s90, 0
      // Predicated region
      $region71: #{tpu_custom_call.1} parent=58 // pred_check
        %p92 = pneg %p91
      $region72: #{tpu_custom_call.1} parent=58 // pred_check_branch
        %94 = sbr.rel (%p92) target = $region74
      $region73: #{tpu_custom_call.1} parent=58 // pred_region
        loop: start=0, step=1, limit=1
        $region75: #{tpu_custom_call.1} parent=73 // loop_pre_header
          _
        $region76: #{tpu_custom_call.1} parent=73 // loop_header
          %s96 = sphi 0, %s100
          %p97 = scmp.ge.s32.totalorder %s96, 1
          %s101 = sphi %s2, %s2
          %s102 = sphi [#allocation3], [#allocation3]
        $region77: #{tpu_custom_call.1} parent=73 // loop_header_branch
          %99 = sbr.rel (%p97) target = $region81
        $region78: #{tpu_custom_call.1} parent=73 // loop_body
          %v103 = vld [vmem:[%s101] sm:$0xff]
          %104 = vst [vmem:[%s102] sm:$0xff] %v103
          %v105 = vld [vmem:[%s101 + $0x8] sm:$0xff]
          %106 = vst [vmem:[%s102 + $0x8] sm:$0xff] %v105
          %v107 = vld [vmem:[%s101 + $0x10] sm:$0xff]
          %108 = vst [vmem:[%s102 + $0x10] sm:$0xff] %v107
          %v109 = vld [vmem:[%s101 + $0x18] sm:$0xff]
          %110 = vst [vmem:[%s102 + $0x18] sm:$0xff] %v109
        $region79: #{tpu_custom_call.1} parent=73 // loop_footer
          %s100 = sadd.s32 1, %s96
        $region80: #{tpu_custom_call.1} parent=73 // loop_footer_branch
          %95 = sbr.rel target = $region76
        $region81: #{tpu_custom_call.1} parent=73 // loop_exit
          _
      $region74: #{tpu_custom_call.1} parent=58 // pred_fallthru
        _
      %p111 = pneg %p91
      // Predicated region
      $region82: #{tpu_custom_call.1} parent=58 // pred_check
        _
      $region83: #{tpu_custom_call.1} parent=58 // pred_check_branch
        %113 = sbr.rel (%p91) target = $region85
      $region84: #{tpu_custom_call.1} parent=58 // pred_region
        %s114 = sand.u32 32, 7
      $region85: #{tpu_custom_call.1} parent=58 // pred_fallthru
        _
    $region59: #{tpu_custom_call.1} parent=20 // pred_fallthru
      _
    // Predicated region
    $region60: #{tpu_custom_call.1} parent=20 // pred_check
      %p75 = pneg %p71
    $region61: #{tpu_custom_call.1} parent=20 // pred_check_branch
      %77 = sbr.rel (%p75) target = $region63
    $region62: #{tpu_custom_call.1} parent=20 // pred_region
      %s78 = sshll.u32 1, 32
      %s79 = ssub.s32 %s78, 1
      loop: start=0, step=1, limit=1
      $region64: #{tpu_custom_call.1} parent=62 // loop_pre_header
        _
      $region65: #{tpu_custom_call.1} parent=62 // loop_header
        %s81 = sphi 0, %s85
        %p82 = scmp.ge.s32.totalorder %s81, 1
        %s86 = sphi %s2, %s2
        %s87 = sphi [#allocation3], [#allocation3]
      $region66: #{tpu_custom_call.1} parent=62 // loop_header_branch
        %84 = sbr.rel (%p82) target = $region70
      $region67: #{tpu_custom_call.1} parent=62 // loop_body
        %v88 = vld [vmem:[%s86] sm:%s79]
        %89 = vst [vmem:[%s87] sm:%s79] %v88
      $region68: #{tpu_custom_call.1} parent=62 // loop_footer
        %s85 = sadd.s32 1, %s81
      $region69: #{tpu_custom_call.1} parent=62 // loop_footer_branch
        %80 = sbr.rel target = $region65
      $region70: #{tpu_custom_call.1} parent=62 // loop_exit
        _
    $region63: #{tpu_custom_call.1} parent=20 // pred_fallthru
      _
    // Predicated region
    $region86: #{tpu_custom_call.1} parent=20 // pred_check
      _
    $region87: #{tpu_custom_call.1} parent=20 // pred_check_branch
      %117 = sbr.rel (0) target = $region89
    $region88: #{tpu_custom_call.1} parent=20 // pred_region
      %118 = vsyncadd %s69, 512
    $region89: #{tpu_custom_call.1} parent=20 // pred_fallthru
      _
    %s119 = scalar_lea.sflag [#allocation11], 2
    %p121 = scmp.lt.u32.totalorder 32, 8
    %p122 = pneg %p121
    // Predicated region
    $region90: #{tpu_custom_call.1} parent=20 // pred_check
      _
    $region91: #{tpu_custom_call.1} parent=20 // pred_check_branch
      %124 = sbr.rel (%p121) target = $region93
    $region92: #{tpu_custom_call.1} parent=20 // pred_region
      %s140 = sand.u32 32, 7
      %p141 = scmp.eq.s32.totalorder %s140, 0
      // Predicated region
      $region105: #{tpu_custom_call.1} parent=92 // pred_check
        %p142 = pneg %p141
      $region106: #{tpu_custom_call.1} parent=92 // pred_check_branch
        %144 = sbr.rel (%p142) target = $region108
      $region107: #{tpu_custom_call.1} parent=92 // pred_region
        loop: start=0, step=1, limit=1
        $region109: #{tpu_custom_call.1} parent=107 // loop_pre_header
          _
        $region110: #{tpu_custom_call.1} parent=107 // loop_header
          %s146 = sphi 0, %s150
          %p147 = scmp.ge.s32.totalorder %s146, 1
          %s151 = sphi %s4, %s4
          %s152 = sphi [#allocation4], [#allocation4]
        $region111: #{tpu_custom_call.1} parent=107 // loop_header_branch
          %149 = sbr.rel (%p147) target = $region115
        $region112: #{tpu_custom_call.1} parent=107 // loop_body
          %v153 = vld [vmem:[%s151] sm:$0xff]
          %154 = vst [vmem:[%s152] sm:$0xff] %v153
          %v155 = vld [vmem:[%s151 + $0x8] sm:$0xff]
          %156 = vst [vmem:[%s152 + $0x8] sm:$0xff] %v155
          %v157 = vld [vmem:[%s151 + $0x10] sm:$0xff]
          %158 = vst [vmem:[%s152 + $0x10] sm:$0xff] %v157
          %v159 = vld [vmem:[%s151 + $0x18] sm:$0xff]
          %160 = vst [vmem:[%s152 + $0x18] sm:$0xff] %v159
        $region113: #{tpu_custom_call.1} parent=107 // loop_footer
          %s150 = sadd.s32 1, %s146
        $region114: #{tpu_custom_call.1} parent=107 // loop_footer_branch
          %145 = sbr.rel target = $region110
        $region115: #{tpu_custom_call.1} parent=107 // loop_exit
          _
      $region108: #{tpu_custom_call.1} parent=92 // pred_fallthru
        _
      %p161 = pneg %p141
      // Predicated region
      $region116: #{tpu_custom_call.1} parent=92 // pred_check
        _
      $region117: #{tpu_custom_call.1} parent=92 // pred_check_branch
        %163 = sbr.rel (%p141) target = $region119
      $region118: #{tpu_custom_call.1} parent=92 // pred_region
        %s164 = sand.u32 32, 7
      $region119: #{tpu_custom_call.1} parent=92 // pred_fallthru
        _
    $region93: #{tpu_custom_call.1} parent=20 // pred_fallthru
      _
    // Predicated region
    $region94: #{tpu_custom_call.1} parent=20 // pred_check
      %p125 = pneg %p121
    $region95: #{tpu_custom_call.1} parent=20 // pred_check_branch
      %127 = sbr.rel (%p125) target = $region97
    $region96: #{tpu_custom_call.1} parent=20 // pred_region
      %s128 = sshll.u32 1, 32
      %s129 = ssub.s32 %s128, 1
      loop: start=0, step=1, limit=1
      $region98: #{tpu_custom_call.1} parent=96 // loop_pre_header
        _
      $region99: #{tpu_custom_call.1} parent=96 // loop_header
        %s131 = sphi 0, %s135
        %p132 = scmp.ge.s32.totalorder %s131, 1
        %s136 = sphi %s4, %s4
        %s137 = sphi [#allocation4], [#allocation4]
      $region100: #{tpu_custom_call.1} parent=96 // loop_header_branch
        %134 = sbr.rel (%p132) target = $region104
      $region101: #{tpu_custom_call.1} parent=96 // loop_body
        %v138 = vld [vmem:[%s136] sm:%s129]
        %139 = vst [vmem:[%s137] sm:%s129] %v138
      $region102: #{tpu_custom_call.1} parent=96 // loop_footer
        %s135 = sadd.s32 1, %s131
      $region103: #{tpu_custom_call.1} parent=96 // loop_footer_branch
        %130 = sbr.rel target = $region99
      $region104: #{tpu_custom_call.1} parent=96 // loop_exit
        _
    $region97: #{tpu_custom_call.1} parent=20 // pred_fallthru
      _
    // Predicated region
    $region120: #{tpu_custom_call.1} parent=20 // pred_check
      _
    $region121: #{tpu_custom_call.1} parent=20 // pred_check_branch
      %167 = sbr.rel (0) target = $region123
    $region122: #{tpu_custom_call.1} parent=20 // pred_region
      %168 = vsyncadd %s119, 512
    $region123: #{tpu_custom_call.1} parent=20 // pred_fallthru
      _
    %s169 = scalar_lea.sflag [#allocation11], 3
    %p171 = scmp.lt.u32.totalorder 32, 8
    %p172 = pneg %p171
    // Predicated region
    $region124: #{tpu_custom_call.1} parent=20 // pred_check
      _
    $region125: #{tpu_custom_call.1} parent=20 // pred_check_branch
      %174 = sbr.rel (%p171) target = $region127
    $region126: #{tpu_custom_call.1} parent=20 // pred_region
      %s190 = sand.u32 32, 7
      %p191 = scmp.eq.s32.totalorder %s190, 0
      // Predicated region
      $region139: #{tpu_custom_call.1} parent=126 // pred_check
        %p192 = pneg %p191
      $region140: #{tpu_custom_call.1} parent=126 // pred_check_branch
        %194 = sbr.rel (%p192) target = $region142
      $region141: #{tpu_custom_call.1} parent=126 // pred_region
        loop: start=0, step=1, limit=1
        $region143: #{tpu_custom_call.1} parent=141 // loop_pre_header
          _
        $region144: #{tpu_custom_call.1} parent=141 // loop_header
          %s196 = sphi 0, %s200
          %p197 = scmp.ge.s32.totalorder %s196, 1
          %s201 = sphi %s5, %s5
          %s202 = sphi [#allocation5], [#allocation5]
        $region145: #{tpu_custom_call.1} parent=141 // loop_header_branch
          %199 = sbr.rel (%p197) target = $region149
        $region146: #{tpu_custom_call.1} parent=141 // loop_body
          %v203 = vld [vmem:[%s201] sm:$0xff]
          %204 = vst [vmem:[%s202] sm:$0xff] %v203
          %v205 = vld [vmem:[%s201 + $0x8] sm:$0xff]
          %206 = vst [vmem:[%s202 + $0x8] sm:$0xff] %v205
          %v207 = vld [vmem:[%s201 + $0x10] sm:$0xff]
          %208 = vst [vmem:[%s202 + $0x10] sm:$0xff] %v207
          %v209 = vld [vmem:[%s201 + $0x18] sm:$0xff]
          %210 = vst [vmem:[%s202 + $0x18] sm:$0xff] %v209
        $region147: #{tpu_custom_call.1} parent=141 // loop_footer
          %s200 = sadd.s32 1, %s196
        $region148: #{tpu_custom_call.1} parent=141 // loop_footer_branch
          %195 = sbr.rel target = $region144
        $region149: #{tpu_custom_call.1} parent=141 // loop_exit
          _
      $region142: #{tpu_custom_call.1} parent=126 // pred_fallthru
        _
      %p211 = pneg %p191
      // Predicated region
      $region150: #{tpu_custom_call.1} parent=126 // pred_check
        _
      $region151: #{tpu_custom_call.1} parent=126 // pred_check_branch
        %213 = sbr.rel (%p191) target = $region153
      $region152: #{tpu_custom_call.1} parent=126 // pred_region
        %s214 = sand.u32 32, 7
      $region153: #{tpu_custom_call.1} parent=126 // pred_fallthru
        _
    $region127: #{tpu_custom_call.1} parent=20 // pred_fallthru
      _
    // Predicated region
    $region128: #{tpu_custom_call.1} parent=20 // pred_check
      %p175 = pneg %p171
    $region129: #{tpu_custom_call.1} parent=20 // pred_check_branch
      %177 = sbr.rel (%p175) target = $region131
    $region130: #{tpu_custom_call.1} parent=20 // pred_region
      %s178 = sshll.u32 1, 32
      %s179 = ssub.s32 %s178, 1
      loop: start=0, step=1, limit=1
      $region132: #{tpu_custom_call.1} parent=130 // loop_pre_header
        _
      $region133: #{tpu_custom_call.1} parent=130 // loop_header
        %s181 = sphi 0, %s185
        %p182 = scmp.ge.s32.totalorder %s181, 1
        %s186 = sphi %s5, %s5
        %s187 = sphi [#allocation5], [#allocation5]
      $region134: #{tpu_custom_call.1} parent=130 // loop_header_branch
        %184 = sbr.rel (%p182) target = $region138
      $region135: #{tpu_custom_call.1} parent=130 // loop_body
        %v188 = vld [vmem:[%s186] sm:%s179]
        %189 = vst [vmem:[%s187] sm:%s179] %v188
      $region136: #{tpu_custom_call.1} parent=130 // loop_footer
        %s185 = sadd.s32 1, %s181
      $region137: #{tpu_custom_call.1} parent=130 // loop_footer_branch
        %180 = sbr.rel target = $region133
      $region138: #{tpu_custom_call.1} parent=130 // loop_exit
        _
    $region131: #{tpu_custom_call.1} parent=20 // pred_fallthru
      _
    // Predicated region
    $region154: #{tpu_custom_call.1} parent=20 // pred_check
      _
    $region155: #{tpu_custom_call.1} parent=20 // pred_check_branch
      %217 = sbr.rel (0) target = $region157
    $region156: #{tpu_custom_call.1} parent=20 // pred_region
      %218 = vsyncadd %s169, 512
    $region157: #{tpu_custom_call.1} parent=20 // pred_fallthru
      _
    %s219 = scalar_lea.sflag [#allocation11], 4
    %p221 = scmp.lt.u32.totalorder 32, 8
    %p222 = pneg %p221
    // Predicated region
    $region158: #{tpu_custom_call.1} parent=20 // pred_check
      _
    $region159: #{tpu_custom_call.1} parent=20 // pred_check_branch
      %224 = sbr.rel (%p221) target = $region161
    $region160: #{tpu_custom_call.1} parent=20 // pred_region
      %s240 = sand.u32 32, 7
      %p241 = scmp.eq.s32.totalorder %s240, 0
      // Predicated region
      $region173: #{tpu_custom_call.1} parent=160 // pred_check
        %p242 = pneg %p241
      $region174: #{tpu_custom_call.1} parent=160 // pred_check_branch
        %244 = sbr.rel (%p242) target = $region176
      $region175: #{tpu_custom_call.1} parent=160 // pred_region
        loop: start=0, step=1, limit=1
        $region177: #{tpu_custom_call.1} parent=175 // loop_pre_header
          _
        $region178: #{tpu_custom_call.1} parent=175 // loop_header
          %s246 = sphi 0, %s250
          %p247 = scmp.ge.s32.totalorder %s246, 1
          %s251 = sphi %s7, %s7
          %s252 = sphi [#allocation6], [#allocation6]
        $region179: #{tpu_custom_call.1} parent=175 // loop_header_branch
          %249 = sbr.rel (%p247) target = $region183
        $region180: #{tpu_custom_call.1} parent=175 // loop_body
          %v253 = vld [vmem:[%s251] sm:$0xff]
          %254 = vst [vmem:[%s252] sm:$0xff] %v253
          %v255 = vld [vmem:[%s251 + $0x8] sm:$0xff]
          %256 = vst [vmem:[%s252 + $0x8] sm:$0xff] %v255
          %v257 = vld [vmem:[%s251 + $0x10] sm:$0xff]
          %258 = vst [vmem:[%s252 + $0x10] sm:$0xff] %v257
          %v259 = vld [vmem:[%s251 + $0x18] sm:$0xff]
          %260 = vst [vmem:[%s252 + $0x18] sm:$0xff] %v259
        $region181: #{tpu_custom_call.1} parent=175 // loop_footer
          %s250 = sadd.s32 1, %s246
        $region182: #{tpu_custom_call.1} parent=175 // loop_footer_branch
          %245 = sbr.rel target = $region178
        $region183: #{tpu_custom_call.1} parent=175 // loop_exit
          _
      $region176: #{tpu_custom_call.1} parent=160 // pred_fallthru
        _
      %p261 = pneg %p241
      // Predicated region
      $region184: #{tpu_custom_call.1} parent=160 // pred_check
        _
      $region185: #{tpu_custom_call.1} parent=160 // pred_check_branch
        %263 = sbr.rel (%p241) target = $region187
      $region186: #{tpu_custom_call.1} parent=160 // pred_region
        %s264 = sand.u32 32, 7
      $region187: #{tpu_custom_call.1} parent=160 // pred_fallthru
        _
    $region161: #{tpu_custom_call.1} parent=20 // pred_fallthru
      _
    // Predicated region
    $region162: #{tpu_custom_call.1} parent=20 // pred_check
      %p225 = pneg %p221
    $region163: #{tpu_custom_call.1} parent=20 // pred_check_branch
      %227 = sbr.rel (%p225) target = $region165
    $region164: #{tpu_custom_call.1} parent=20 // pred_region
      %s228 = sshll.u32 1, 32
      %s229 = ssub.s32 %s228, 1
      loop: start=0, step=1, limit=1
      $region166: #{tpu_custom_call.1} parent=164 // loop_pre_header
        _
      $region167: #{tpu_custom_call.1} parent=164 // loop_header
        %s231 = sphi 0, %s235
        %p232 = scmp.ge.s32.totalorder %s231, 1
        %s236 = sphi %s7, %s7
        %s237 = sphi [#allocation6], [#allocation6]
      $region168: #{tpu_custom_call.1} parent=164 // loop_header_branch
        %234 = sbr.rel (%p232) target = $region172
      $region169: #{tpu_custom_call.1} parent=164 // loop_body
        %v238 = vld [vmem:[%s236] sm:%s229]
        %239 = vst [vmem:[%s237] sm:%s229] %v238
      $region170: #{tpu_custom_call.1} parent=164 // loop_footer
        %s235 = sadd.s32 1, %s231
      $region171: #{tpu_custom_call.1} parent=164 // loop_footer_branch
        %230 = sbr.rel target = $region167
      $region172: #{tpu_custom_call.1} parent=164 // loop_exit
        _
    $region165: #{tpu_custom_call.1} parent=20 // pred_fallthru
      _
    // Predicated region
    $region188: #{tpu_custom_call.1} parent=20 // pred_check
      _
    $region189: #{tpu_custom_call.1} parent=20 // pred_check_branch
      %267 = sbr.rel (0) target = $region191
    $region190: #{tpu_custom_call.1} parent=20 // pred_region
      %268 = vsyncadd %s219, 512
    $region191: #{tpu_custom_call.1} parent=20 // pred_fallthru
      _
    %vm269 = vcmask 261120
    %270 = vst.msk [vmem:[#allocation7] sm:$0xff] %vm269, 0.0
    %271 = vst.msk [vmem:[#allocation7 + $0x8] sm:$0xff] %vm269, 0.0
    %272 = vst.msk [vmem:[#allocation8] sm:$0xff] %vm269, 0.0
    %273 = vst.msk [vmem:[#allocation8 + $0x8] sm:$0xff] %vm269, 0.0
    %274 = vst.msk [vmem:[#allocation9] sm:$0xff] %vm269, 0.0
    %s275 = smul.u32 8, 1
    %s276 = sshll.u32 %s275, 4
    %277 = dma.done [#allocation11], %s276
  $region21: #{tpu_custom_call.1} parent=0 // pred_fallthru
    _
  %v278 = vld [vmem:[%s0] sm:$0xff]
  %v279 = vld [vmem:[%s0 + $0x8] sm:$0xff]
  %v280 = vld [vmem:[%s0 + $0x10] sm:$0xff]
  %v281 = vld [vmem:[%s0 + $0x18] sm:$0xff]
  %v282 = vld [vmem:[%s0 + $0x20] sm:$0xff]
  %v283 = vld [vmem:[%s0 + $0x28] sm:$0xff]
  %v284 = vld [vmem:[%s0 + $0x30] sm:$0xff]
  %v285 = vld [vmem:[%s0 + $0x38] sm:$0xff]
  %v286 = vld [vmem:[#allocation2] sm:$0xff]
  %v287 = vld [vmem:[%s3] sm:$0x1]
  %v289 = vlaneseq
  %v290 = vshrl.u32 %v289, 7
  %v291 = vsub.s32 0, %v290
  %v292 = vrot.slane %v287, %v291
  %vm294 = vcmask 64512
  %v296 = vsel %vm294, %v278, 0
  %v299 = vsel %vm294, %v279, 0
  %v302 = vsel %vm294, %v280, 0
  %v305 = vsel %vm294, %v281, 0
  %v308 = vsel %vm294, %v282, 0
  %v311 = vsel %vm294, %v283, 0
  %v314 = vsel %vm294, %v284, 0
  %v317 = vsel %vm294, %v285, 0
  %319 = vmatprep.subr.mxu0 0.0
  %320 = vmatpush1.msra.mxu0 0.0
  %321 = vmatprep.subr.mxu0 0.0
  %322 = vmatpush1.msra.mxu0 0.0
  %323 = vmatprep.subr.mxu0 0.0
  %324 = vmatpush1.msra.mxu0 0.0
  %325 = vmatprep.subr.mxu0 0.0
  %326 = vmatpush1.msra.mxu0 0.0
  %327 = vmatprep.subr.mxu0 0.0
  %328 = vmatpush1.msra.mxu0 0.0
  %329 = vmatprep.subr.mxu0 0.0
  %330 = vmatpush1.msra.mxu0 0.0
  %331 = vmatprep.subr.mxu0 0.0
  %332 = vmatpush1.msra.mxu0 0.0
  %333 = vmatprep.subr.mxu0 0.0
  %334 = vmatpush1.msra.mxu0 0.0
  %335 = vmatprep.subr.mxu0 0.0
  %336 = vmatpush1.msra.mxu0 0.0
  %337 = vmatprep.subr.mxu0 0.0
  %338 = vmatpush1.msra.mxu0 0.0
  %339 = vmatprep.subr.mxu0 0.0
  %340 = vmatpush1.msra.mxu0 0.0
  %341 = vmatprep.subr.mxu0 0.0
  %342 = vmatpush1.msra.mxu0 0.0
  %343 = vmatprep.subr.mxu0 0.0
  %344 = vmatpush1.msra.mxu0 0.0
  %345 = vmatprep.subr.mxu0 0.0
  %346 = vmatpush1.msra.mxu0 0.0
  %347 = vmatprep.subr.mxu0 0.0
  %348 = vmatpush1.msra.mxu0 0.0
  %349 = vmatprep.subr.mxu0 0.0
  %350 = vmatpush1.msra.mxu0 %v286
  %351 = vmatprep.subr.mxu0 0.0
  %352 = vmatpush2.msra.mxu0 0.0
  %353 = vmatprep.subr.mxu0 0.0
  %354 = vmatpush2.msra.mxu0 0.0
  %355 = vmatprep.subr.mxu0 0.0
  %356 = vmatpush2.msra.mxu0 0.0
  %357 = vmatprep.subr.mxu0 0.0
  %358 = vmatpush2.msra.mxu0 0.0
  %359 = vmatprep.subr.mxu0 0.0
  %360 = vmatpush2.msra.mxu0 0.0
  %361 = vmatprep.subr.mxu0 0.0
  %362 = vmatpush2.msra.mxu0 0.0
  %363 = vmatprep.subr.mxu0 0.0
  %364 = vmatpush2.msra.mxu0 0.0
  %365 = vmatprep.subr.mxu0 0.0
  %366 = vmatpush2.msra.mxu0 0.0
  %367 = vmatprep.subr.mxu0 0.0
  %368 = vmatpush2.msra.mxu0 0.0
  %369 = vmatprep.subr.mxu0 0.0
  %370 = vmatpush2.msra.mxu0 0.0
  %371 = vmatprep.subr.mxu0 0.0
  %372 = vmatpush2.msra.mxu0 0.0
  %373 = vmatprep.subr.mxu0 0.0
  %374 = vmatpush2.msra.mxu0 0.0
  %375 = vmatprep.subr.mxu0 0.0
  %376 = vmatpush2.msra.mxu0 0.0
  %377 = vmatprep.subr.mxu0 0.0
  %378 = vmatpush2.msra.mxu0 0.0
  %379 = vmatprep.subr.mxu0 0.0
  %380 = vmatpush2.msra.mxu0 0.0
  %381 = vmatprep.subr.mxu0 0.0
  %382 = vmatpush2.msra.mxu0 0.0
  %383 = vmatprep.mubr.f32.mxu0 0.0
  %384 = vmatmul.mubr.f32.gmra.mxu0 %v296
  %v385 = vpop.f32.mrf.mxu0
  %v386 = vadd.f32 %v292, %v385
  %v387 = vpop.f32.mrf.mxu0
  %388 = vmatprep.mubr.f32.mxu0 0.0
  %389 = vmatmul.mubr.f32.gmra.mxu0 %v299
  %v390 = vpop.f32.mrf.mxu0
  %v391 = vadd.f32 %v292, %v390
  %v392 = vpop.f32.mrf.mxu0
  %393 = vmatprep.mubr.f32.mxu0 0.0
  %394 = vmatmul.mubr.f32.gmra.mxu0 %v302
  %v395 = vpop.f32.mrf.mxu0
  %v396 = vadd.f32 %v292, %v395
  %v397 = vpop.f32.mrf.mxu0
  %398 = vmatprep.mubr.f32.mxu0 0.0
  %399 = vmatmul.mubr.f32.gmra.mxu0 %v305
  %v400 = vpop.f32.mrf.mxu0
  %v401 = vadd.f32 %v292, %v400
  %v402 = vpop.f32.mrf.mxu0
  %403 = vmatprep.mubr.f32.mxu0 0.0
  %404 = vmatmul.mubr.f32.gmra.mxu0 %v308
  %v405 = vpop.f32.mrf.mxu0
  %v406 = vadd.f32 %v292, %v405
  %v407 = vpop.f32.mrf.mxu0
  %408 = vmatprep.mubr.f32.mxu0 0.0
  %409 = vmatmul.mubr.f32.gmra.mxu0 %v311
  %v410 = vpop.f32.mrf.mxu0
  %v411 = vadd.f32 %v292, %v410
  %v412 = vpop.f32.mrf.mxu0
  %413 = vmatprep.mubr.f32.mxu0 0.0
  %414 = vmatmul.mubr.f32.gmra.mxu0 %v314
  %v415 = vpop.f32.mrf.mxu0
  %v416 = vadd.f32 %v292, %v415
  %v417 = vpop.f32.mrf.mxu0
  %418 = vmatprep.mubr.f32.mxu0 0.0
  %419 = vmatmul.mubr.f32.gmra.mxu0 %v317
  %v420 = vpop.f32.mrf.mxu0
  %v421 = vadd.f32 %v292, %v420
  %v422 = vpop.f32.mrf.mxu0
  %423 = vdwg.mxu0
  %424 = vst [vmem:[#allocation10] sm:$0xff] %v386
  %425 = vst [vmem:[#allocation10 + $0x8] sm:$0xff] %v391
  %426 = vst [vmem:[#allocation10 + $0x10] sm:$0xff] %v396
  %427 = vst [vmem:[#allocation10 + $0x18] sm:$0xff] %v401
  %428 = vst [vmem:[#allocation10 + $0x20] sm:$0xff] %v406
  %429 = vst [vmem:[#allocation10 + $0x28] sm:$0xff] %v411
  %430 = vst [vmem:[#allocation10 + $0x30] sm:$0xff] %v416
  %431 = vst [vmem:[#allocation10 + $0x38] sm:$0xff] %v421
  // Predicated region
  $region192: #{tpu_custom_call.1} parent=0 // pred_check
    %p432 = pneg %p22
  $region193: #{tpu_custom_call.1} parent=0 // pred_check_branch
    %434 = sbr.rel (%p432) target = $region195
  $region194: #{tpu_custom_call.1} parent=0 // pred_region
    %s435 = scalar_lea.sflag [#allocation11], 1
    %s436 = smul.u32 32, 1
    %s437 = sshll.u32 %s436, 4
    %438 = dma.done %s435, %s437
    %s439 = scalar_lea.sflag [#allocation11], 2
    %s440 = smul.u32 1, 32
    %s441 = smul.u32 %s440, 1
    %s442 = sshll.u32 %s441, 4
    %443 = dma.done %s439, %s442
    %s444 = scalar_lea.sflag [#allocation11], 3
    %s445 = sshll.u32 %s441, 4
    %446 = dma.done %s444, %s445
  $region195: #{tpu_custom_call.1} parent=0 // pred_fallthru
    _
  %v447 = vld [vmem:[#allocation3] sm:$0xff]
  %v448 = vld [vmem:[#allocation3 + $0x8] sm:$0xff]
  %v449 = vld [vmem:[#allocation3 + $0x10] sm:$0xff]
  %v450 = vld [vmem:[#allocation3 + $0x18] sm:$0xff]
  %v451 = vld [vmem:[#allocation4] sm:$0xff]
  %v452 = vld [vmem:[#allocation4 + $0x8] sm:$0xff]
  %v453 = vld [vmem:[#allocation4 + $0x10] sm:$0xff]
  %v454 = vld [vmem:[#allocation4 + $0x18] sm:$0xff]
  %v455 = vld [vmem:[#allocation5] sm:$0xff]
  %v456 = vld [vmem:[#allocation5 + $0x8] sm:$0xff]
  %v457 = vld [vmem:[#allocation5 + $0x10] sm:$0xff]
  %v458 = vld [vmem:[#allocation5 + $0x18] sm:$0xff]
  %v459 = vld [vmem:[%s6] sm:$0x1]
  %v461 = vlaneseq
  %v462 = vshrl.u32 %v461, 7
  %v463 = vsub.s32 0, %v462
  %v464 = vrot.slane %v459, %v463
  %v466 = vld [vmem:[#allocation7] sm:$0xff]
  %s467 = scalar_lea.vmem [#allocation7], 8
  %v468 = vld [vmem:[%s467] sm:$0xff]
  %v469 = vld [vmem:[#allocation8] sm:$0xff]
  %s470 = scalar_lea.vmem [#allocation8], 8
  %v471 = vld [vmem:[%s470] sm:$0xff]
  %v472 = vld [vmem:[#allocation9] sm:$0xff]
  %v473 = vld [vmem:[#allocation10] sm:$0xff]
  %vm474 = vcmask 261120
  %v476 = vsel %vm474, %v466, 0
  %478 = vmatprep.subr.mxu0 0.0
  %479 = vmatpush1.msra.mxu0 0.0
  %480 = vmatprep.subr.mxu0 0.0
  %481 = vmatpush1.msra.mxu0 0.0
  %482 = vmatprep.subr.mxu0 0.0
  %483 = vmatpush1.msra.mxu0 0.0
  %484 = vmatprep.subr.mxu0 0.0
  %485 = vmatpush1.msra.mxu0 0.0
  %486 = vmatprep.subr.mxu0 0.0
  %487 = vmatpush1.msra.mxu0 0.0
  %488 = vmatprep.subr.mxu0 0.0
  %489 = vmatpush1.msra.mxu0 0.0
  %490 = vmatprep.subr.mxu0 0.0
  %491 = vmatpush1.msra.mxu0 0.0
  %492 = vmatprep.subr.mxu0 0.0
  %493 = vmatpush1.msra.mxu0 0.0
  %494 = vmatprep.subr.mxu0 0.0
  %495 = vmatpush1.msra.mxu0 0.0
  %496 = vmatprep.subr.mxu0 0.0
  %497 = vmatpush1.msra.mxu0 0.0
  %498 = vmatprep.subr.mxu0 0.0
  %499 = vmatpush1.msra.mxu0 0.0
  %500 = vmatprep.subr.mxu0 0.0
  %501 = vmatpush1.msra.mxu0 0.0
  %502 = vmatprep.subr.mxu0 0.0
  %503 = vmatpush1.msra.mxu0 %v450
  %504 = vmatprep.subr.mxu0 0.0
  %505 = vmatpush1.msra.mxu0 %v449
  %506 = vmatprep.subr.mxu0 0.0
  %507 = vmatpush1.msra.mxu0 %v448
  %508 = vmatprep.subr.mxu0 0.0
  %509 = vmatpush1.msra.mxu0 %v447
  %510 = vmatprep.subr.mxu0 0.0
  %511 = vmatpush2.msra.mxu0 0.0
  %512 = vmatprep.subr.mxu0 0.0
  %513 = vmatpush2.msra.mxu0 0.0
  %514 = vmatprep.subr.mxu0 0.0
  %515 = vmatpush2.msra.mxu0 0.0
  %516 = vmatprep.subr.mxu0 0.0
  %517 = vmatpush2.msra.mxu0 0.0
  %518 = vmatprep.subr.mxu0 0.0
  %519 = vmatpush2.msra.mxu0 0.0
  %520 = vmatprep.subr.mxu0 0.0
  %521 = vmatpush2.msra.mxu0 0.0
  %522 = vmatprep.subr.mxu0 0.0
  %523 = vmatpush2.msra.mxu0 0.0
  %524 = vmatprep.subr.mxu0 0.0
  %525 = vmatpush2.msra.mxu0 0.0
  %526 = vmatprep.subr.mxu0 0.0
  %527 = vmatpush2.msra.mxu0 0.0
  %528 = vmatprep.subr.mxu0 0.0
  %529 = vmatpush2.msra.mxu0 0.0
  %530 = vmatprep.subr.mxu0 0.0
  %531 = vmatpush2.msra.mxu0 0.0
  %532 = vmatprep.subr.mxu0 0.0
  %533 = vmatpush2.msra.mxu0 0.0
  %534 = vmatprep.subr.mxu0 0.0
  %535 = vmatpush2.msra.mxu0 0.0
  %536 = vmatprep.subr.mxu0 0.0
  %537 = vmatpush2.msra.mxu0 0.0
  %538 = vmatprep.subr.mxu0 0.0
  %539 = vmatpush2.msra.mxu0 0.0
  %540 = vmatprep.subr.mxu0 0.0
  %541 = vmatpush2.msra.mxu0 0.0
  %542 = vmatprep.mubr.f32.mxu0 0.0
  %543 = vmatmul.mubr.f32.gmra.mxu0 %v476
  %v544 = vpop.f32.mrf.mxu0
  %v545 = vadd.f32 0.0, %v544
  %v546 = vpop.f32.mrf.mxu0
  %547 = vdwg.mxu0
  %v548 = vadd.f32 %v473, %v545
  %v549 = vxor.u32 %v548, 2147483648
  %v550 = vmul.f32 %v549, 1.442695
  %v551 = vpow.pop %v550
  %v552 = vadd.f32 %v551, 1.0
  %v553 = vrcp.pop %v552
  %v554 = vmul.f32 1.0, %v553
  %v555 = vtanh.pop %v548
  %557 = vrot.lane.b32.xlu0 %v469, 32
  %v558 = vpop.permute.xlu0 %557
  %v560 = vmul.f32 %v554, %v558
  %562 = vrot.lane.b32.xlu0 %v555, 32
  %v563 = vpop.permute.xlu0 %562
  %v565 = vmul.f32 %v554, %v563
  %567 = vrot.lane.b32.xlu0 %v565, 32
  %v568 = vpop.permute.xlu0 %567
  %v570 = vadd.f32 %v560, %v568
  %v571 = vtanh.pop %v570
  %573 = vrot.lane.b32.xlu0 %v571, 32
  %v574 = vpop.permute.xlu0 %573
  %v576 = vmul.f32 %v554, %v574
  %v578 = vsel %vm474, %v468, 0
  %580 = vmatprep.subr.mxu0 0.0
  %581 = vmatpush1.msra.mxu0 0.0
  %582 = vmatprep.subr.mxu0 0.0
  %583 = vmatpush1.msra.mxu0 0.0
  %584 = vmatprep.subr.mxu0 0.0
  %585 = vmatpush1.msra.mxu0 0.0
  %586 = vmatprep.subr.mxu0 0.0
  %587 = vmatpush1.msra.mxu0 0.0
  %588 = vmatprep.subr.mxu0 0.0
  %589 = vmatpush1.msra.mxu0 0.0
  %590 = vmatprep.subr.mxu0 0.0
  %591 = vmatpush1.msra.mxu0 0.0
  %592 = vmatprep.subr.mxu0 0.0
  %593 = vmatpush1.msra.mxu0 0.0
  %594 = vmatprep.subr.mxu0 0.0
  %595 = vmatpush1.msra.mxu0 0.0
  %596 = vmatprep.subr.mxu0 0.0
  %597 = vmatpush1.msra.mxu0 0.0
  %598 = vmatprep.subr.mxu0 0.0
  %599 = vmatpush1.msra.mxu0 0.0
  %600 = vmatprep.subr.mxu0 0.0
  %601 = vmatpush1.msra.mxu0 0.0
  %602 = vmatprep.subr.mxu0 0.0
  %603 = vmatpush1.msra.mxu0 0.0
  %604 = vmatprep.subr.mxu0 0.0
  %605 = vmatpush1.msra.mxu0 %v458
  %606 = vmatprep.subr.mxu0 0.0
  %607 = vmatpush1.msra.mxu0 %v457
  %608 = vmatprep.subr.mxu0 0.0
  %609 = vmatpush1.msra.mxu0 %v456
  %610 = vmatprep.subr.mxu0 0.0
  %611 = vmatpush1.msra.mxu0 %v455
  %612 = vmatprep.subr.mxu0 0.0
  %613 = vmatpush2.msra.mxu0 0.0
  %614 = vmatprep.subr.mxu0 0.0
  %615 = vmatpush2.msra.mxu0 0.0
  %616 = vmatprep.subr.mxu0 0.0
  %617 = vmatpush2.msra.mxu0 0.0
  %618 = vmatprep.subr.mxu0 0.0
  %619 = vmatpush2.msra.mxu0 0.0
  %620 = vmatprep.subr.mxu0 0.0
  %621 = vmatpush2.msra.mxu0 0.0
  %622 = vmatprep.subr.mxu0 0.0
  %623 = vmatpush2.msra.mxu0 0.0
  %624 = vmatprep.subr.mxu0 0.0
  %625 = vmatpush2.msra.mxu0 0.0
  %626 = vmatprep.subr.mxu0 0.0
  %627 = vmatpush2.msra.mxu0 0.0
  %628 = vmatprep.subr.mxu0 0.0
  %629 = vmatpush2.msra.mxu0 0.0
  %630 = vmatprep.subr.mxu0 0.0
  %631 = vmatpush2.msra.mxu0 0.0
  %632 = vmatprep.subr.mxu0 0.0
  %633 = vmatpush2.msra.mxu0 0.0
  %634 = vmatprep.subr.mxu0 0.0
  %635 = vmatpush2.msra.mxu0 0.0
  %636 = vmatprep.subr.mxu0 0.0
  %637 = vmatpush2.msra.mxu0 0.0
  %638 = vmatprep.subr.mxu0 0.0
  %639 = vmatpush2.msra.mxu0 0.0
  %640 = vmatprep.subr.mxu0 0.0
  %641 = vmatpush2.msra.mxu0 0.0
  %642 = vmatprep.subr.mxu0 0.0
  %643 = vmatpush2.msra.mxu0 0.0
  %644 = vmatprep.mubr.f32.mxu0 0.0
  %645 = vmatmul.mubr.f32.gmra.mxu0 %v578
  %v646 = vpop.f32.mrf.mxu0
  %v647 = vadd.f32 0.0, %v646
  %v648 = vpop.f32.mrf.mxu0
  %649 = vdwg.mxu0
  %651 = vrot.lane.b32.xlu0 %v576, 64
  %v652 = vpop.permute.xlu0 %651
  %v653 = vsel %vm474, %v652, 0
  %655 = vmatprep.subr.mxu0 0.0
  %656 = vmatpush1.msra.mxu0 0.0
  %657 = vmatprep.subr.mxu0 0.0
  %658 = vmatpush1.msra.mxu0 0.0
  %659 = vmatprep.subr.mxu0 0.0
  %660 = vmatpush1.msra.mxu0 0.0
  %661 = vmatprep.subr.mxu0 0.0
  %662 = vmatpush1.msra.mxu0 0.0
  %663 = vmatprep.subr.mxu0 0.0
  %664 = vmatpush1.msra.mxu0 0.0
  %665 = vmatprep.subr.mxu0 0.0
  %666 = vmatpush1.msra.mxu0 0.0
  %667 = vmatprep.subr.mxu0 0.0
  %668 = vmatpush1.msra.mxu0 0.0
  %669 = vmatprep.subr.mxu0 0.0
  %670 = vmatpush1.msra.mxu0 0.0
  %671 = vmatprep.subr.mxu0 0.0
  %672 = vmatpush1.msra.mxu0 0.0
  %673 = vmatprep.subr.mxu0 0.0
  %674 = vmatpush1.msra.mxu0 0.0
  %675 = vmatprep.subr.mxu0 0.0
  %676 = vmatpush1.msra.mxu0 0.0
  %677 = vmatprep.subr.mxu0 0.0
  %678 = vmatpush1.msra.mxu0 0.0
  %679 = vmatprep.subr.mxu0 0.0
  %680 = vmatpush1.msra.mxu0 %v454
  %681 = vmatprep.subr.mxu0 0.0
  %682 = vmatpush1.msra.mxu0 %v453
  %683 = vmatprep.subr.mxu0 0.0
  %684 = vmatpush1.msra.mxu0 %v452
  %685 = vmatprep.subr.mxu0 0.0
  %686 = vmatpush1.msra.mxu0 %v451
  %687 = vmatprep.subr.mxu0 0.0
  %688 = vmatpush2.msra.mxu0 0.0
  %689 = vmatprep.subr.mxu0 0.0
  %690 = vmatpush2.msra.mxu0 0.0
  %691 = vmatprep.subr.mxu0 0.0
  %692 = vmatpush2.msra.mxu0 0.0
  %693 = vmatprep.subr.mxu0 0.0
  %694 = vmatpush2.msra.mxu0 0.0
  %695 = vmatprep.subr.mxu0 0.0
  %696 = vmatpush2.msra.mxu0 0.0
  %697 = vmatprep.subr.mxu0 0.0
  %698 = vmatpush2.msra.mxu0 0.0
  %699 = vmatprep.subr.mxu0 0.0
  %700 = vmatpush2.msra.mxu0 0.0
  %701 = vmatprep.subr.mxu0 0.0
  %702 = vmatpush2.msra.mxu0 0.0
  %703 = vmatprep.subr.mxu0 0.0
  %704 = vmatpush2.msra.mxu0 0.0
  %705 = vmatprep.subr.mxu0 0.0
  %706 = vmatpush2.msra.mxu0 0.0
  %707 = vmatprep.subr.mxu0 0.0
  %708 = vmatpush2.msra.mxu0 0.0
  %709 = vmatprep.subr.mxu0 0.0
  %710 = vmatpush2.msra.mxu0 0.0
  %711 = vmatprep.subr.mxu0 0.0
  %712 = vmatpush2.msra.mxu0 0.0
  %713 = vmatprep.subr.mxu0 0.0
  %714 = vmatpush2.msra.mxu0 0.0
  %715 = vmatprep.subr.mxu0 0.0
  %716 = vmatpush2.msra.mxu0 0.0
  %717 = vmatprep.subr.mxu0 0.0
  %718 = vmatpush2.msra.mxu0 0.0
  %719 = vmatprep.mubr.f32.mxu0 0.0
  %720 = vmatmul.mubr.f32.gmra.mxu0 %v653
  %v721 = vpop.f32.mrf.mxu0
  %v722 = vadd.f32 %v647, %v721
  %v723 = vpop.f32.mrf.mxu0
  %724 = vdwg.mxu0
  %v725 = vadd.f32 %v722, %v464
  %v726 = vxor.u32 %v725, 2147483648
  %v727 = vmul.f32 %v726, 1.442695
  %v728 = vpow.pop %v727
  %v729 = vadd.f32 %v728, 1.0
  %v730 = vrcp.pop %v729
  %v731 = vmul.f32 1.0, %v730
  %v732 = vtanh.pop %v725
  %734 = vrot.lane.b32.xlu0 %v471, 32
  %v735 = vpop.permute.xlu0 %734
  %v737 = vmul.f32 %v731, %v735
  %739 = vrot.lane.b32.xlu0 %v732, 32
  %v740 = vpop.permute.xlu0 %739
  %v742 = vmul.f32 %v731, %v740
  %744 = vrot.lane.b32.xlu0 %v742, 32
  %v745 = vpop.permute.xlu0 %744
  %v747 = vadd.f32 %v737, %v745
  %v748 = vtanh.pop %v747
  %750 = vrot.lane.b32.xlu0 %v748, 32
  %v751 = vpop.permute.xlu0 %750
  %v753 = vmul.f32 %v731, %v751
  %s754 = smul.u32 0, 8
  %p755 = scmp.lt.s32.totalorder %s754, 8
  %s756 = scalar_select %p755, 1, 0
  %s757 = scvt.s32.f32 %s756
  %v758 = vstv %s757
  %v759 = vmul.f32 %v753, %v758
  %761 = vrot.lane.b32.xlu0 %v759, 64
  %v762 = vpop.permute.xlu0 %761
  %v764 = vadd.f32 %v472, %v762
  %s765 = scalar_lea.vmem [#allocation10], 8
  %v766 = vld [vmem:[%s765] sm:$0xff]
  %767 = vmatprep.subr.mxu0 0.0
  %768 = vmatpush1.msra.mxu0 0.0
  %769 = vmatprep.subr.mxu0 0.0
  %770 = vmatpush1.msra.mxu0 0.0
  %771 = vmatprep.subr.mxu0 0.0
  %772 = vmatpush1.msra.mxu0 0.0
  %773 = vmatprep.subr.mxu0 0.0
  %774 = vmatpush1.msra.mxu0 0.0
  %775 = vmatprep.subr.mxu0 0.0
  %776 = vmatpush1.msra.mxu0 0.0
  %777 = vmatprep.subr.mxu0 0.0
  %778 = vmatpush1.msra.mxu0 0.0
  %779 = vmatprep.subr.mxu0 0.0
  %780 = vmatpush1.msra.mxu0 0.0
  %781 = vmatprep.subr.mxu0 0.0
  %782 = vmatpush1.msra.mxu0 0.0
  %783 = vmatprep.subr.mxu0 0.0
  %784 = vmatpush1.msra.mxu0 0.0
  %785 = vmatprep.subr.mxu0 0.0
  %786 = vmatpush1.msra.mxu0 0.0
  %787 = vmatprep.subr.mxu0 0.0
  %788 = vmatpush1.msra.mxu0 0.0
  %789 = vmatprep.subr.mxu0 0.0
  %790 = vmatpush1.msra.mxu0 0.0
  %791 = vmatprep.subr.mxu0 0.0
  %792 = vmatpush1.msra.mxu0 %v450
  %793 = vmatprep.subr.mxu0 0.0
  %794 = vmatpush1.msra.mxu0 %v449
  %795 = vmatprep.subr.mxu0 0.0
  %796 = vmatpush1.msra.mxu0 %v448
  %797 = vmatprep.subr.mxu0 0.0
  %798 = vmatpush1.msra.mxu0 %v447
  %799 = vmatprep.subr.mxu0 0.0
  %800 = vmatpush2.msra.mxu0 0.0
  %801 = vmatprep.subr.mxu0 0.0
  %802 = vmatpush2.msra.mxu0 0.0
  %803 = vmatprep.subr.mxu0 0.0
  %804 = vmatpush2.msra.mxu0 0.0
  %805 = vmatprep.subr.mxu0 0.0
  %806 = vmatpush2.msra.mxu0 0.0
  %807 = vmatprep.subr.mxu0 0.0
  %808 = vmatpush2.msra.mxu0 0.0
  %809 = vmatprep.subr.mxu0 0.0
  %810 = vmatpush2.msra.mxu0 0.0
  %811 = vmatprep.subr.mxu0 0.0
  %812 = vmatpush2.msra.mxu0 0.0
  %813 = vmatprep.subr.mxu0 0.0
  %814 = vmatpush2.msra.mxu0 0.0
  %815 = vmatprep.subr.mxu0 0.0
  %816 = vmatpush2.msra.mxu0 0.0
  %817 = vmatprep.subr.mxu0 0.0
  %818 = vmatpush2.msra.mxu0 0.0
  %819 = vmatprep.subr.mxu0 0.0
  %820 = vmatpush2.msra.mxu0 0.0
  %821 = vmatprep.subr.mxu0 0.0
  %822 = vmatpush2.msra.mxu0 0.0
  %823 = vmatprep.subr.mxu0 0.0
  %824 = vmatpush2.msra.mxu0 0.0
  %825 = vmatprep.subr.mxu0 0.0
  %826 = vmatpush2.msra.mxu0 0.0
  %827 = vmatprep.subr.mxu0 0.0
  %828 = vmatpush2.msra.mxu0 0.0
  %829 = vmatprep.subr.mxu0 0.0
  %830 = vmatpush2.msra.mxu0 0.0
  %831 = vmatprep.mubr.f32.mxu0 0.0
  %832 = vmatmul.mubr.f32.gmra.mxu0 %v653
  %v833 = vpop.f32.mrf.mxu0
  %v834 = vadd.f32 0.0, %v833
  %v835 = vpop.f32.mrf.mxu0
  %836 = vdwg.mxu0
  %v837 = vadd.f32 %v766, %v834
  %v838 = vxor.u32 %v837, 2147483648
  %v839 = vmul.f32 %v838, 1.442695
  %v840 = vpow.pop %v839
  %v841 = vadd.f32 %v840, 1.0
  %v842 = vrcp.pop %v841
  %v843 = vmul.f32 1.0, %v842
  %v844 = vtanh.pop %v837
  %v845 = vmul.f32 %v843, %v570
  %847 = vrot.lane.b32.xlu0 %v844, 32
  %v848 = vpop.permute.xlu0 %847
  %v850 = vmul.f32 %v843, %v848
  %852 = vrot.lane.b32.xlu0 %v850, 32
  %v853 = vpop.permute.xlu0 %852
  %v855 = vadd.f32 %v845, %v853
  %v856 = vtanh.pop %v855
  %858 = vrot.lane.b32.xlu0 %v856, 32
  %v859 = vpop.permute.xlu0 %858
  %v861 = vmul.f32 %v843, %v859
  %863 = vrot.lane.b32.xlu0 %v753, 64
  %v864 = vpop.permute.xlu0 %863
  %v865 = vsel %vm474, %v864, 0
  %867 = vmatprep.subr.mxu0 0.0
  %868 = vmatpush1.msra.mxu0 0.0
  %869 = vmatprep.subr.mxu0 0.0
  %870 = vmatpush1.msra.mxu0 0.0
  %871 = vmatprep.subr.mxu0 0.0
  %872 = vmatpush1.msra.mxu0 0.0
  %873 = vmatprep.subr.mxu0 0.0
  %874 = vmatpush1.msra.mxu0 0.0
  %875 = vmatprep.subr.mxu0 0.0
  %876 = vmatpush1.msra.mxu0 0.0
  %877 = vmatprep.subr.mxu0 0.0
  %878 = vmatpush1.msra.mxu0 0.0
  %879 = vmatprep.subr.mxu0 0.0
  %880 = vmatpush1.msra.mxu0 0.0
  %881 = vmatprep.subr.mxu0 0.0
  %882 = vmatpush1.msra.mxu0 0.0
  %883 = vmatprep.subr.mxu0 0.0
  %884 = vmatpush1.msra.mxu0 0.0
  %885 = vmatprep.subr.mxu0 0.0
  %886 = vmatpush1.msra.mxu0 0.0
  %887 = vmatprep.subr.mxu0 0.0
  %888 = vmatpush1.msra.mxu0 0.0
  %889 = vmatprep.subr.mxu0 0.0
  %890 = vmatpush1.msra.mxu0 0.0
  %891 = vmatprep.subr.mxu0 0.0
  %892 = vmatpush1.msra.mxu0 %v458
  %893 = vmatprep.subr.mxu0 0.0
  %894 = vmatpush1.msra.mxu0 %v457
  %895 = vmatprep.subr.mxu0 0.0
  %896 = vmatpush1.msra.mxu0 %v456
  %897 = vmatprep.subr.mxu0 0.0
  %898 = vmatpush1.msra.mxu0 %v455
  %899 = vmatprep.subr.mxu0 0.0
  %900 = vmatpush2.msra.mxu0 0.0
  %901 = vmatprep.subr.mxu0 0.0
  %902 = vmatpush2.msra.mxu0 0.0
  %903 = vmatprep.subr.mxu0 0.0
  %904 = vmatpush2.msra.mxu0 0.0
  %905 = vmatprep.subr.mxu0 0.0
  %906 = vmatpush2.msra.mxu0 0.0
  %907 = vmatprep.subr.mxu0 0.0
  %908 = vmatpush2.msra.mxu0 0.0
  %909 = vmatprep.subr.mxu0 0.0
  %910 = vmatpush2.msra.mxu0 0.0
  %911 = vmatprep.subr.mxu0 0.0
  %912 = vmatpush2.msra.mxu0 0.0
  %913 = vmatprep.subr.mxu0 0.0
  %914 = vmatpush2.msra.mxu0 0.0
  %915 = vmatprep.subr.mxu0 0.0
  %916 = vmatpush2.msra.mxu0 0.0
  %917 = vmatprep.subr.mxu0 0.0
  %918 = vmatpush2.msra.mxu0 0.0
  %919 = vmatprep.subr.mxu0 0.0
  %920 = vmatpush2.msra.mxu0 0.0
  %921 = vmatprep.subr.mxu0 0.0
  %922 = vmatpush2.msra.mxu0 0.0
  %923 = vmatprep.subr.mxu0 0.0
  %924 = vmatpush2.msra.mxu0 0.0
  %925 = vmatprep.subr.mxu0 0.0
  %926 = vmatpush2.msra.mxu0 0.0
  %927 = vmatprep.subr.mxu0 0.0
  %928 = vmatpush2.msra.mxu0 0.0
  %929 = vmatprep.subr.mxu0 0.0
  %930 = vmatpush2.msra.mxu0 0.0
  %931 = vmatprep.mubr.f32.mxu0 0.0
  %932 = vmatmul.mubr.f32.gmra.mxu0 %v865
  %v933 = vpop.f32.mrf.mxu0
  %v934 = vadd.f32 0.0, %v933
  %v935 = vpop.f32.mrf.mxu0
  %936 = vdwg.mxu0
  %938 = vrot.lane.b32.xlu0 %v861, 64
  %v939 = vpop.permute.xlu0 %938
  %v940 = vsel %vm474, %v939, 0
  %942 = vmatprep.subr.mxu0 0.0
  %943 = vmatpush1.msra.mxu0 0.0
  %944 = vmatprep.subr.mxu0 0.0
  %945 = vmatpush1.msra.mxu0 0.0
  %946 = vmatprep.subr.mxu0 0.0
  %947 = vmatpush1.msra.mxu0 0.0
  %948 = vmatprep.subr.mxu0 0.0
  %949 = vmatpush1.msra.mxu0 0.0
  %950 = vmatprep.subr.mxu0 0.0
  %951 = vmatpush1.msra.mxu0 0.0
  %952 = vmatprep.subr.mxu0 0.0
  %953 = vmatpush1.msra.mxu0 0.0
  %954 = vmatprep.subr.mxu0 0.0
  %955 = vmatpush1.msra.mxu0 0.0
  %956 = vmatprep.subr.mxu0 0.0
  %957 = vmatpush1.msra.mxu0 0.0
  %958 = vmatprep.subr.mxu0 0.0
  %959 = vmatpush1.msra.mxu0 0.0
  %960 = vmatprep.subr.mxu0 0.0
  %961 = vmatpush1.msra.mxu0 0.0
  %962 = vmatprep.subr.mxu0 0.0
  %963 = vmatpush1.msra.mxu0 0.0
  %964 = vmatprep.subr.mxu0 0.0
  %965 = vmatpush1.msra.mxu0 0.0
  %966 = vmatprep.subr.mxu0 0.0
  %967 = vmatpush1.msra.mxu0 %v454
  %968 = vmatprep.subr.mxu0 0.0
  %969 = vmatpush1.msra.mxu0 %v453
  %970 = vmatprep.subr.mxu0 0.0
  %971 = vmatpush1.msra.mxu0 %v452
  %972 = vmatprep.subr.mxu0 0.0
  %973 = vmatpush1.msra.mxu0 %v451
  %974 = vmatprep.subr.mxu0 0.0
  %975 = vmatpush2.msra.mxu0 0.0
  %976 = vmatprep.subr.mxu0 0.0
  %977 = vmatpush2.msra.mxu0 0.0
  %978 = vmatprep.subr.mxu0 0.0
  %979 = vmatpush2.msra.mxu0 0.0
  %980 = vmatprep.subr.mxu0 0.0
  %981 = vmatpush2.msra.mxu0 0.0
  %982 = vmatprep.subr.mxu0 0.0
  %983 = vmatpush2.msra.mxu0 0.0
  %984 = vmatprep.subr.mxu0 0.0
  %985 = vmatpush2.msra.mxu0 0.0
  %986 = vmatprep.subr.mxu0 0.0
  %987 = vmatpush2.msra.mxu0 0.0
  %988 = vmatprep.subr.mxu0 0.0
  %989 = vmatpush2.msra.mxu0 0.0
  %990 = vmatprep.subr.mxu0 0.0
  %991 = vmatpush2.msra.mxu0 0.0
  %992 = vmatprep.subr.mxu0 0.0
  %993 = vmatpush2.msra.mxu0 0.0
  %994 = vmatprep.subr.mxu0 0.0
  %995 = vmatpush2.msra.mxu0 0.0
  %996 = vmatprep.subr.mxu0 0.0
  %997 = vmatpush2.msra.mxu0 0.0
  %998 = vmatprep.subr.mxu0 0.0
  %999 = vmatpush2.msra.mxu0 0.0
  %1000 = vmatprep.subr.mxu0 0.0
  %1001 = vmatpush2.msra.mxu0 0.0
  %1002 = vmatprep.subr.mxu0 0.0
  %1003 = vmatpush2.msra.mxu0 0.0
  %1004 = vmatprep.subr.mxu0 0.0
  %1005 = vmatpush2.msra.mxu0 0.0
  %1006 = vmatprep.mubr.f32.mxu0 0.0
  %1007 = vmatmul.mubr.f32.gmra.mxu0 %v940
  %v1008 = vpop.f32.mrf.mxu0
  %v1009 = vadd.f32 %v934, %v1008
  %v1010 = vpop.f32.mrf.mxu0
  %1011 = vdwg.mxu0
  %v1012 = vadd.f32 %v1009, %v464
  %v1013 = vxor.u32 %v1012, 2147483648
  %v1014 = vmul.f32 %v1013, 1.442695
  %v1015 = vpow.pop %v1014
  %v1016 = vadd.f32 %v1015, 1.0
  %v1017 = vrcp.pop %v1016
  %v1018 = vmul.f32 1.0, %v1017
  %v1019 = vtanh.pop %v1012
  %v1020 = vmul.f32 %v1018, %v747
  %1022 = vrot.lane.b32.xlu0 %v1019, 32
  %v1023 = vpop.permute.xlu0 %1022
  %v1025 = vmul.f32 %v1018, %v1023
  %1027 = vrot.lane.b32.xlu0 %v1025, 32
  %v1028 = vpop.permute.xlu0 %1027
  %v1030 = vadd.f32 %v1020, %v1028
  %v1031 = vtanh.pop %v1030
  %1033 = vrot.lane.b32.xlu0 %v1031, 32
  %v1034 = vpop.permute.xlu0 %1033
  %v1036 = vmul.f32 %v1018, %v1034
  %s1037 = sadd.s32 %s754, 1
  %p1038 = scmp.lt.s32.totalorder %s1037, 8
  %s1039 = scalar_select %p1038, 1, 0
  %s1040 = scvt.s32.f32 %s1039
  %v1041 = vstv %s1040
  %v1042 = vmul.f32 %v1036, %v1041
  %1044 = vrot.lane.b32.xlu0 %v1042, 64
  %v1045 = vpop.permute.xlu0 %1044
  %v1047 = vadd.f32 %v764, %v1045
  %s1048 = scalar_lea.vmem [#allocation10], 16
  %v1049 = vld [vmem:[%s1048] sm:$0xff]
  %1050 = vmatprep.subr.mxu0 0.0
  %1051 = vmatpush1.msra.mxu0 0.0
  %1052 = vmatprep.subr.mxu0 0.0
  %1053 = vmatpush1.msra.mxu0 0.0
  %1054 = vmatprep.subr.mxu0 0.0
  %1055 = vmatpush1.msra.mxu0 0.0
  %1056 = vmatprep.subr.mxu0 0.0
  %1057 = vmatpush1.msra.mxu0 0.0
  %1058 = vmatprep.subr.mxu0 0.0
  %1059 = vmatpush1.msra.mxu0 0.0
  %1060 = vmatprep.subr.mxu0 0.0
  %1061 = vmatpush1.msra.mxu0 0.0
  %1062 = vmatprep.subr.mxu0 0.0
  %1063 = vmatpush1.msra.mxu0 0.0
  %1064 = vmatprep.subr.mxu0 0.0
  %1065 = vmatpush1.msra.mxu0 0.0
  %1066 = vmatprep.subr.mxu0 0.0
  %1067 = vmatpush1.msra.mxu0 0.0
  %1068 = vmatprep.subr.mxu0 0.0
  %1069 = vmatpush1.msra.mxu0 0.0
  %1070 = vmatprep.subr.mxu0 0.0
  %1071 = vmatpush1.msra.mxu0 0.0
  %1072 = vmatprep.subr.mxu0 0.0
  %1073 = vmatpush1.msra.mxu0 0.0
  %1074 = vmatprep.subr.mxu0 0.0
  %1075 = vmatpush1.msra.mxu0 %v450
  %1076 = vmatprep.subr.mxu0 0.0
  %1077 = vmatpush1.msra.mxu0 %v449
  %1078 = vmatprep.subr.mxu0 0.0
  %1079 = vmatpush1.msra.mxu0 %v448
  %1080 = vmatprep.subr.mxu0 0.0
  %1081 = vmatpush1.msra.mxu0 %v447
  %1082 = vmatprep.subr.mxu0 0.0
  %1083 = vmatpush2.msra.mxu0 0.0
  %1084 = vmatprep.subr.mxu0 0.0
  %1085 = vmatpush2.msra.mxu0 0.0
  %1086 = vmatprep.subr.mxu0 0.0
  %1087 = vmatpush2.msra.mxu0 0.0
  %1088 = vmatprep.subr.mxu0 0.0
  %1089 = vmatpush2.msra.mxu0 0.0
  %1090 = vmatprep.subr.mxu0 0.0
  %1091 = vmatpush2.msra.mxu0 0.0
  %1092 = vmatprep.subr.mxu0 0.0
  %1093 = vmatpush2.msra.mxu0 0.0
  %1094 = vmatprep.subr.mxu0 0.0
  %1095 = vmatpush2.msra.mxu0 0.0
  %1096 = vmatprep.subr.mxu0 0.0
  %1097 = vmatpush2.msra.mxu0 0.0
  %1098 = vmatprep.subr.mxu0 0.0
  %1099 = vmatpush2.msra.mxu0 0.0
  %1100 = vmatprep.subr.mxu0 0.0
  %1101 = vmatpush2.msra.mxu0 0.0
  %1102 = vmatprep.subr.mxu0 0.0
  %1103 = vmatpush2.msra.mxu0 0.0
  %1104 = vmatprep.subr.mxu0 0.0
  %1105 = vmatpush2.msra.mxu0 0.0
  %1106 = vmatprep.subr.mxu0 0.0
  %1107 = vmatpush2.msra.mxu0 0.0
  %1108 = vmatprep.subr.mxu0 0.0
  %1109 = vmatpush2.msra.mxu0 0.0
  %1110 = vmatprep.subr.mxu0 0.0
  %1111 = vmatpush2.msra.mxu0 0.0
  %1112 = vmatprep.subr.mxu0 0.0
  %1113 = vmatpush2.msra.mxu0 0.0
  %1114 = vmatprep.mubr.f32.mxu0 0.0
  %1115 = vmatmul.mubr.f32.gmra.mxu0 %v940
  %v1116 = vpop.f32.mrf.mxu0
  %v1117 = vadd.f32 0.0, %v1116
  %v1118 = vpop.f32.mrf.mxu0
  %1119 = vdwg.mxu0
  %v1120 = vadd.f32 %v1049, %v1117
  %v1121 = vxor.u32 %v1120, 2147483648
  %v1122 = vmul.f32 %v1121, 1.442695
  %v1123 = vpow.pop %v1122
  %v1124 = vadd.f32 %v1123, 1.0
  %v1125 = vrcp.pop %v1124
  %v1126 = vmul.f32 1.0, %v1125
  %v1127 = vtanh.pop %v1120
  %v1128 = vmul.f32 %v1126, %v855
  %1130 = vrot.lane.b32.xlu0 %v1127, 32
  %v1131 = vpop.permute.xlu0 %1130
  %v1133 = vmul.f32 %v1126, %v1131
  %1135 = vrot.lane.b32.xlu0 %v1133, 32
  %v1136 = vpop.permute.xlu0 %1135
  %v1138 = vadd.f32 %v1128, %v1136
  %v1139 = vtanh.pop %v1138
  %1141 = vrot.lane.b32.xlu0 %v1139, 32
  %v1142 = vpop.permute.xlu0 %1141
  %v1144 = vmul.f32 %v1126, %v1142
  %1146 = vrot.lane.b32.xlu0 %v1036, 64
  %v1147 = vpop.permute.xlu0 %1146
  %v1148 = vsel %vm474, %v1147, 0
  %1150 = vmatprep.subr.mxu0 0.0
  %1151 = vmatpush1.msra.mxu0 0.0
  %1152 = vmatprep.subr.mxu0 0.0
  %1153 = vmatpush1.msra.mxu0 0.0
  %1154 = vmatprep.subr.mxu0 0.0
  %1155 = vmatpush1.msra.mxu0 0.0
  %1156 = vmatprep.subr.mxu0 0.0
  %1157 = vmatpush1.msra.mxu0 0.0
  %1158 = vmatprep.subr.mxu0 0.0
  %1159 = vmatpush1.msra.mxu0 0.0
  %1160 = vmatprep.subr.mxu0 0.0
  %1161 = vmatpush1.msra.mxu0 0.0
  %1162 = vmatprep.subr.mxu0 0.0
  %1163 = vmatpush1.msra.mxu0 0.0
  %1164 = vmatprep.subr.mxu0 0.0
  %1165 = vmatpush1.msra.mxu0 0.0
  %1166 = vmatprep.subr.mxu0 0.0
  %1167 = vmatpush1.msra.mxu0 0.0
  %1168 = vmatprep.subr.mxu0 0.0
  %1169 = vmatpush1.msra.mxu0 0.0
  %1170 = vmatprep.subr.mxu0 0.0
  %1171 = vmatpush1.msra.mxu0 0.0
  %1172 = vmatprep.subr.mxu0 0.0
  %1173 = vmatpush1.msra.mxu0 0.0
  %1174 = vmatprep.subr.mxu0 0.0
  %1175 = vmatpush1.msra.mxu0 %v458
  %1176 = vmatprep.subr.mxu0 0.0
  %1177 = vmatpush1.msra.mxu0 %v457
  %1178 = vmatprep.subr.mxu0 0.0
  %1179 = vmatpush1.msra.mxu0 %v456
  %1180 = vmatprep.subr.mxu0 0.0
  %1181 = vmatpush1.msra.mxu0 %v455
  %1182 = vmatprep.subr.mxu0 0.0
  %1183 = vmatpush2.msra.mxu0 0.0
  %1184 = vmatprep.subr.mxu0 0.0
  %1185 = vmatpush2.msra.mxu0 0.0
  %1186 = vmatprep.subr.mxu0 0.0
  %1187 = vmatpush2.msra.mxu0 0.0
  %1188 = vmatprep.subr.mxu0 0.0
  %1189 = vmatpush2.msra.mxu0 0.0
  %1190 = vmatprep.subr.mxu0 0.0
  %1191 = vmatpush2.msra.mxu0 0.0
  %1192 = vmatprep.subr.mxu0 0.0
  %1193 = vmatpush2.msra.mxu0 0.0
  %1194 = vmatprep.subr.mxu0 0.0
  %1195 = vmatpush2.msra.mxu0 0.0
  %1196 = vmatprep.subr.mxu0 0.0
  %1197 = vmatpush2.msra.mxu0 0.0
  %1198 = vmatprep.subr.mxu0 0.0
  %1199 = vmatpush2.msra.mxu0 0.0
  %1200 = vmatprep.subr.mxu0 0.0
  %1201 = vmatpush2.msra.mxu0 0.0
  %1202 = vmatprep.subr.mxu0 0.0
  %1203 = vmatpush2.msra.mxu0 0.0
  %1204 = vmatprep.subr.mxu0 0.0
  %1205 = vmatpush2.msra.mxu0 0.0
  %1206 = vmatprep.subr.mxu0 0.0
  %1207 = vmatpush2.msra.mxu0 0.0
  %1208 = vmatprep.subr.mxu0 0.0
  %1209 = vmatpush2.msra.mxu0 0.0
  %1210 = vmatprep.subr.mxu0 0.0
  %1211 = vmatpush2.msra.mxu0 0.0
  %1212 = vmatprep.subr.mxu0 0.0
  %1213 = vmatpush2.msra.mxu0 0.0
  %1214 = vmatprep.mubr.f32.mxu0 0.0
  %1215 = vmatmul.mubr.f32.gmra.mxu0 %v1148
  %v1216 = vpop.f32.mrf.mxu0
  %v1217 = vadd.f32 0.0, %v1216
  %v1218 = vpop.f32.mrf.mxu0
  %1219 = vdwg.mxu0
  %1221 = vrot.lane.b32.xlu0 %v1144, 64
  %v1222 = vpop.permute.xlu0 %1221
  %v1223 = vsel %vm474, %v1222, 0
  %1225 = vmatprep.subr.mxu0 0.0
  %1226 = vmatpush1.msra.mxu0 0.0
  %1227 = vmatprep.subr.mxu0 0.0
  %1228 = vmatpush1.msra.mxu0 0.0
  %1229 = vmatprep.subr.mxu0 0.0
  %1230 = vmatpush1.msra.mxu0 0.0
  %1231 = vmatprep.subr.mxu0 0.0
  %1232 = vmatpush1.msra.mxu0 0.0
  %1233 = vmatprep.subr.mxu0 0.0
  %1234 = vmatpush1.msra.mxu0 0.0
  %1235 = vmatprep.subr.mxu0 0.0
  %1236 = vmatpush1.msra.mxu0 0.0
  %1237 = vmatprep.subr.mxu0 0.0
  %1238 = vmatpush1.msra.mxu0 0.0
  %1239 = vmatprep.subr.mxu0 0.0
  %1240 = vmatpush1.msra.mxu0 0.0
  %1241 = vmatprep.subr.mxu0 0.0
  %1242 = vmatpush1.msra.mxu0 0.0
  %1243 = vmatprep.subr.mxu0 0.0
  %1244 = vmatpush1.msra.mxu0 0.0
  %1245 = vmatprep.subr.mxu0 0.0
  %1246 = vmatpush1.msra.mxu0 0.0
  %1247 = vmatprep.subr.mxu0 0.0
  %1248 = vmatpush1.msra.mxu0 0.0
  %1249 = vmatprep.subr.mxu0 0.0
  %1250 = vmatpush1.msra.mxu0 %v454
  %1251 = vmatprep.subr.mxu0 0.0
  %1252 = vmatpush1.msra.mxu0 %v453
  %1253 = vmatprep.subr.mxu0 0.0
  %1254 = vmatpush1.msra.mxu0 %v452
  %1255 = vmatprep.subr.mxu0 0.0
  %1256 = vmatpush1.msra.mxu0 %v451
  %1257 = vmatprep.subr.mxu0 0.0
  %1258 = vmatpush2.msra.mxu0 0.0
  %1259 = vmatprep.subr.mxu0 0.0
  %1260 = vmatpush2.msra.mxu0 0.0
  %1261 = vmatprep.subr.mxu0 0.0
  %1262 = vmatpush2.msra.mxu0 0.0
  %1263 = vmatprep.subr.mxu0 0.0
  %1264 = vmatpush2.msra.mxu0 0.0
  %1265 = vmatprep.subr.mxu0 0.0
  %1266 = vmatpush2.msra.mxu0 0.0
  %1267 = vmatprep.subr.mxu0 0.0
  %1268 = vmatpush2.msra.mxu0 0.0
  %1269 = vmatprep.subr.mxu0 0.0
  %1270 = vmatpush2.msra.mxu0 0.0
  %1271 = vmatprep.subr.mxu0 0.0
  %1272 = vmatpush2.msra.mxu0 0.0
  %1273 = vmatprep.subr.mxu0 0.0
  %1274 = vmatpush2.msra.mxu0 0.0
  %1275 = vmatprep.subr.mxu0 0.0
  %1276 = vmatpush2.msra.mxu0 0.0
  %1277 = vmatprep.subr.mxu0 0.0
  %1278 = vmatpush2.msra.mxu0 0.0
  %1279 = vmatprep.subr.mxu0 0.0
  %1280 = vmatpush2.msra.mxu0 0.0
  %1281 = vmatprep.subr.mxu0 0.0
  %1282 = vmatpush2.msra.mxu0 0.0
  %1283 = vmatprep.subr.mxu0 0.0
  %1284 = vmatpush2.msra.mxu0 0.0
  %1285 = vmatprep.subr.mxu0 0.0
  %1286 = vmatpush2.msra.mxu0 0.0
  %1287 = vmatprep.subr.mxu0 0.0
  %1288 = vmatpush2.msra.mxu0 0.0
  %1289 = vmatprep.mubr.f32.mxu0 0.0
  %1290 = vmatmul.mubr.f32.gmra.mxu0 %v1223
  %v1291 = vpop.f32.mrf.mxu0
  %v1292 = vadd.f32 %v1217, %v1291
  %v1293 = vpop.f32.mrf.mxu0
  %1294 = vdwg.mxu0
  %v1295 = vadd.f32 %v1292, %v464
  %v1296 = vxor.u32 %v1295, 2147483648
  %v1297 = vmul.f32 %v1296, 1.442695
  %v1298 = vpow.pop %v1297
  %v1299 = vadd.f32 %v1298, 1.0
  %v1300 = vrcp.pop %v1299
  %v1301 = vmul.f32 1.0, %v1300
  %v1302 = vtanh.pop %v1295
  %v1303 = vmul.f32 %v1301, %v1030
  %1305 = vrot.lane.b32.xlu0 %v1302, 32
  %v1306 = vpop.permute.xlu0 %1305
  %v1308 = vmul.f32 %v1301, %v1306
  %1310 = vrot.lane.b32.xlu0 %v1308, 32
  %v1311 = vpop.permute.xlu0 %1310
  %v1313 = vadd.f32 %v1303, %v1311
  %v1314 = vtanh.pop %v1313
  %1316 = vrot.lane.b32.xlu0 %v1314, 32
  %v1317 = vpop.permute.xlu0 %1316
  %v1319 = vmul.f32 %v1301, %v1317
  %s1320 = sadd.s32 %s754, 2
  %p1321 = scmp.lt.s32.totalorder %s1320, 8
  %s1322 = scalar_select %p1321, 1, 0
  %s1323 = scvt.s32.f32 %s1322
  %v1324 = vstv %s1323
  %v1325 = vmul.f32 %v1319, %v1324
  %1327 = vrot.lane.b32.xlu0 %v1325, 64
  %v1328 = vpop.permute.xlu0 %1327
  %v1330 = vadd.f32 %v1047, %v1328
  %s1331 = scalar_lea.vmem [#allocation10], 24
  %v1332 = vld [vmem:[%s1331] sm:$0xff]
  %1333 = vmatprep.subr.mxu0 0.0
  %1334 = vmatpush1.msra.mxu0 0.0
  %1335 = vmatprep.subr.mxu0 0.0
  %1336 = vmatpush1.msra.mxu0 0.0
  %1337 = vmatprep.subr.mxu0 0.0
  %1338 = vmatpush1.msra.mxu0 0.0
  %1339 = vmatprep.subr.mxu0 0.0
  %1340 = vmatpush1.msra.mxu0 0.0
  %1341 = vmatprep.subr.mxu0 0.0
  %1342 = vmatpush1.msra.mxu0 0.0
  %1343 = vmatprep.subr.mxu0 0.0
  %1344 = vmatpush1.msra.mxu0 0.0
  %1345 = vmatprep.subr.mxu0 0.0
  %1346 = vmatpush1.msra.mxu0 0.0
  %1347 = vmatprep.subr.mxu0 0.0
  %1348 = vmatpush1.msra.mxu0 0.0
  %1349 = vmatprep.subr.mxu0 0.0
  %1350 = vmatpush1.msra.mxu0 0.0
  %1351 = vmatprep.subr.mxu0 0.0
  %1352 = vmatpush1.msra.mxu0 0.0
  %1353 = vmatprep.subr.mxu0 0.0
  %1354 = vmatpush1.msra.mxu0 0.0
  %1355 = vmatprep.subr.mxu0 0.0
  %1356 = vmatpush1.msra.mxu0 0.0
  %1357 = vmatprep.subr.mxu0 0.0
  %1358 = vmatpush1.msra.mxu0 %v450
  %1359 = vmatprep.subr.mxu0 0.0
  %1360 = vmatpush1.msra.mxu0 %v449
  %1361 = vmatprep.subr.mxu0 0.0
  %1362 = vmatpush1.msra.mxu0 %v448
  %1363 = vmatprep.subr.mxu0 0.0
  %1364 = vmatpush1.msra.mxu0 %v447
  %1365 = vmatprep.subr.mxu0 0.0
  %1366 = vmatpush2.msra.mxu0 0.0
  %1367 = vmatprep.subr.mxu0 0.0
  %1368 = vmatpush2.msra.mxu0 0.0
  %1369 = vmatprep.subr.mxu0 0.0
  %1370 = vmatpush2.msra.mxu0 0.0
  %1371 = vmatprep.subr.mxu0 0.0
  %1372 = vmatpush2.msra.mxu0 0.0
  %1373 = vmatprep.subr.mxu0 0.0
  %1374 = vmatpush2.msra.mxu0 0.0
  %1375 = vmatprep.subr.mxu0 0.0
  %1376 = vmatpush2.msra.mxu0 0.0
  %1377 = vmatprep.subr.mxu0 0.0
  %1378 = vmatpush2.msra.mxu0 0.0
  %1379 = vmatprep.subr.mxu0 0.0
  %1380 = vmatpush2.msra.mxu0 0.0
  %1381 = vmatprep.subr.mxu0 0.0
  %1382 = vmatpush2.msra.mxu0 0.0
  %1383 = vmatprep.subr.mxu0 0.0
  %1384 = vmatpush2.msra.mxu0 0.0
  %1385 = vmatprep.subr.mxu0 0.0
  %1386 = vmatpush2.msra.mxu0 0.0
  %1387 = vmatprep.subr.mxu0 0.0
  %1388 = vmatpush2.msra.mxu0 0.0
  %1389 = vmatprep.subr.mxu0 0.0
  %1390 = vmatpush2.msra.mxu0 0.0
  %1391 = vmatprep.subr.mxu0 0.0
  %1392 = vmatpush2.msra.mxu0 0.0
  %1393 = vmatprep.subr.mxu0 0.0
  %1394 = vmatpush2.msra.mxu0 0.0
  %1395 = vmatprep.subr.mxu0 0.0
  %1396 = vmatpush2.msra.mxu0 0.0
  %1397 = vmatprep.mubr.f32.mxu0 0.0
  %1398 = vmatmul.mubr.f32.gmra.mxu0 %v1223
  %v1399 = vpop.f32.mrf.mxu0
  %v1400 = vadd.f32 0.0, %v1399
  %v1401 = vpop.f32.mrf.mxu0
  %1402 = vdwg.mxu0
  %v1403 = vadd.f32 %v1332, %v1400
  %v1404 = vxor.u32 %v1403, 2147483648
  %v1405 = vmul.f32 %v1404, 1.442695
  %v1406 = vpow.pop %v1405
  %v1407 = vadd.f32 %v1406, 1.0
  %v1408 = vrcp.pop %v1407
  %v1409 = vmul.f32 1.0, %v1408
  %v1410 = vtanh.pop %v1403
  %v1411 = vmul.f32 %v1409, %v1138
  %1413 = vrot.lane.b32.xlu0 %v1410, 32
  %v1414 = vpop.permute.xlu0 %1413
  %v1416 = vmul.f32 %v1409, %v1414
  %1418 = vrot.lane.b32.xlu0 %v1416, 32
  %v1419 = vpop.permute.xlu0 %1418
  %v1421 = vadd.f32 %v1411, %v1419
  %v1422 = vtanh.pop %v1421
  %1424 = vrot.lane.b32.xlu0 %v1422, 32
  %v1425 = vpop.permute.xlu0 %1424
  %v1427 = vmul.f32 %v1409, %v1425
  %1429 = vrot.lane.b32.xlu0 %v1319, 64
  %v1430 = vpop.permute.xlu0 %1429
  %v1431 = vsel %vm474, %v1430, 0
  %1433 = vmatprep.subr.mxu0 0.0
  %1434 = vmatpush1.msra.mxu0 0.0
  %1435 = vmatprep.subr.mxu0 0.0
  %1436 = vmatpush1.msra.mxu0 0.0
  %1437 = vmatprep.subr.mxu0 0.0
  %1438 = vmatpush1.msra.mxu0 0.0
  %1439 = vmatprep.subr.mxu0 0.0
  %1440 = vmatpush1.msra.mxu0 0.0
  %1441 = vmatprep.subr.mxu0 0.0
  %1442 = vmatpush1.msra.mxu0 0.0
  %1443 = vmatprep.subr.mxu0 0.0
  %1444 = vmatpush1.msra.mxu0 0.0
  %1445 = vmatprep.subr.mxu0 0.0
  %1446 = vmatpush1.msra.mxu0 0.0
  %1447 = vmatprep.subr.mxu0 0.0
  %1448 = vmatpush1.msra.mxu0 0.0
  %1449 = vmatprep.subr.mxu0 0.0
  %1450 = vmatpush1.msra.mxu0 0.0
  %1451 = vmatprep.subr.mxu0 0.0
  %1452 = vmatpush1.msra.mxu0 0.0
  %1453 = vmatprep.subr.mxu0 0.0
  %1454 = vmatpush1.msra.mxu0 0.0
  %1455 = vmatprep.subr.mxu0 0.0
  %1456 = vmatpush1.msra.mxu0 0.0
  %1457 = vmatprep.subr.mxu0 0.0
  %1458 = vmatpush1.msra.mxu0 %v458
  %1459 = vmatprep.subr.mxu0 0.0
  %1460 = vmatpush1.msra.mxu0 %v457
  %1461 = vmatprep.subr.mxu0 0.0
  %1462 = vmatpush1.msra.mxu0 %v456
  %1463 = vmatprep.subr.mxu0 0.0
  %1464 = vmatpush1.msra.mxu0 %v455
  %1465 = vmatprep.subr.mxu0 0.0
  %1466 = vmatpush2.msra.mxu0 0.0
  %1467 = vmatprep.subr.mxu0 0.0
  %1468 = vmatpush2.msra.mxu0 0.0
  %1469 = vmatprep.subr.mxu0 0.0
  %1470 = vmatpush2.msra.mxu0 0.0
  %1471 = vmatprep.subr.mxu0 0.0
  %1472 = vmatpush2.msra.mxu0 0.0
  %1473 = vmatprep.subr.mxu0 0.0
  %1474 = vmatpush2.msra.mxu0 0.0
  %1475 = vmatprep.subr.mxu0 0.0
  %1476 = vmatpush2.msra.mxu0 0.0
  %1477 = vmatprep.subr.mxu0 0.0
  %1478 = vmatpush2.msra.mxu0 0.0
  %1479 = vmatprep.subr.mxu0 0.0
  %1480 = vmatpush2.msra.mxu0 0.0
  %1481 = vmatprep.subr.mxu0 0.0
  %1482 = vmatpush2.msra.mxu0 0.0
  %1483 = vmatprep.subr.mxu0 0.0
  %1484 = vmatpush2.msra.mxu0 0.0
  %1485 = vmatprep.subr.mxu0 0.0
  %1486 = vmatpush2.msra.mxu0 0.0
  %1487 = vmatprep.subr.mxu0 0.0
  %1488 = vmatpush2.msra.mxu0 0.0
  %1489 = vmatprep.subr.mxu0 0.0
  %1490 = vmatpush2.msra.mxu0 0.0
  %1491 = vmatprep.subr.mxu0 0.0
  %1492 = vmatpush2.msra.mxu0 0.0
  %1493 = vmatprep.subr.mxu0 0.0
  %1494 = vmatpush2.msra.mxu0 0.0
  %1495 = vmatprep.subr.mxu0 0.0
  %1496 = vmatpush2.msra.mxu0 0.0
  %1497 = vmatprep.mubr.f32.mxu0 0.0
  %1498 = vmatmul.mubr.f32.gmra.mxu0 %v1431
  %v1499 = vpop.f32.mrf.mxu0
  %v1500 = vadd.f32 0.0, %v1499
  %v1501 = vpop.f32.mrf.mxu0
  %1502 = vdwg.mxu0
  %1504 = vrot.lane.b32.xlu0 %v1427, 64
  %v1505 = vpop.permute.xlu0 %1504
  %v1506 = vsel %vm474, %v1505, 0
  %1508 = vmatprep.subr.mxu0 0.0
  %1509 = vmatpush1.msra.mxu0 0.0
  %1510 = vmatprep.subr.mxu0 0.0
  %1511 = vmatpush1.msra.mxu0 0.0
  %1512 = vmatprep.subr.mxu0 0.0
  %1513 = vmatpush1.msra.mxu0 0.0
  %1514 = vmatprep.subr.mxu0 0.0
  %1515 = vmatpush1.msra.mxu0 0.0
  %1516 = vmatprep.subr.mxu0 0.0
  %1517 = vmatpush1.msra.mxu0 0.0
  %1518 = vmatprep.subr.mxu0 0.0
  %1519 = vmatpush1.msra.mxu0 0.0
  %1520 = vmatprep.subr.mxu0 0.0
  %1521 = vmatpush1.msra.mxu0 0.0
  %1522 = vmatprep.subr.mxu0 0.0
  %1523 = vmatpush1.msra.mxu0 0.0
  %1524 = vmatprep.subr.mxu0 0.0
  %1525 = vmatpush1.msra.mxu0 0.0
  %1526 = vmatprep.subr.mxu0 0.0
  %1527 = vmatpush1.msra.mxu0 0.0
  %1528 = vmatprep.subr.mxu0 0.0
  %1529 = vmatpush1.msra.mxu0 0.0
  %1530 = vmatprep.subr.mxu0 0.0
  %1531 = vmatpush1.msra.mxu0 0.0
  %1532 = vmatprep.subr.mxu0 0.0
  %1533 = vmatpush1.msra.mxu0 %v454
  %1534 = vmatprep.subr.mxu0 0.0
  %1535 = vmatpush1.msra.mxu0 %v453
  %1536 = vmatprep.subr.mxu0 0.0
  %1537 = vmatpush1.msra.mxu0 %v452
  %1538 = vmatprep.subr.mxu0 0.0
  %1539 = vmatpush1.msra.mxu0 %v451
  %1540 = vmatprep.subr.mxu0 0.0
  %1541 = vmatpush2.msra.mxu0 0.0
  %1542 = vmatprep.subr.mxu0 0.0
  %1543 = vmatpush2.msra.mxu0 0.0
  %1544 = vmatprep.subr.mxu0 0.0
  %1545 = vmatpush2.msra.mxu0 0.0
  %1546 = vmatprep.subr.mxu0 0.0
  %1547 = vmatpush2.msra.mxu0 0.0
  %1548 = vmatprep.subr.mxu0 0.0
  %1549 = vmatpush2.msra.mxu0 0.0
  %1550 = vmatprep.subr.mxu0 0.0
  %1551 = vmatpush2.msra.mxu0 0.0
  %1552 = vmatprep.subr.mxu0 0.0
  %1553 = vmatpush2.msra.mxu0 0.0
  %1554 = vmatprep.subr.mxu0 0.0
  %1555 = vmatpush2.msra.mxu0 0.0
  %1556 = vmatprep.subr.mxu0 0.0
  %1557 = vmatpush2.msra.mxu0 0.0
  %1558 = vmatprep.subr.mxu0 0.0
  %1559 = vmatpush2.msra.mxu0 0.0
  %1560 = vmatprep.subr.mxu0 0.0
  %1561 = vmatpush2.msra.mxu0 0.0
  %1562 = vmatprep.subr.mxu0 0.0
  %1563 = vmatpush2.msra.mxu0 0.0
  %1564 = vmatprep.subr.mxu0 0.0
  %1565 = vmatpush2.msra.mxu0 0.0
  %1566 = vmatprep.subr.mxu0 0.0
  %1567 = vmatpush2.msra.mxu0 0.0
  %1568 = vmatprep.subr.mxu0 0.0
  %1569 = vmatpush2.msra.mxu0 0.0
  %1570 = vmatprep.subr.mxu0 0.0
  %1571 = vmatpush2.msra.mxu0 0.0
  %1572 = vmatprep.mubr.f32.mxu0 0.0
  %1573 = vmatmul.mubr.f32.gmra.mxu0 %v1506
  %v1574 = vpop.f32.mrf.mxu0
  %v1575 = vadd.f32 %v1500, %v1574
  %v1576 = vpop.f32.mrf.mxu0
  %1577 = vdwg.mxu0
  %v1578 = vadd.f32 %v1575, %v464
  %v1579 = vxor.u32 %v1578, 2147483648
  %v1580 = vmul.f32 %v1579, 1.442695
  %v1581 = vpow.pop %v1580
  %v1582 = vadd.f32 %v1581, 1.0
  %v1583 = vrcp.pop %v1582
  %v1584 = vmul.f32 1.0, %v1583
  %v1585 = vtanh.pop %v1578
  %v1586 = vmul.f32 %v1584, %v1313
  %1588 = vrot.lane.b32.xlu0 %v1585, 32
  %v1589 = vpop.permute.xlu0 %1588
  %v1591 = vmul.f32 %v1584, %v1589
  %1593 = vrot.lane.b32.xlu0 %v1591, 32
  %v1594 = vpop.permute.xlu0 %1593
  %v1596 = vadd.f32 %v1586, %v1594
  %v1597 = vtanh.pop %v1596
  %1599 = vrot.lane.b32.xlu0 %v1597, 32
  %v1600 = vpop.permute.xlu0 %1599
  %v1602 = vmul.f32 %v1584, %v1600
  %s1603 = sadd.s32 %s754, 3
  %p1604 = scmp.lt.s32.totalorder %s1603, 8
  %s1605 = scalar_select %p1604, 1, 0
  %s1606 = scvt.s32.f32 %s1605
  %v1607 = vstv %s1606
  %v1608 = vmul.f32 %v1602, %v1607
  %1610 = vrot.lane.b32.xlu0 %v1608, 64
  %v1611 = vpop.permute.xlu0 %1610
  %v1613 = vadd.f32 %v1330, %v1611
  %s1614 = scalar_lea.vmem [#allocation10], 32
  %v1615 = vld [vmem:[%s1614] sm:$0xff]
  %1616 = vmatprep.subr.mxu0 0.0
  %1617 = vmatpush1.msra.mxu0 0.0
  %1618 = vmatprep.subr.mxu0 0.0
  %1619 = vmatpush1.msra.mxu0 0.0
  %1620 = vmatprep.subr.mxu0 0.0
  %1621 = vmatpush1.msra.mxu0 0.0
  %1622 = vmatprep.subr.mxu0 0.0
  %1623 = vmatpush1.msra.mxu0 0.0
  %1624 = vmatprep.subr.mxu0 0.0
  %1625 = vmatpush1.msra.mxu0 0.0
  %1626 = vmatprep.subr.mxu0 0.0
  %1627 = vmatpush1.msra.mxu0 0.0
  %1628 = vmatprep.subr.mxu0 0.0
  %1629 = vmatpush1.msra.mxu0 0.0
  %1630 = vmatprep.subr.mxu0 0.0
  %1631 = vmatpush1.msra.mxu0 0.0
  %1632 = vmatprep.subr.mxu0 0.0
  %1633 = vmatpush1.msra.mxu0 0.0
  %1634 = vmatprep.subr.mxu0 0.0
  %1635 = vmatpush1.msra.mxu0 0.0
  %1636 = vmatprep.subr.mxu0 0.0
  %1637 = vmatpush1.msra.mxu0 0.0
  %1638 = vmatprep.subr.mxu0 0.0
  %1639 = vmatpush1.msra.mxu0 0.0
  %1640 = vmatprep.subr.mxu0 0.0
  %1641 = vmatpush1.msra.mxu0 %v450
  %1642 = vmatprep.subr.mxu0 0.0
  %1643 = vmatpush1.msra.mxu0 %v449
  %1644 = vmatprep.subr.mxu0 0.0
  %1645 = vmatpush1.msra.mxu0 %v448
  %1646 = vmatprep.subr.mxu0 0.0
  %1647 = vmatpush1.msra.mxu0 %v447
  %1648 = vmatprep.subr.mxu0 0.0
  %1649 = vmatpush2.msra.mxu0 0.0
  %1650 = vmatprep.subr.mxu0 0.0
  %1651 = vmatpush2.msra.mxu0 0.0
  %1652 = vmatprep.subr.mxu0 0.0
  %1653 = vmatpush2.msra.mxu0 0.0
  %1654 = vmatprep.subr.mxu0 0.0
  %1655 = vmatpush2.msra.mxu0 0.0
  %1656 = vmatprep.subr.mxu0 0.0
  %1657 = vmatpush2.msra.mxu0 0.0
  %1658 = vmatprep.subr.mxu0 0.0
  %1659 = vmatpush2.msra.mxu0 0.0
  %1660 = vmatprep.subr.mxu0 0.0
  %1661 = vmatpush2.msra.mxu0 0.0
  %1662 = vmatprep.subr.mxu0 0.0
  %1663 = vmatpush2.msra.mxu0 0.0
  %1664 = vmatprep.subr.mxu0 0.0
  %1665 = vmatpush2.msra.mxu0 0.0
  %1666 = vmatprep.subr.mxu0 0.0
  %1667 = vmatpush2.msra.mxu0 0.0
  %1668 = vmatprep.subr.mxu0 0.0
  %1669 = vmatpush2.msra.mxu0 0.0
  %1670 = vmatprep.subr.mxu0 0.0
  %1671 = vmatpush2.msra.mxu0 0.0
  %1672 = vmatprep.subr.mxu0 0.0
  %1673 = vmatpush2.msra.mxu0 0.0
  %1674 = vmatprep.subr.mxu0 0.0
  %1675 = vmatpush2.msra.mxu0 0.0
  %1676 = vmatprep.subr.mxu0 0.0
  %1677 = vmatpush2.msra.mxu0 0.0
  %1678 = vmatprep.subr.mxu0 0.0
  %1679 = vmatpush2.msra.mxu0 0.0
  %1680 = vmatprep.mubr.f32.mxu0 0.0
  %1681 = vmatmul.mubr.f32.gmra.mxu0 %v1506
  %v1682 = vpop.f32.mrf.mxu0
  %v1683 = vadd.f32 0.0, %v1682
  %v1684 = vpop.f32.mrf.mxu0
  %1685 = vdwg.mxu0
  %v1686 = vadd.f32 %v1615, %v1683
  %v1687 = vxor.u32 %v1686, 2147483648
  %v1688 = vmul.f32 %v1687, 1.442695
  %v1689 = vpow.pop %v1688
  %v1690 = vadd.f32 %v1689, 1.0
  %v1691 = vrcp.pop %v1690
  %v1692 = vmul.f32 1.0, %v1691
  %v1693 = vtanh.pop %v1686
  %v1694 = vmul.f32 %v1692, %v1421
  %1696 = vrot.lane.b32.xlu0 %v1693, 32
  %v1697 = vpop.permute.xlu0 %1696
  %v1699 = vmul.f32 %v1692, %v1697
  %1701 = vrot.lane.b32.xlu0 %v1699, 32
  %v1702 = vpop.permute.xlu0 %1701
  %v1704 = vadd.f32 %v1694, %v1702
  %v1705 = vtanh.pop %v1704
  %1707 = vrot.lane.b32.xlu0 %v1705, 32
  %v1708 = vpop.permute.xlu0 %1707
  %v1710 = vmul.f32 %v1692, %v1708
  %1712 = vrot.lane.b32.xlu0 %v1602, 64
  %v1713 = vpop.permute.xlu0 %1712
  %v1714 = vsel %vm474, %v1713, 0
  %1716 = vmatprep.subr.mxu0 0.0
  %1717 = vmatpush1.msra.mxu0 0.0
  %1718 = vmatprep.subr.mxu0 0.0
  %1719 = vmatpush1.msra.mxu0 0.0
  %1720 = vmatprep.subr.mxu0 0.0
  %1721 = vmatpush1.msra.mxu0 0.0
  %1722 = vmatprep.subr.mxu0 0.0
  %1723 = vmatpush1.msra.mxu0 0.0
  %1724 = vmatprep.subr.mxu0 0.0
  %1725 = vmatpush1.msra.mxu0 0.0
  %1726 = vmatprep.subr.mxu0 0.0
  %1727 = vmatpush1.msra.mxu0 0.0
  %1728 = vmatprep.subr.mxu0 0.0
  %1729 = vmatpush1.msra.mxu0 0.0
  %1730 = vmatprep.subr.mxu0 0.0
  %1731 = vmatpush1.msra.mxu0 0.0
  %1732 = vmatprep.subr.mxu0 0.0
  %1733 = vmatpush1.msra.mxu0 0.0
  %1734 = vmatprep.subr.mxu0 0.0
  %1735 = vmatpush1.msra.mxu0 0.0
  %1736 = vmatprep.subr.mxu0 0.0
  %1737 = vmatpush1.msra.mxu0 0.0
  %1738 = vmatprep.subr.mxu0 0.0
  %1739 = vmatpush1.msra.mxu0 0.0
  %1740 = vmatprep.subr.mxu0 0.0
  %1741 = vmatpush1.msra.mxu0 %v458
  %1742 = vmatprep.subr.mxu0 0.0
  %1743 = vmatpush1.msra.mxu0 %v457
  %1744 = vmatprep.subr.mxu0 0.0
  %1745 = vmatpush1.msra.mxu0 %v456
  %1746 = vmatprep.subr.mxu0 0.0
  %1747 = vmatpush1.msra.mxu0 %v455
  %1748 = vmatprep.subr.mxu0 0.0
  %1749 = vmatpush2.msra.mxu0 0.0
  %1750 = vmatprep.subr.mxu0 0.0
  %1751 = vmatpush2.msra.mxu0 0.0
  %1752 = vmatprep.subr.mxu0 0.0
  %1753 = vmatpush2.msra.mxu0 0.0
  %1754 = vmatprep.subr.mxu0 0.0
  %1755 = vmatpush2.msra.mxu0 0.0
  %1756 = vmatprep.subr.mxu0 0.0
  %1757 = vmatpush2.msra.mxu0 0.0
  %1758 = vmatprep.subr.mxu0 0.0
  %1759 = vmatpush2.msra.mxu0 0.0
  %1760 = vmatprep.subr.mxu0 0.0
  %1761 = vmatpush2.msra.mxu0 0.0
  %1762 = vmatprep.subr.mxu0 0.0
  %1763 = vmatpush2.msra.mxu0 0.0
  %1764 = vmatprep.subr.mxu0 0.0
  %1765 = vmatpush2.msra.mxu0 0.0
  %1766 = vmatprep.subr.mxu0 0.0
  %1767 = vmatpush2.msra.mxu0 0.0
  %1768 = vmatprep.subr.mxu0 0.0
  %1769 = vmatpush2.msra.mxu0 0.0
  %1770 = vmatprep.subr.mxu0 0.0
  %1771 = vmatpush2.msra.mxu0 0.0
  %1772 = vmatprep.subr.mxu0 0.0
  %1773 = vmatpush2.msra.mxu0 0.0
  %1774 = vmatprep.subr.mxu0 0.0
  %1775 = vmatpush2.msra.mxu0 0.0
  %1776 = vmatprep.subr.mxu0 0.0
  %1777 = vmatpush2.msra.mxu0 0.0
  %1778 = vmatprep.subr.mxu0 0.0
  %1779 = vmatpush2.msra.mxu0 0.0
  %1780 = vmatprep.mubr.f32.mxu0 0.0
  %1781 = vmatmul.mubr.f32.gmra.mxu0 %v1714
  %v1782 = vpop.f32.mrf.mxu0
  %v1783 = vadd.f32 0.0, %v1782
  %v1784 = vpop.f32.mrf.mxu0
  %1785 = vdwg.mxu0
  %1787 = vrot.lane.b32.xlu0 %v1710, 64
  %v1788 = vpop.permute.xlu0 %1787
  %v1789 = vsel %vm474, %v1788, 0
  %1791 = vmatprep.subr.mxu0 0.0
  %1792 = vmatpush1.msra.mxu0 0.0
  %1793 = vmatprep.subr.mxu0 0.0
  %1794 = vmatpush1.msra.mxu0 0.0
  %1795 = vmatprep.subr.mxu0 0.0
  %1796 = vmatpush1.msra.mxu0 0.0
  %1797 = vmatprep.subr.mxu0 0.0
  %1798 = vmatpush1.msra.mxu0 0.0
  %1799 = vmatprep.subr.mxu0 0.0
  %1800 = vmatpush1.msra.mxu0 0.0
  %1801 = vmatprep.subr.mxu0 0.0
  %1802 = vmatpush1.msra.mxu0 0.0
  %1803 = vmatprep.subr.mxu0 0.0
  %1804 = vmatpush1.msra.mxu0 0.0
  %1805 = vmatprep.subr.mxu0 0.0
  %1806 = vmatpush1.msra.mxu0 0.0
  %1807 = vmatprep.subr.mxu0 0.0
  %1808 = vmatpush1.msra.mxu0 0.0
  %1809 = vmatprep.subr.mxu0 0.0
  %1810 = vmatpush1.msra.mxu0 0.0
  %1811 = vmatprep.subr.mxu0 0.0
  %1812 = vmatpush1.msra.mxu0 0.0
  %1813 = vmatprep.subr.mxu0 0.0
  %1814 = vmatpush1.msra.mxu0 0.0
  %1815 = vmatprep.subr.mxu0 0.0
  %1816 = vmatpush1.msra.mxu0 %v454
  %1817 = vmatprep.subr.mxu0 0.0
  %1818 = vmatpush1.msra.mxu0 %v453
  %1819 = vmatprep.subr.mxu0 0.0
  %1820 = vmatpush1.msra.mxu0 %v452
  %1821 = vmatprep.subr.mxu0 0.0
  %1822 = vmatpush1.msra.mxu0 %v451
  %1823 = vmatprep.subr.mxu0 0.0
  %1824 = vmatpush2.msra.mxu0 0.0
  %1825 = vmatprep.subr.mxu0 0.0
  %1826 = vmatpush2.msra.mxu0 0.0
  %1827 = vmatprep.subr.mxu0 0.0
  %1828 = vmatpush2.msra.mxu0 0.0
  %1829 = vmatprep.subr.mxu0 0.0
  %1830 = vmatpush2.msra.mxu0 0.0
  %1831 = vmatprep.subr.mxu0 0.0
  %1832 = vmatpush2.msra.mxu0 0.0
  %1833 = vmatprep.subr.mxu0 0.0
  %1834 = vmatpush2.msra.mxu0 0.0
  %1835 = vmatprep.subr.mxu0 0.0
  %1836 = vmatpush2.msra.mxu0 0.0
  %1837 = vmatprep.subr.mxu0 0.0
  %1838 = vmatpush2.msra.mxu0 0.0
  %1839 = vmatprep.subr.mxu0 0.0
  %1840 = vmatpush2.msra.mxu0 0.0
  %1841 = vmatprep.subr.mxu0 0.0
  %1842 = vmatpush2.msra.mxu0 0.0
  %1843 = vmatprep.subr.mxu0 0.0
  %1844 = vmatpush2.msra.mxu0 0.0
  %1845 = vmatprep.subr.mxu0 0.0
  %1846 = vmatpush2.msra.mxu0 0.0
  %1847 = vmatprep.subr.mxu0 0.0
  %1848 = vmatpush2.msra.mxu0 0.0
  %1849 = vmatprep.subr.mxu0 0.0
  %1850 = vmatpush2.msra.mxu0 0.0
  %1851 = vmatprep.subr.mxu0 0.0
  %1852 = vmatpush2.msra.mxu0 0.0
  %1853 = vmatprep.subr.mxu0 0.0
  %1854 = vmatpush2.msra.mxu0 0.0
  %1855 = vmatprep.mubr.f32.mxu0 0.0
  %1856 = vmatmul.mubr.f32.gmra.mxu0 %v1789
  %v1857 = vpop.f32.mrf.mxu0
  %v1858 = vadd.f32 %v1783, %v1857
  %v1859 = vpop.f32.mrf.mxu0
  %1860 = vdwg.mxu0
  %v1861 = vadd.f32 %v1858, %v464
  %v1862 = vxor.u32 %v1861, 2147483648
  %v1863 = vmul.f32 %v1862, 1.442695
  %v1864 = vpow.pop %v1863
  %v1865 = vadd.f32 %v1864, 1.0
  %v1866 = vrcp.pop %v1865
  %v1867 = vmul.f32 1.0, %v1866
  %v1868 = vtanh.pop %v1861
  %v1869 = vmul.f32 %v1867, %v1596
  %1871 = vrot.lane.b32.xlu0 %v1868, 32
  %v1872 = vpop.permute.xlu0 %1871
  %v1874 = vmul.f32 %v1867, %v1872
  %1876 = vrot.lane.b32.xlu0 %v1874, 32
  %v1877 = vpop.permute.xlu0 %1876
  %v1879 = vadd.f32 %v1869, %v1877
  %v1880 = vtanh.pop %v1879
  %1882 = vrot.lane.b32.xlu0 %v1880, 32
  %v1883 = vpop.permute.xlu0 %1882
  %v1885 = vmul.f32 %v1867, %v1883
  %s1886 = sadd.s32 %s754, 4
  %p1887 = scmp.lt.s32.totalorder %s1886, 8
  %s1888 = scalar_select %p1887, 1, 0
  %s1889 = scvt.s32.f32 %s1888
  %v1890 = vstv %s1889
  %v1891 = vmul.f32 %v1885, %v1890
  %1893 = vrot.lane.b32.xlu0 %v1891, 64
  %v1894 = vpop.permute.xlu0 %1893
  %v1896 = vadd.f32 %v1613, %v1894
  %s1897 = scalar_lea.vmem [#allocation10], 40
  %v1898 = vld [vmem:[%s1897] sm:$0xff]
  %1899 = vmatprep.subr.mxu0 0.0
  %1900 = vmatpush1.msra.mxu0 0.0
  %1901 = vmatprep.subr.mxu0 0.0
  %1902 = vmatpush1.msra.mxu0 0.0
  %1903 = vmatprep.subr.mxu0 0.0
  %1904 = vmatpush1.msra.mxu0 0.0
  %1905 = vmatprep.subr.mxu0 0.0
  %1906 = vmatpush1.msra.mxu0 0.0
  %1907 = vmatprep.subr.mxu0 0.0
  %1908 = vmatpush1.msra.mxu0 0.0
  %1909 = vmatprep.subr.mxu0 0.0
  %1910 = vmatpush1.msra.mxu0 0.0
  %1911 = vmatprep.subr.mxu0 0.0
  %1912 = vmatpush1.msra.mxu0 0.0
  %1913 = vmatprep.subr.mxu0 0.0
  %1914 = vmatpush1.msra.mxu0 0.0
  %1915 = vmatprep.subr.mxu0 0.0
  %1916 = vmatpush1.msra.mxu0 0.0
  %1917 = vmatprep.subr.mxu0 0.0
  %1918 = vmatpush1.msra.mxu0 0.0
  %1919 = vmatprep.subr.mxu0 0.0
  %1920 = vmatpush1.msra.mxu0 0.0
  %1921 = vmatprep.subr.mxu0 0.0
  %1922 = vmatpush1.msra.mxu0 0.0
  %1923 = vmatprep.subr.mxu0 0.0
  %1924 = vmatpush1.msra.mxu0 %v450
  %1925 = vmatprep.subr.mxu0 0.0
  %1926 = vmatpush1.msra.mxu0 %v449
  %1927 = vmatprep.subr.mxu0 0.0
  %1928 = vmatpush1.msra.mxu0 %v448
  %1929 = vmatprep.subr.mxu0 0.0
  %1930 = vmatpush1.msra.mxu0 %v447
  %1931 = vmatprep.subr.mxu0 0.0
  %1932 = vmatpush2.msra.mxu0 0.0
  %1933 = vmatprep.subr.mxu0 0.0
  %1934 = vmatpush2.msra.mxu0 0.0
  %1935 = vmatprep.subr.mxu0 0.0
  %1936 = vmatpush2.msra.mxu0 0.0
  %1937 = vmatprep.subr.mxu0 0.0
  %1938 = vmatpush2.msra.mxu0 0.0
  %1939 = vmatprep.subr.mxu0 0.0
  %1940 = vmatpush2.msra.mxu0 0.0
  %1941 = vmatprep.subr.mxu0 0.0
  %1942 = vmatpush2.msra.mxu0 0.0
  %1943 = vmatprep.subr.mxu0 0.0
  %1944 = vmatpush2.msra.mxu0 0.0
  %1945 = vmatprep.subr.mxu0 0.0
  %1946 = vmatpush2.msra.mxu0 0.0
  %1947 = vmatprep.subr.mxu0 0.0
  %1948 = vmatpush2.msra.mxu0 0.0
  %1949 = vmatprep.subr.mxu0 0.0
  %1950 = vmatpush2.msra.mxu0 0.0
  %1951 = vmatprep.subr.mxu0 0.0
  %1952 = vmatpush2.msra.mxu0 0.0
  %1953 = vmatprep.subr.mxu0 0.0
  %1954 = vmatpush2.msra.mxu0 0.0
  %1955 = vmatprep.subr.mxu0 0.0
  %1956 = vmatpush2.msra.mxu0 0.0
  %1957 = vmatprep.subr.mxu0 0.0
  %1958 = vmatpush2.msra.mxu0 0.0
  %1959 = vmatprep.subr.mxu0 0.0
  %1960 = vmatpush2.msra.mxu0 0.0
  %1961 = vmatprep.subr.mxu0 0.0
  %1962 = vmatpush2.msra.mxu0 0.0
  %1963 = vmatprep.mubr.f32.mxu0 0.0
  %1964 = vmatmul.mubr.f32.gmra.mxu0 %v1789
  %v1965 = vpop.f32.mrf.mxu0
  %v1966 = vadd.f32 0.0, %v1965
  %v1967 = vpop.f32.mrf.mxu0
  %1968 = vdwg.mxu0
  %v1969 = vadd.f32 %v1898, %v1966
  %v1970 = vxor.u32 %v1969, 2147483648
  %v1971 = vmul.f32 %v1970, 1.442695
  %v1972 = vpow.pop %v1971
  %v1973 = vadd.f32 %v1972, 1.0
  %v1974 = vrcp.pop %v1973
  %v1975 = vmul.f32 1.0, %v1974
  %v1976 = vtanh.pop %v1969
  %v1977 = vmul.f32 %v1975, %v1704
  %1979 = vrot.lane.b32.xlu0 %v1976, 32
  %v1980 = vpop.permute.xlu0 %1979
  %v1982 = vmul.f32 %v1975, %v1980
  %1984 = vrot.lane.b32.xlu0 %v1982, 32
  %v1985 = vpop.permute.xlu0 %1984
  %v1987 = vadd.f32 %v1977, %v1985
  %v1988 = vtanh.pop %v1987
  %1990 = vrot.lane.b32.xlu0 %v1988, 32
  %v1991 = vpop.permute.xlu0 %1990
  %v1993 = vmul.f32 %v1975, %v1991
  %1995 = vrot.lane.b32.xlu0 %v1885, 64
  %v1996 = vpop.permute.xlu0 %1995
  %v1997 = vsel %vm474, %v1996, 0
  %1999 = vmatprep.subr.mxu0 0.0
  %2000 = vmatpush1.msra.mxu0 0.0
  %2001 = vmatprep.subr.mxu0 0.0
  %2002 = vmatpush1.msra.mxu0 0.0
  %2003 = vmatprep.subr.mxu0 0.0
  %2004 = vmatpush1.msra.mxu0 0.0
  %2005 = vmatprep.subr.mxu0 0.0
  %2006 = vmatpush1.msra.mxu0 0.0
  %2007 = vmatprep.subr.mxu0 0.0
  %2008 = vmatpush1.msra.mxu0 0.0
  %2009 = vmatprep.subr.mxu0 0.0
  %2010 = vmatpush1.msra.mxu0 0.0
  %2011 = vmatprep.subr.mxu0 0.0
  %2012 = vmatpush1.msra.mxu0 0.0
  %2013 = vmatprep.subr.mxu0 0.0
  %2014 = vmatpush1.msra.mxu0 0.0
  %2015 = vmatprep.subr.mxu0 0.0
  %2016 = vmatpush1.msra.mxu0 0.0
  %2017 = vmatprep.subr.mxu0 0.0
  %2018 = vmatpush1.msra.mxu0 0.0
  %2019 = vmatprep.subr.mxu0 0.0
  %2020 = vmatpush1.msra.mxu0 0.0
  %2021 = vmatprep.subr.mxu0 0.0
  %2022 = vmatpush1.msra.mxu0 0.0
  %2023 = vmatprep.subr.mxu0 0.0
  %2024 = vmatpush1.msra.mxu0 %v458
  %2025 = vmatprep.subr.mxu0 0.0
  %2026 = vmatpush1.msra.mxu0 %v457
  %2027 = vmatprep.subr.mxu0 0.0
  %2028 = vmatpush1.msra.mxu0 %v456
  %2029 = vmatprep.subr.mxu0 0.0
  %2030 = vmatpush1.msra.mxu0 %v455
  %2031 = vmatprep.subr.mxu0 0.0
  %2032 = vmatpush2.msra.mxu0 0.0
  %2033 = vmatprep.subr.mxu0 0.0
  %2034 = vmatpush2.msra.mxu0 0.0
  %2035 = vmatprep.subr.mxu0 0.0
  %2036 = vmatpush2.msra.mxu0 0.0
  %2037 = vmatprep.subr.mxu0 0.0
  %2038 = vmatpush2.msra.mxu0 0.0
  %2039 = vmatprep.subr.mxu0 0.0
  %2040 = vmatpush2.msra.mxu0 0.0
  %2041 = vmatprep.subr.mxu0 0.0
  %2042 = vmatpush2.msra.mxu0 0.0
  %2043 = vmatprep.subr.mxu0 0.0
  %2044 = vmatpush2.msra.mxu0 0.0
  %2045 = vmatprep.subr.mxu0 0.0
  %2046 = vmatpush2.msra.mxu0 0.0
  %2047 = vmatprep.subr.mxu0 0.0
  %2048 = vmatpush2.msra.mxu0 0.0
  %2049 = vmatprep.subr.mxu0 0.0
  %2050 = vmatpush2.msra.mxu0 0.0
  %2051 = vmatprep.subr.mxu0 0.0
  %2052 = vmatpush2.msra.mxu0 0.0
  %2053 = vmatprep.subr.mxu0 0.0
  %2054 = vmatpush2.msra.mxu0 0.0
  %2055 = vmatprep.subr.mxu0 0.0
  %2056 = vmatpush2.msra.mxu0 0.0
  %2057 = vmatprep.subr.mxu0 0.0
  %2058 = vmatpush2.msra.mxu0 0.0
  %2059 = vmatprep.subr.mxu0 0.0
  %2060 = vmatpush2.msra.mxu0 0.0
  %2061 = vmatprep.subr.mxu0 0.0
  %2062 = vmatpush2.msra.mxu0 0.0
  %2063 = vmatprep.mubr.f32.mxu0 0.0
  %2064 = vmatmul.mubr.f32.gmra.mxu0 %v1997
  %v2065 = vpop.f32.mrf.mxu0
  %v2066 = vadd.f32 0.0, %v2065
  %v2067 = vpop.f32.mrf.mxu0
  %2068 = vdwg.mxu0
  %2070 = vrot.lane.b32.xlu0 %v1993, 64
  %v2071 = vpop.permute.xlu0 %2070
  %v2072 = vsel %vm474, %v2071, 0
  %2074 = vmatprep.subr.mxu0 0.0
  %2075 = vmatpush1.msra.mxu0 0.0
  %2076 = vmatprep.subr.mxu0 0.0
  %2077 = vmatpush1.msra.mxu0 0.0
  %2078 = vmatprep.subr.mxu0 0.0
  %2079 = vmatpush1.msra.mxu0 0.0
  %2080 = vmatprep.subr.mxu0 0.0
  %2081 = vmatpush1.msra.mxu0 0.0
  %2082 = vmatprep.subr.mxu0 0.0
  %2083 = vmatpush1.msra.mxu0 0.0
  %2084 = vmatprep.subr.mxu0 0.0
  %2085 = vmatpush1.msra.mxu0 0.0
  %2086 = vmatprep.subr.mxu0 0.0
  %2087 = vmatpush1.msra.mxu0 0.0
  %2088 = vmatprep.subr.mxu0 0.0
  %2089 = vmatpush1.msra.mxu0 0.0
  %2090 = vmatprep.subr.mxu0 0.0
  %2091 = vmatpush1.msra.mxu0 0.0
  %2092 = vmatprep.subr.mxu0 0.0
  %2093 = vmatpush1.msra.mxu0 0.0
  %2094 = vmatprep.subr.mxu0 0.0
  %2095 = vmatpush1.msra.mxu0 0.0
  %2096 = vmatprep.subr.mxu0 0.0
  %2097 = vmatpush1.msra.mxu0 0.0
  %2098 = vmatprep.subr.mxu0 0.0
  %2099 = vmatpush1.msra.mxu0 %v454
  %2100 = vmatprep.subr.mxu0 0.0
  %2101 = vmatpush1.msra.mxu0 %v453
  %2102 = vmatprep.subr.mxu0 0.0
  %2103 = vmatpush1.msra.mxu0 %v452
  %2104 = vmatprep.subr.mxu0 0.0
  %2105 = vmatpush1.msra.mxu0 %v451
  %2106 = vmatprep.subr.mxu0 0.0
  %2107 = vmatpush2.msra.mxu0 0.0
  %2108 = vmatprep.subr.mxu0 0.0
  %2109 = vmatpush2.msra.mxu0 0.0
  %2110 = vmatprep.subr.mxu0 0.0
  %2111 = vmatpush2.msra.mxu0 0.0
  %2112 = vmatprep.subr.mxu0 0.0
  %2113 = vmatpush2.msra.mxu0 0.0
  %2114 = vmatprep.subr.mxu0 0.0
  %2115 = vmatpush2.msra.mxu0 0.0
  %2116 = vmatprep.subr.mxu0 0.0
  %2117 = vmatpush2.msra.mxu0 0.0
  %2118 = vmatprep.subr.mxu0 0.0
  %2119 = vmatpush2.msra.mxu0 0.0
  %2120 = vmatprep.subr.mxu0 0.0
  %2121 = vmatpush2.msra.mxu0 0.0
  %2122 = vmatprep.subr.mxu0 0.0
  %2123 = vmatpush2.msra.mxu0 0.0
  %2124 = vmatprep.subr.mxu0 0.0
  %2125 = vmatpush2.msra.mxu0 0.0
  %2126 = vmatprep.subr.mxu0 0.0
  %2127 = vmatpush2.msra.mxu0 0.0
  %2128 = vmatprep.subr.mxu0 0.0
  %2129 = vmatpush2.msra.mxu0 0.0
  %2130 = vmatprep.subr.mxu0 0.0
  %2131 = vmatpush2.msra.mxu0 0.0
  %2132 = vmatprep.subr.mxu0 0.0
  %2133 = vmatpush2.msra.mxu0 0.0
  %2134 = vmatprep.subr.mxu0 0.0
  %2135 = vmatpush2.msra.mxu0 0.0
  %2136 = vmatprep.subr.mxu0 0.0
  %2137 = vmatpush2.msra.mxu0 0.0
  %2138 = vmatprep.mubr.f32.mxu0 0.0
  %2139 = vmatmul.mubr.f32.gmra.mxu0 %v2072
  %v2140 = vpop.f32.mrf.mxu0
  %v2141 = vadd.f32 %v2066, %v2140
  %v2142 = vpop.f32.mrf.mxu0
  %2143 = vdwg.mxu0
  %v2144 = vadd.f32 %v2141, %v464
  %v2145 = vxor.u32 %v2144, 2147483648
  %v2146 = vmul.f32 %v2145, 1.442695
  %v2147 = vpow.pop %v2146
  %v2148 = vadd.f32 %v2147, 1.0
  %v2149 = vrcp.pop %v2148
  %v2150 = vmul.f32 1.0, %v2149
  %v2151 = vtanh.pop %v2144
  %v2152 = vmul.f32 %v2150, %v1879
  %2154 = vrot.lane.b32.xlu0 %v2151, 32
  %v2155 = vpop.permute.xlu0 %2154
  %v2157 = vmul.f32 %v2150, %v2155
  %2159 = vrot.lane.b32.xlu0 %v2157, 32
  %v2160 = vpop.permute.xlu0 %2159
  %v2162 = vadd.f32 %v2152, %v2160
  %v2163 = vtanh.pop %v2162
  %2165 = vrot.lane.b32.xlu0 %v2163, 32
  %v2166 = vpop.permute.xlu0 %2165
  %v2168 = vmul.f32 %v2150, %v2166
  %s2169 = sadd.s32 %s754, 5
  %p2170 = scmp.lt.s32.totalorder %s2169, 8
  %s2171 = scalar_select %p2170, 1, 0
  %s2172 = scvt.s32.f32 %s2171
  %v2173 = vstv %s2172
  %v2174 = vmul.f32 %v2168, %v2173
  %2176 = vrot.lane.b32.xlu0 %v2174, 64
  %v2177 = vpop.permute.xlu0 %2176
  %v2179 = vadd.f32 %v1896, %v2177
  %s2180 = scalar_lea.vmem [#allocation10], 48
  %v2181 = vld [vmem:[%s2180] sm:$0xff]
  %2182 = vmatprep.subr.mxu0 0.0
  %2183 = vmatpush1.msra.mxu0 0.0
  %2184 = vmatprep.subr.mxu0 0.0
  %2185 = vmatpush1.msra.mxu0 0.0
  %2186 = vmatprep.subr.mxu0 0.0
  %2187 = vmatpush1.msra.mxu0 0.0
  %2188 = vmatprep.subr.mxu0 0.0
  %2189 = vmatpush1.msra.mxu0 0.0
  %2190 = vmatprep.subr.mxu0 0.0
  %2191 = vmatpush1.msra.mxu0 0.0
  %2192 = vmatprep.subr.mxu0 0.0
  %2193 = vmatpush1.msra.mxu0 0.0
  %2194 = vmatprep.subr.mxu0 0.0
  %2195 = vmatpush1.msra.mxu0 0.0
  %2196 = vmatprep.subr.mxu0 0.0
  %2197 = vmatpush1.msra.mxu0 0.0
  %2198 = vmatprep.subr.mxu0 0.0
  %2199 = vmatpush1.msra.mxu0 0.0
  %2200 = vmatprep.subr.mxu0 0.0
  %2201 = vmatpush1.msra.mxu0 0.0
  %2202 = vmatprep.subr.mxu0 0.0
  %2203 = vmatpush1.msra.mxu0 0.0
  %2204 = vmatprep.subr.mxu0 0.0
  %2205 = vmatpush1.msra.mxu0 0.0
  %2206 = vmatprep.subr.mxu0 0.0
  %2207 = vmatpush1.msra.mxu0 %v450
  %2208 = vmatprep.subr.mxu0 0.0
  %2209 = vmatpush1.msra.mxu0 %v449
  %2210 = vmatprep.subr.mxu0 0.0
  %2211 = vmatpush1.msra.mxu0 %v448
  %2212 = vmatprep.subr.mxu0 0.0
  %2213 = vmatpush1.msra.mxu0 %v447
  %2214 = vmatprep.subr.mxu0 0.0
  %2215 = vmatpush2.msra.mxu0 0.0
  %2216 = vmatprep.subr.mxu0 0.0
  %2217 = vmatpush2.msra.mxu0 0.0
  %2218 = vmatprep.subr.mxu0 0.0
  %2219 = vmatpush2.msra.mxu0 0.0
  %2220 = vmatprep.subr.mxu0 0.0
  %2221 = vmatpush2.msra.mxu0 0.0
  %2222 = vmatprep.subr.mxu0 0.0
  %2223 = vmatpush2.msra.mxu0 0.0
  %2224 = vmatprep.subr.mxu0 0.0
  %2225 = vmatpush2.msra.mxu0 0.0
  %2226 = vmatprep.subr.mxu0 0.0
  %2227 = vmatpush2.msra.mxu0 0.0
  %2228 = vmatprep.subr.mxu0 0.0
  %2229 = vmatpush2.msra.mxu0 0.0
  %2230 = vmatprep.subr.mxu0 0.0
  %2231 = vmatpush2.msra.mxu0 0.0
  %2232 = vmatprep.subr.mxu0 0.0
  %2233 = vmatpush2.msra.mxu0 0.0
  %2234 = vmatprep.subr.mxu0 0.0
  %2235 = vmatpush2.msra.mxu0 0.0
  %2236 = vmatprep.subr.mxu0 0.0
  %2237 = vmatpush2.msra.mxu0 0.0
  %2238 = vmatprep.subr.mxu0 0.0
  %2239 = vmatpush2.msra.mxu0 0.0
  %2240 = vmatprep.subr.mxu0 0.0
  %2241 = vmatpush2.msra.mxu0 0.0
  %2242 = vmatprep.subr.mxu0 0.0
  %2243 = vmatpush2.msra.mxu0 0.0
  %2244 = vmatprep.subr.mxu0 0.0
  %2245 = vmatpush2.msra.mxu0 0.0
  %2246 = vmatprep.mubr.f32.mxu0 0.0
  %2247 = vmatmul.mubr.f32.gmra.mxu0 %v2072
  %v2248 = vpop.f32.mrf.mxu0
  %v2249 = vadd.f32 0.0, %v2248
  %v2250 = vpop.f32.mrf.mxu0
  %2251 = vdwg.mxu0
  %v2252 = vadd.f32 %v2181, %v2249
  %v2253 = vxor.u32 %v2252, 2147483648
  %v2254 = vmul.f32 %v2253, 1.442695
  %v2255 = vpow.pop %v2254
  %v2256 = vadd.f32 %v2255, 1.0
  %v2257 = vrcp.pop %v2256
  %v2258 = vmul.f32 1.0, %v2257
  %v2259 = vtanh.pop %v2252
  %v2260 = vmul.f32 %v2258, %v1987
  %2262 = vrot.lane.b32.xlu0 %v2259, 32
  %v2263 = vpop.permute.xlu0 %2262
  %v2265 = vmul.f32 %v2258, %v2263
  %2267 = vrot.lane.b32.xlu0 %v2265, 32
  %v2268 = vpop.permute.xlu0 %2267
  %v2270 = vadd.f32 %v2260, %v2268
  %v2271 = vtanh.pop %v2270
  %2273 = vrot.lane.b32.xlu0 %v2271, 32
  %v2274 = vpop.permute.xlu0 %2273
  %v2276 = vmul.f32 %v2258, %v2274
  %2278 = vrot.lane.b32.xlu0 %v2168, 64
  %v2279 = vpop.permute.xlu0 %2278
  %v2280 = vsel %vm474, %v2279, 0
  %2282 = vmatprep.subr.mxu0 0.0
  %2283 = vmatpush1.msra.mxu0 0.0
  %2284 = vmatprep.subr.mxu0 0.0
  %2285 = vmatpush1.msra.mxu0 0.0
  %2286 = vmatprep.subr.mxu0 0.0
  %2287 = vmatpush1.msra.mxu0 0.0
  %2288 = vmatprep.subr.mxu0 0.0
  %2289 = vmatpush1.msra.mxu0 0.0
  %2290 = vmatprep.subr.mxu0 0.0
  %2291 = vmatpush1.msra.mxu0 0.0
  %2292 = vmatprep.subr.mxu0 0.0
  %2293 = vmatpush1.msra.mxu0 0.0
  %2294 = vmatprep.subr.mxu0 0.0
  %2295 = vmatpush1.msra.mxu0 0.0
  %2296 = vmatprep.subr.mxu0 0.0
  %2297 = vmatpush1.msra.mxu0 0.0
  %2298 = vmatprep.subr.mxu0 0.0
  %2299 = vmatpush1.msra.mxu0 0.0
  %2300 = vmatprep.subr.mxu0 0.0
  %2301 = vmatpush1.msra.mxu0 0.0
  %2302 = vmatprep.subr.mxu0 0.0
  %2303 = vmatpush1.msra.mxu0 0.0
  %2304 = vmatprep.subr.mxu0 0.0
  %2305 = vmatpush1.msra.mxu0 0.0
  %2306 = vmatprep.subr.mxu0 0.0
  %2307 = vmatpush1.msra.mxu0 %v458
  %2308 = vmatprep.subr.mxu0 0.0
  %2309 = vmatpush1.msra.mxu0 %v457
  %2310 = vmatprep.subr.mxu0 0.0
  %2311 = vmatpush1.msra.mxu0 %v456
  %2312 = vmatprep.subr.mxu0 0.0
  %2313 = vmatpush1.msra.mxu0 %v455
  %2314 = vmatprep.subr.mxu0 0.0
  %2315 = vmatpush2.msra.mxu0 0.0
  %2316 = vmatprep.subr.mxu0 0.0
  %2317 = vmatpush2.msra.mxu0 0.0
  %2318 = vmatprep.subr.mxu0 0.0
  %2319 = vmatpush2.msra.mxu0 0.0
  %2320 = vmatprep.subr.mxu0 0.0
  %2321 = vmatpush2.msra.mxu0 0.0
  %2322 = vmatprep.subr.mxu0 0.0
  %2323 = vmatpush2.msra.mxu0 0.0
  %2324 = vmatprep.subr.mxu0 0.0
  %2325 = vmatpush2.msra.mxu0 0.0
  %2326 = vmatprep.subr.mxu0 0.0
  %2327 = vmatpush2.msra.mxu0 0.0
  %2328 = vmatprep.subr.mxu0 0.0
  %2329 = vmatpush2.msra.mxu0 0.0
  %2330 = vmatprep.subr.mxu0 0.0
  %2331 = vmatpush2.msra.mxu0 0.0
  %2332 = vmatprep.subr.mxu0 0.0
  %2333 = vmatpush2.msra.mxu0 0.0
  %2334 = vmatprep.subr.mxu0 0.0
  %2335 = vmatpush2.msra.mxu0 0.0
  %2336 = vmatprep.subr.mxu0 0.0
  %2337 = vmatpush2.msra.mxu0 0.0
  %2338 = vmatprep.subr.mxu0 0.0
  %2339 = vmatpush2.msra.mxu0 0.0
  %2340 = vmatprep.subr.mxu0 0.0
  %2341 = vmatpush2.msra.mxu0 0.0
  %2342 = vmatprep.subr.mxu0 0.0
  %2343 = vmatpush2.msra.mxu0 0.0
  %2344 = vmatprep.subr.mxu0 0.0
  %2345 = vmatpush2.msra.mxu0 0.0
  %2346 = vmatprep.mubr.f32.mxu0 0.0
  %2347 = vmatmul.mubr.f32.gmra.mxu0 %v2280
  %v2348 = vpop.f32.mrf.mxu0
  %v2349 = vadd.f32 0.0, %v2348
  %v2350 = vpop.f32.mrf.mxu0
  %2351 = vdwg.mxu0
  %2353 = vrot.lane.b32.xlu0 %v2276, 64
  %v2354 = vpop.permute.xlu0 %2353
  %v2355 = vsel %vm474, %v2354, 0
  %2357 = vmatprep.subr.mxu0 0.0
  %2358 = vmatpush1.msra.mxu0 0.0
  %2359 = vmatprep.subr.mxu0 0.0
  %2360 = vmatpush1.msra.mxu0 0.0
  %2361 = vmatprep.subr.mxu0 0.0
  %2362 = vmatpush1.msra.mxu0 0.0
  %2363 = vmatprep.subr.mxu0 0.0
  %2364 = vmatpush1.msra.mxu0 0.0
  %2365 = vmatprep.subr.mxu0 0.0
  %2366 = vmatpush1.msra.mxu0 0.0
  %2367 = vmatprep.subr.mxu0 0.0
  %2368 = vmatpush1.msra.mxu0 0.0
  %2369 = vmatprep.subr.mxu0 0.0
  %2370 = vmatpush1.msra.mxu0 0.0
  %2371 = vmatprep.subr.mxu0 0.0
  %2372 = vmatpush1.msra.mxu0 0.0
  %2373 = vmatprep.subr.mxu0 0.0
  %2374 = vmatpush1.msra.mxu0 0.0
  %2375 = vmatprep.subr.mxu0 0.0
  %2376 = vmatpush1.msra.mxu0 0.0
  %2377 = vmatprep.subr.mxu0 0.0
  %2378 = vmatpush1.msra.mxu0 0.0
  %2379 = vmatprep.subr.mxu0 0.0
  %2380 = vmatpush1.msra.mxu0 0.0
  %2381 = vmatprep.subr.mxu0 0.0
  %2382 = vmatpush1.msra.mxu0 %v454
  %2383 = vmatprep.subr.mxu0 0.0
  %2384 = vmatpush1.msra.mxu0 %v453
  %2385 = vmatprep.subr.mxu0 0.0
  %2386 = vmatpush1.msra.mxu0 %v452
  %2387 = vmatprep.subr.mxu0 0.0
  %2388 = vmatpush1.msra.mxu0 %v451
  %2389 = vmatprep.subr.mxu0 0.0
  %2390 = vmatpush2.msra.mxu0 0.0
  %2391 = vmatprep.subr.mxu0 0.0
  %2392 = vmatpush2.msra.mxu0 0.0
  %2393 = vmatprep.subr.mxu0 0.0
  %2394 = vmatpush2.msra.mxu0 0.0
  %2395 = vmatprep.subr.mxu0 0.0
  %2396 = vmatpush2.msra.mxu0 0.0
  %2397 = vmatprep.subr.mxu0 0.0
  %2398 = vmatpush2.msra.mxu0 0.0
  %2399 = vmatprep.subr.mxu0 0.0
  %2400 = vmatpush2.msra.mxu0 0.0
  %2401 = vmatprep.subr.mxu0 0.0
  %2402 = vmatpush2.msra.mxu0 0.0
  %2403 = vmatprep.subr.mxu0 0.0
  %2404 = vmatpush2.msra.mxu0 0.0
  %2405 = vmatprep.subr.mxu0 0.0
  %2406 = vmatpush2.msra.mxu0 0.0
  %2407 = vmatprep.subr.mxu0 0.0
  %2408 = vmatpush2.msra.mxu0 0.0
  %2409 = vmatprep.subr.mxu0 0.0
  %2410 = vmatpush2.msra.mxu0 0.0
  %2411 = vmatprep.subr.mxu0 0.0
  %2412 = vmatpush2.msra.mxu0 0.0
  %2413 = vmatprep.subr.mxu0 0.0
  %2414 = vmatpush2.msra.mxu0 0.0
  %2415 = vmatprep.subr.mxu0 0.0
  %2416 = vmatpush2.msra.mxu0 0.0
  %2417 = vmatprep.subr.mxu0 0.0
  %2418 = vmatpush2.msra.mxu0 0.0
  %2419 = vmatprep.subr.mxu0 0.0
  %2420 = vmatpush2.msra.mxu0 0.0
  %2421 = vmatprep.mubr.f32.mxu0 0.0
  %2422 = vmatmul.mubr.f32.gmra.mxu0 %v2355
  %v2423 = vpop.f32.mrf.mxu0
  %v2424 = vadd.f32 %v2349, %v2423
  %v2425 = vpop.f32.mrf.mxu0
  %2426 = vdwg.mxu0
  %v2427 = vadd.f32 %v2424, %v464
  %v2428 = vxor.u32 %v2427, 2147483648
  %v2429 = vmul.f32 %v2428, 1.442695
  %v2430 = vpow.pop %v2429
  %v2431 = vadd.f32 %v2430, 1.0
  %v2432 = vrcp.pop %v2431
  %v2433 = vmul.f32 1.0, %v2432
  %v2434 = vtanh.pop %v2427
  %v2435 = vmul.f32 %v2433, %v2162
  %2437 = vrot.lane.b32.xlu0 %v2434, 32
  %v2438 = vpop.permute.xlu0 %2437
  %v2440 = vmul.f32 %v2433, %v2438
  %2442 = vrot.lane.b32.xlu0 %v2440, 32
  %v2443 = vpop.permute.xlu0 %2442
  %v2445 = vadd.f32 %v2435, %v2443
  %v2446 = vtanh.pop %v2445
  %2448 = vrot.lane.b32.xlu0 %v2446, 32
  %v2449 = vpop.permute.xlu0 %2448
  %v2451 = vmul.f32 %v2433, %v2449
  %s2452 = sadd.s32 %s754, 6
  %p2453 = scmp.lt.s32.totalorder %s2452, 8
  %s2454 = scalar_select %p2453, 1, 0
  %s2455 = scvt.s32.f32 %s2454
  %v2456 = vstv %s2455
  %v2457 = vmul.f32 %v2451, %v2456
  %2459 = vrot.lane.b32.xlu0 %v2457, 64
  %v2460 = vpop.permute.xlu0 %2459
  %v2462 = vadd.f32 %v2179, %v2460
  %s2463 = scalar_lea.vmem [#allocation10], 56
  %v2464 = vld [vmem:[%s2463] sm:$0xff]
  %2465 = vmatprep.subr.mxu0 0.0
  %2466 = vmatpush1.msra.mxu0 0.0
  %2467 = vmatprep.subr.mxu0 0.0
  %2468 = vmatpush1.msra.mxu0 0.0
  %2469 = vmatprep.subr.mxu0 0.0
  %2470 = vmatpush1.msra.mxu0 0.0
  %2471 = vmatprep.subr.mxu0 0.0
  %2472 = vmatpush1.msra.mxu0 0.0
  %2473 = vmatprep.subr.mxu0 0.0
  %2474 = vmatpush1.msra.mxu0 0.0
  %2475 = vmatprep.subr.mxu0 0.0
  %2476 = vmatpush1.msra.mxu0 0.0
  %2477 = vmatprep.subr.mxu0 0.0
  %2478 = vmatpush1.msra.mxu0 0.0
  %2479 = vmatprep.subr.mxu0 0.0
  %2480 = vmatpush1.msra.mxu0 0.0
  %2481 = vmatprep.subr.mxu0 0.0
  %2482 = vmatpush1.msra.mxu0 0.0
  %2483 = vmatprep.subr.mxu0 0.0
  %2484 = vmatpush1.msra.mxu0 0.0
  %2485 = vmatprep.subr.mxu0 0.0
  %2486 = vmatpush1.msra.mxu0 0.0
  %2487 = vmatprep.subr.mxu0 0.0
  %2488 = vmatpush1.msra.mxu0 0.0
  %2489 = vmatprep.subr.mxu0 0.0
  %2490 = vmatpush1.msra.mxu0 %v450
  %2491 = vmatprep.subr.mxu0 0.0
  %2492 = vmatpush1.msra.mxu0 %v449
  %2493 = vmatprep.subr.mxu0 0.0
  %2494 = vmatpush1.msra.mxu0 %v448
  %2495 = vmatprep.subr.mxu0 0.0
  %2496 = vmatpush1.msra.mxu0 %v447
  %2497 = vmatprep.subr.mxu0 0.0
  %2498 = vmatpush2.msra.mxu0 0.0
  %2499 = vmatprep.subr.mxu0 0.0
  %2500 = vmatpush2.msra.mxu0 0.0
  %2501 = vmatprep.subr.mxu0 0.0
  %2502 = vmatpush2.msra.mxu0 0.0
  %2503 = vmatprep.subr.mxu0 0.0
  %2504 = vmatpush2.msra.mxu0 0.0
  %2505 = vmatprep.subr.mxu0 0.0
  %2506 = vmatpush2.msra.mxu0 0.0
  %2507 = vmatprep.subr.mxu0 0.0
  %2508 = vmatpush2.msra.mxu0 0.0
  %2509 = vmatprep.subr.mxu0 0.0
  %2510 = vmatpush2.msra.mxu0 0.0
  %2511 = vmatprep.subr.mxu0 0.0
  %2512 = vmatpush2.msra.mxu0 0.0
  %2513 = vmatprep.subr.mxu0 0.0
  %2514 = vmatpush2.msra.mxu0 0.0
  %2515 = vmatprep.subr.mxu0 0.0
  %2516 = vmatpush2.msra.mxu0 0.0
  %2517 = vmatprep.subr.mxu0 0.0
  %2518 = vmatpush2.msra.mxu0 0.0
  %2519 = vmatprep.subr.mxu0 0.0
  %2520 = vmatpush2.msra.mxu0 0.0
  %2521 = vmatprep.subr.mxu0 0.0
  %2522 = vmatpush2.msra.mxu0 0.0
  %2523 = vmatprep.subr.mxu0 0.0
  %2524 = vmatpush2.msra.mxu0 0.0
  %2525 = vmatprep.subr.mxu0 0.0
  %2526 = vmatpush2.msra.mxu0 0.0
  %2527 = vmatprep.subr.mxu0 0.0
  %2528 = vmatpush2.msra.mxu0 0.0
  %2529 = vmatprep.mubr.f32.mxu0 0.0
  %2530 = vmatmul.mubr.f32.gmra.mxu0 %v2355
  %v2531 = vpop.f32.mrf.mxu0
  %v2532 = vadd.f32 0.0, %v2531
  %v2533 = vpop.f32.mrf.mxu0
  %2534 = vdwg.mxu0
  %v2535 = vadd.f32 %v2464, %v2532
  %v2536 = vxor.u32 %v2535, 2147483648
  %v2537 = vmul.f32 %v2536, 1.442695
  %v2538 = vpow.pop %v2537
  %v2539 = vadd.f32 %v2538, 1.0
  %v2540 = vrcp.pop %v2539
  %v2541 = vmul.f32 1.0, %v2540
  %v2542 = vtanh.pop %v2535
  %v2543 = vmul.f32 %v2541, %v2270
  %2545 = vrot.lane.b32.xlu0 %v2542, 32
  %v2546 = vpop.permute.xlu0 %2545
  %v2548 = vmul.f32 %v2541, %v2546
  %2550 = vrot.lane.b32.xlu0 %v2548, 32
  %v2551 = vpop.permute.xlu0 %2550
  %v2553 = vadd.f32 %v2543, %v2551
  %v2554 = vtanh.pop %v2553
  %2556 = vrot.lane.b32.xlu0 %v2554, 32
  %v2557 = vpop.permute.xlu0 %2556
  %v2559 = vmul.f32 %v2541, %v2557
  %2561 = vrot.lane.b32.xlu0 %v2451, 64
  %v2562 = vpop.permute.xlu0 %2561
  %v2563 = vsel %vm474, %v2562, 0
  %2565 = vmatprep.subr.mxu0 0.0
  %2566 = vmatpush1.msra.mxu0 0.0
  %2567 = vmatprep.subr.mxu0 0.0
  %2568 = vmatpush1.msra.mxu0 0.0
  %2569 = vmatprep.subr.mxu0 0.0
  %2570 = vmatpush1.msra.mxu0 0.0
  %2571 = vmatprep.subr.mxu0 0.0
  %2572 = vmatpush1.msra.mxu0 0.0
  %2573 = vmatprep.subr.mxu0 0.0
  %2574 = vmatpush1.msra.mxu0 0.0
  %2575 = vmatprep.subr.mxu0 0.0
  %2576 = vmatpush1.msra.mxu0 0.0
  %2577 = vmatprep.subr.mxu0 0.0
  %2578 = vmatpush1.msra.mxu0 0.0
  %2579 = vmatprep.subr.mxu0 0.0
  %2580 = vmatpush1.msra.mxu0 0.0
  %2581 = vmatprep.subr.mxu0 0.0
  %2582 = vmatpush1.msra.mxu0 0.0
  %2583 = vmatprep.subr.mxu0 0.0
  %2584 = vmatpush1.msra.mxu0 0.0
  %2585 = vmatprep.subr.mxu0 0.0
  %2586 = vmatpush1.msra.mxu0 0.0
  %2587 = vmatprep.subr.mxu0 0.0
  %2588 = vmatpush1.msra.mxu0 0.0
  %2589 = vmatprep.subr.mxu0 0.0
  %2590 = vmatpush1.msra.mxu0 %v458
  %2591 = vmatprep.subr.mxu0 0.0
  %2592 = vmatpush1.msra.mxu0 %v457
  %2593 = vmatprep.subr.mxu0 0.0
  %2594 = vmatpush1.msra.mxu0 %v456
  %2595 = vmatprep.subr.mxu0 0.0
  %2596 = vmatpush1.msra.mxu0 %v455
  %2597 = vmatprep.subr.mxu0 0.0
  %2598 = vmatpush2.msra.mxu0 0.0
  %2599 = vmatprep.subr.mxu0 0.0
  %2600 = vmatpush2.msra.mxu0 0.0
  %2601 = vmatprep.subr.mxu0 0.0
  %2602 = vmatpush2.msra.mxu0 0.0
  %2603 = vmatprep.subr.mxu0 0.0
  %2604 = vmatpush2.msra.mxu0 0.0
  %2605 = vmatprep.subr.mxu0 0.0
  %2606 = vmatpush2.msra.mxu0 0.0
  %2607 = vmatprep.subr.mxu0 0.0
  %2608 = vmatpush2.msra.mxu0 0.0
  %2609 = vmatprep.subr.mxu0 0.0
  %2610 = vmatpush2.msra.mxu0 0.0
  %2611 = vmatprep.subr.mxu0 0.0
  %2612 = vmatpush2.msra.mxu0 0.0
  %2613 = vmatprep.subr.mxu0 0.0
  %2614 = vmatpush2.msra.mxu0 0.0
  %2615 = vmatprep.subr.mxu0 0.0
  %2616 = vmatpush2.msra.mxu0 0.0
  %2617 = vmatprep.subr.mxu0 0.0
  %2618 = vmatpush2.msra.mxu0 0.0
  %2619 = vmatprep.subr.mxu0 0.0
  %2620 = vmatpush2.msra.mxu0 0.0
  %2621 = vmatprep.subr.mxu0 0.0
  %2622 = vmatpush2.msra.mxu0 0.0
  %2623 = vmatprep.subr.mxu0 0.0
  %2624 = vmatpush2.msra.mxu0 0.0
  %2625 = vmatprep.subr.mxu0 0.0
  %2626 = vmatpush2.msra.mxu0 0.0
  %2627 = vmatprep.subr.mxu0 0.0
  %2628 = vmatpush2.msra.mxu0 0.0
  %2629 = vmatprep.mubr.f32.mxu0 0.0
  %2630 = vmatmul.mubr.f32.gmra.mxu0 %v2563
  %v2631 = vpop.f32.mrf.mxu0
  %v2632 = vadd.f32 0.0, %v2631
  %v2633 = vpop.f32.mrf.mxu0
  %2634 = vdwg.mxu0
  %2636 = vrot.lane.b32.xlu0 %v2559, 64
  %v2637 = vpop.permute.xlu0 %2636
  %v2638 = vsel %vm474, %v2637, 0
  %2640 = vmatprep.subr.mxu0 0.0
  %2641 = vmatpush1.msra.mxu0 0.0
  %2642 = vmatprep.subr.mxu0 0.0
  %2643 = vmatpush1.msra.mxu0 0.0
  %2644 = vmatprep.subr.mxu0 0.0
  %2645 = vmatpush1.msra.mxu0 0.0
  %2646 = vmatprep.subr.mxu0 0.0
  %2647 = vmatpush1.msra.mxu0 0.0
  %2648 = vmatprep.subr.mxu0 0.0
  %2649 = vmatpush1.msra.mxu0 0.0
  %2650 = vmatprep.subr.mxu0 0.0
  %2651 = vmatpush1.msra.mxu0 0.0
  %2652 = vmatprep.subr.mxu0 0.0
  %2653 = vmatpush1.msra.mxu0 0.0
  %2654 = vmatprep.subr.mxu0 0.0
  %2655 = vmatpush1.msra.mxu0 0.0
  %2656 = vmatprep.subr.mxu0 0.0
  %2657 = vmatpush1.msra.mxu0 0.0
  %2658 = vmatprep.subr.mxu0 0.0
  %2659 = vmatpush1.msra.mxu0 0.0
  %2660 = vmatprep.subr.mxu0 0.0
  %2661 = vmatpush1.msra.mxu0 0.0
  %2662 = vmatprep.subr.mxu0 0.0
  %2663 = vmatpush1.msra.mxu0 0.0
  %2664 = vmatprep.subr.mxu0 0.0
  %2665 = vmatpush1.msra.mxu0 %v454
  %2666 = vmatprep.subr.mxu0 0.0
  %2667 = vmatpush1.msra.mxu0 %v453
  %2668 = vmatprep.subr.mxu0 0.0
  %2669 = vmatpush1.msra.mxu0 %v452
  %2670 = vmatprep.subr.mxu0 0.0
  %2671 = vmatpush1.msra.mxu0 %v451
  %2672 = vmatprep.subr.mxu0 0.0
  %2673 = vmatpush2.msra.mxu0 0.0
  %2674 = vmatprep.subr.mxu0 0.0
  %2675 = vmatpush2.msra.mxu0 0.0
  %2676 = vmatprep.subr.mxu0 0.0
  %2677 = vmatpush2.msra.mxu0 0.0
  %2678 = vmatprep.subr.mxu0 0.0
  %2679 = vmatpush2.msra.mxu0 0.0
  %2680 = vmatprep.subr.mxu0 0.0
  %2681 = vmatpush2.msra.mxu0 0.0
  %2682 = vmatprep.subr.mxu0 0.0
  %2683 = vmatpush2.msra.mxu0 0.0
  %2684 = vmatprep.subr.mxu0 0.0
  %2685 = vmatpush2.msra.mxu0 0.0
  %2686 = vmatprep.subr.mxu0 0.0
  %2687 = vmatpush2.msra.mxu0 0.0
  %2688 = vmatprep.subr.mxu0 0.0
  %2689 = vmatpush2.msra.mxu0 0.0
  %2690 = vmatprep.subr.mxu0 0.0
  %2691 = vmatpush2.msra.mxu0 0.0
  %2692 = vmatprep.subr.mxu0 0.0
  %2693 = vmatpush2.msra.mxu0 0.0
  %2694 = vmatprep.subr.mxu0 0.0
  %2695 = vmatpush2.msra.mxu0 0.0
  %2696 = vmatprep.subr.mxu0 0.0
  %2697 = vmatpush2.msra.mxu0 0.0
  %2698 = vmatprep.subr.mxu0 0.0
  %2699 = vmatpush2.msra.mxu0 0.0
  %2700 = vmatprep.subr.mxu0 0.0
  %2701 = vmatpush2.msra.mxu0 0.0
  %2702 = vmatprep.subr.mxu0 0.0
  %2703 = vmatpush2.msra.mxu0 0.0
  %2704 = vmatprep.mubr.f32.mxu0 0.0
  %2705 = vmatmul.mubr.f32.gmra.mxu0 %v2638
  %v2706 = vpop.f32.mrf.mxu0
  %v2707 = vadd.f32 %v2632, %v2706
  %v2708 = vpop.f32.mrf.mxu0
  %2709 = vdwg.mxu0
  %v2710 = vadd.f32 %v2707, %v464
  %v2711 = vxor.u32 %v2710, 2147483648
  %v2712 = vmul.f32 %v2711, 1.442695
  %v2713 = vpow.pop %v2712
  %v2714 = vadd.f32 %v2713, 1.0
  %v2715 = vrcp.pop %v2714
  %v2716 = vmul.f32 1.0, %v2715
  %v2717 = vtanh.pop %v2710
  %v2718 = vmul.f32 %v2716, %v2445
  %2720 = vrot.lane.b32.xlu0 %v2717, 32
  %v2721 = vpop.permute.xlu0 %2720
  %v2723 = vmul.f32 %v2716, %v2721
  %2725 = vrot.lane.b32.xlu0 %v2723, 32
  %v2726 = vpop.permute.xlu0 %2725
  %v2728 = vadd.f32 %v2718, %v2726
  %v2729 = vtanh.pop %v2728
  %2731 = vrot.lane.b32.xlu0 %v2729, 32
  %v2732 = vpop.permute.xlu0 %2731
  %v2734 = vmul.f32 %v2716, %v2732
  %s2735 = sadd.s32 %s754, 7
  %p2736 = scmp.lt.s32.totalorder %s2735, 8
  %s2737 = scalar_select %p2736, 1, 0
  %s2738 = scvt.s32.f32 %s2737
  %v2739 = vstv %s2738
  %v2740 = vmul.f32 %v2734, %v2739
  %2742 = vrot.lane.b32.xlu0 %v2740, 64
  %v2743 = vpop.permute.xlu0 %2742
  %v2745 = vadd.f32 %v2462, %v2743
  %2747 = vst.msk [vmem:[#allocation7] sm:$0xff] %vm474, %v2637
  %2749 = vrot.lane.b32.xlu0 %v2553, 96
  %v2750 = vpop.permute.xlu0 %2749
  %2752 = vst.msk [vmem:[#allocation8] sm:$0xff] %vm474, %v2750
  %2754 = vrot.lane.b32.xlu0 %v2734, 64
  %v2755 = vpop.permute.xlu0 %2754
  %2757 = vst.msk [vmem:[%s467] sm:$0xff] %vm474, %v2755
  %2759 = vrot.lane.b32.xlu0 %v2728, 96
  %v2760 = vpop.permute.xlu0 %2759
  %2762 = vst.msk [vmem:[%s470] sm:$0xff] %vm474, %v2760
  %2763 = vst.msk [vmem:[#allocation9] sm:$0xff] %vm474, %v2745
  // Predicated region
  $region196: #{tpu_custom_call.1} parent=0 // pred_check
    %p2764 = pneg %p22
  $region197: #{tpu_custom_call.1} parent=0 // pred_check_branch
    %2766 = sbr.rel (%p2764) target = $region199
  $region198: #{tpu_custom_call.1} parent=0 // pred_region
    %s2767 = scalar_lea.sflag [#allocation11], 4
    %s2768 = smul.u32 32, 1
    %s2769 = sshll.u32 %s2768, 4
    %2770 = dma.done %s2767, %s2769
    %v2771 = vld [vmem:[#allocation6] sm:$0xff]
    %v2772 = vld [vmem:[#allocation6 + $0x8] sm:$0xff]
    %v2773 = vld [vmem:[#allocation6 + $0x10] sm:$0xff]
    %v2774 = vld [vmem:[#allocation6 + $0x18] sm:$0xff]
    %v2776 = vsel %vm474, %v2745, 0
    %2778 = vmatprep.subr.mxu0 0.0
    %2779 = vmatpush1.msra.mxu0 0.0
    %2780 = vmatprep.subr.mxu0 0.0
    %2781 = vmatpush1.msra.mxu0 0.0
    %2782 = vmatprep.subr.mxu0 0.0
    %2783 = vmatpush1.msra.mxu0 0.0
    %2784 = vmatprep.subr.mxu0 0.0
    %2785 = vmatpush1.msra.mxu0 0.0
    %2786 = vmatprep.subr.mxu0 0.0
    %2787 = vmatpush1.msra.mxu0 0.0
    %2788 = vmatprep.subr.mxu0 0.0
    %2789 = vmatpush1.msra.mxu0 0.0
    %2790 = vmatprep.subr.mxu0 0.0
    %2791 = vmatpush1.msra.mxu0 0.0
    %2792 = vmatprep.subr.mxu0 0.0
    %2793 = vmatpush1.msra.mxu0 0.0
    %2794 = vmatprep.subr.mxu0 0.0
    %2795 = vmatpush1.msra.mxu0 0.0
    %2796 = vmatprep.subr.mxu0 0.0
    %2797 = vmatpush1.msra.mxu0 0.0
    %2798 = vmatprep.subr.mxu0 0.0
    %2799 = vmatpush1.msra.mxu0 0.0
    %2800 = vmatprep.subr.mxu0 0.0
    %2801 = vmatpush1.msra.mxu0 0.0
    %2802 = vmatprep.subr.mxu0 0.0
    %2803 = vmatpush1.msra.mxu0 %v2774
    %2804 = vmatprep.subr.mxu0 0.0
    %2805 = vmatpush1.msra.mxu0 %v2773
    %2806 = vmatprep.subr.mxu0 0.0
    %2807 = vmatpush1.msra.mxu0 %v2772
    %2808 = vmatprep.subr.mxu0 0.0
    %2809 = vmatpush1.msra.mxu0 %v2771
    %2810 = vmatprep.subr.mxu0 0.0
    %2811 = vmatpush2.msra.mxu0 0.0
    %2812 = vmatprep.subr.mxu0 0.0
    %2813 = vmatpush2.msra.mxu0 0.0
    %2814 = vmatprep.subr.mxu0 0.0
    %2815 = vmatpush2.msra.mxu0 0.0
    %2816 = vmatprep.subr.mxu0 0.0
    %2817 = vmatpush2.msra.mxu0 0.0
    %2818 = vmatprep.subr.mxu0 0.0
    %2819 = vmatpush2.msra.mxu0 0.0
    %2820 = vmatprep.subr.mxu0 0.0
    %2821 = vmatpush2.msra.mxu0 0.0
    %2822 = vmatprep.subr.mxu0 0.0
    %2823 = vmatpush2.msra.mxu0 0.0
    %2824 = vmatprep.subr.mxu0 0.0
    %2825 = vmatpush2.msra.mxu0 0.0
    %2826 = vmatprep.subr.mxu0 0.0
    %2827 = vmatpush2.msra.mxu0 0.0
    %2828 = vmatprep.subr.mxu0 0.0
    %2829 = vmatpush2.msra.mxu0 0.0
    %2830 = vmatprep.subr.mxu0 0.0
    %2831 = vmatpush2.msra.mxu0 0.0
    %2832 = vmatprep.subr.mxu0 0.0
    %2833 = vmatpush2.msra.mxu0 0.0
    %2834 = vmatprep.subr.mxu0 0.0
    %2835 = vmatpush2.msra.mxu0 0.0
    %2836 = vmatprep.subr.mxu0 0.0
    %2837 = vmatpush2.msra.mxu0 0.0
    %2838 = vmatprep.subr.mxu0 0.0
    %2839 = vmatpush2.msra.mxu0 0.0
    %2840 = vmatprep.subr.mxu0 0.0
    %2841 = vmatpush2.msra.mxu0 0.0
    %2842 = vmatprep.mubr.f32.mxu0 0.0
    %2843 = vmatmul.mubr.f32.gmra.mxu0 %v2776
    %v2844 = vpop.f32.mrf.mxu0
    %v2845 = vadd.f32 0.0, %v2844
    %v2846 = vpop.f32.mrf.mxu0
    %2847 = vdwg.mxu0
    %v2848 = vmul.f32 %v2845, 0.125
    %v2849 = vld [vmem:[%s8] sm:$0x1]
    %v2851 = vlaneseq
    %v2852 = vshrl.u32 %v2851, 7
    %v2853 = vsub.s32 0, %v2852
    %v2854 = vrot.slane %v2849, %v2853
    %v2856 = vadd.f32 %v2848, %v2854
    %vm2857 = vcmask 31744
    %2858 = vst.msk [vmem:[%s9] sm:$0xff] %vm2857, %v2856
  $region199: #{tpu_custom_call.1} parent=0 // pred_fallthru
    _
  // Predicated region
  $region200: #{tpu_custom_call.1} parent=0 // pred_check
    _
  $region201: #{tpu_custom_call.1} parent=0 // pred_check_branch
    %2860 = sbr.rel (0) target = $region203
  $region202: #{tpu_custom_call.1} parent=0 // pred_region
    _
  $region203: #{tpu_custom_call.1} parent=0 // pred_fallthru
    _
  // Predicated region
  $region204: #{tpu_custom_call.1} parent=0 // pred_check
    _
  $region205: #{tpu_custom_call.1} parent=0 // pred_check_branch
    %2862 = sbr.rel (0) target = $region207
  $region206: #{tpu_custom_call.1} parent=0 // pred_region
    _
  $region207: #{tpu_custom_call.1} parent=0 // pred_fallthru
    _
  %2863 = vsyncmov [#allocation11]
  %s2864 = vpop.sfrf %2863
  %p2865 = scmp.eq.s32.totalorder %s2864, 0
  %p2866 = pneg %p2865
  %2868 = shalt.err (%p2866)
  %s2869 = scalar_lea.sflag [#allocation11], 1
  %2870 = vsyncmov %s2869
  %s2871 = vpop.sfrf %2870
  %p2872 = scmp.eq.s32.totalorder %s2871, 0
  %p2873 = pneg %p2872
  %2875 = shalt.err (%p2873)
  %s2876 = scalar_lea.sflag [#allocation11], 2
  %2877 = vsyncmov %s2876
  %s2878 = vpop.sfrf %2877
  %p2879 = scmp.eq.s32.totalorder %s2878, 0
  %p2880 = pneg %p2879
  %2882 = shalt.err (%p2880)
  %s2883 = scalar_lea.sflag [#allocation11], 3
  %2884 = vsyncmov %s2883
  %s2885 = vpop.sfrf %2884
  %p2886 = scmp.eq.s32.totalorder %s2885, 0
  %p2887 = pneg %p2886
  %2889 = shalt.err (%p2887)
  %s2890 = scalar_lea.sflag [#allocation11], 4
  %2891 = vsyncmov %s2890
  %s2892 = vpop.sfrf %2891
  %p2893 = scmp.eq.s32.totalorder %s2892, 0
  %p2894 = pneg %p2893
  %2896 = shalt.err (%p2894)

</llo_original>
